<compile_context>
chip_gen: v5e
topology: v5e:2x2
jax: 0.10.0
libtpu: 0.0.40
codegen_flags: <defaults>
</compile_context>

<pallas_src>
import numpy as np
import jax
import jax.numpy as jnp
from jax.experimental import pallas as pl
from jax.experimental.pallas import tpu as pltpu

NEG_SLOPE = 0.01                 # nn.LeakyReLU() default negative_slope

# Geometry fixed by the module: the conv stack must collapse to 1x1 spatial
# before Linear(128, 512):  H 18 -> 8 -> 3 -> 1,  W 48 -> 12 -> 3 -> 1.
H0, W0, C0 = 18, 48, 3
NT = 8                           # batch tile per grid step (parallel axis)
K1_PAD = 256                     # conv1 input lanes: 48*3 = 144 -> 256
N1 = 12 * 32                     # conv1 output lanes (384, already lane-dense)
N2_PAD = 256                     # conv2 output lanes: 3*64 = 192 -> 256
N3 = 128                         # conv3 output lanes (== torch flatten width)
F1 = 512


# ---------------------------------------------------------------------------
# Fused Pallas kernel: whole forward pass for one batch tile per grid step
# ---------------------------------------------------------------------------
def _disc5_kernel(x_ref, w1_ref, b1_ref, w2_ref, b2_ref, w3_ref, b3_ref,
                  fw1_ref, fb1_ref, fw2_ref, fb2_ref, o_ref, a1_ref):
    f32, bf16 = jnp.float32, jnp.bfloat16
    nt = o_ref.shape[0]

    def lrelu(v):                               # f32 elementwise (VPU)
        return jnp.maximum(v, NEG_SLOPE * v)

    # ---- conv1: x (18*nt, 256) -> (8*nt, 384) -------------------------------
    # x rows are parity-major: row = (h%2)*(9*nt) + (h//2)*nt + b, so kernel
    # row i reads ONE contiguous slab (no selection matmul, no gather copies).
    m1 = 8 * nt
    starts1 = (0, 9 * nt, nt, 10 * nt)          # kernel rows i = 0, 1, 2, 3
    acc = jnp.zeros((m1, N1), f32)
    for i in range(4):
        acc += jnp.dot(x_ref[pl.ds(starts1[i], m1), :], w1_ref[i],
                       preferred_element_type=f32)
    a1 = lrelu(acc + b1_ref[...])
    # Stage conv1 output in parity-major row order (8 aligned 8-row chunk
    # stores) so conv2's kernel-row slabs are contiguous Ref slices too.
    for ho in range(8):
        dst = (ho % 2) * (4 * nt) + (ho // 2) * nt
        a1_ref[pl.ds(dst, nt), :] = a1[ho * nt:(ho + 1) * nt, :]

    # ---- conv2: (8*nt, 384) -> (3*nt, 256 padded) ----------------------------
    m2 = 3 * nt
    starts2 = (0, 4 * nt, nt, 5 * nt)
    acc = jnp.zeros((m2, N2_PAD), f32)
    for i in range(4):
        g = a1_ref[pl.ds(starts2[i], m2), :].astype(bf16)
        acc += jnp.dot(g, w2_ref[i], preferred_element_type=f32)
    a2 = lrelu(acc + b2_ref[...])               # pad lanes stay exactly zero

    # ---- conv3: h_out == 1 -> kernel-row slabs are contiguous value slices ---
    acc = jnp.zeros((nt, N3), f32)
    for i in range(3):
        acc += jnp.dot(a2[i * nt:(i + 1) * nt, :].astype(bf16), w3_ref[i],
                       preferred_element_type=f32)
    a3 = lrelu(acc + b3_ref[...]).astype(bf16)  # == torch flatten: (nt, 128)

    # ---- fc: 128 -> 512 -> 1 --------------------------------------------------
    h = lrelu(jnp.dot(a3, fw1_ref[...], preferred_element_type=f32) + fb1_ref[...])
    # 512 -> 1 as VPU multiply + XLU lane reduction (avoids N=1 MXU matmul).
    o_ref[...] = jnp.sum(h * fw2_ref[...], axis=-1, keepdims=True) + fb2_ref[...]


# ---------------------------------------------------------------------------
# One-time host-side parameter preparation
# ---------------------------------------------------------------------------
def _expand_conv_weight(w_oihw, w_in, sw, k_pad, n_pad):
    """OIHW conv weight -> per-kernel-row (K_pad, N_pad) matrices so that
    out2d = sum_i gathered_rows_i @ We[i] reproduces the conv in the
    (rows = (h, b), lanes = w*c) NHWC layout.  sw == kw, so the width windows
    tile exactly and We[i] is block-diagonal; pads are zero."""
    w = np.asarray(w_oihw, np.float32)
    cout, cin, kh, kw = w.shape
    w_out = (w_in - kw) // sw + 1
    we = np.zeros((kh, k_pad, n_pad), np.float32)
    for i in range(kh):
        for wo in range(w_out):
            for j in range(kw):
                r0 = (sw * wo + j) * cin
                we[i, r0:r0 + cin, wo * cout:(wo + 1) * cout] = w[:, :, i, j].T
    return jnp.asarray(we).astype(jnp.bfloat16)


def prepare_params(params):
    """Expanded bf16 conv weights (lane-padded), width-tiled f32 biases,
    bf16 fc1 weight; biases / fc2 stay f32 (elementwise path)."""
    we1 = _expand_conv_weight(params["cw1"], W0, 4, K1_PAD, N1)
    we2 = _expand_conv_weight(params["cw2"], 12, 4, N1, N2_PAD)
    we3 = _expand_conv_weight(params["cw3"], 3, 4, N2_PAD, N3)
    b1 = jnp.tile(params["cb1"], 12).reshape(1, N1)
    b2 = jnp.pad(jnp.tile(params["cb2"], 3), (0, N2_PAD - 192)).reshape(1, N2_PAD)
    b3 = params["cb3"].reshape(1, N3)
    fw1 = params["fw1"].astype(jnp.bfloat16)        # (128, 512)
    fb1 = params["fb1"].reshape(1, F1)
    fw2 = params["fw2"].reshape(1, F1)              # (1, 512), f32 (VPU path)
    fb2 = params["fb2"].reshape(1, 1)
    return (we1, b1, we2, b2, we3, b3, fw1, fb1, fw2, fb2)


# ---------------------------------------------------------------------------
# Wrapper: input layout prep + fused pallas_call over batch tiles
# ---------------------------------------------------------------------------
def _prep_x(x, n_tiles):
    """NHWC input -> per-tile parity-major (h%2, h//2, b) rows, lanes padded
    144 -> 256, cast to bf16 (matmul operand; accumulation is f32 in-kernel)."""
    x = x.astype(jnp.float32)
    n = x.shape[0]
    pad_n = n_tiles * NT - n
    if pad_n:
        x = jnp.pad(x, ((0, pad_n), (0, 0), (0, 0), (0, 0)))
    wc = W0 * C0
    x = x.reshape(n_tiles, NT, H0 // 2, 2, wc)      # (t, b, q, p, w*c), h = 2q+p
    x = x.transpose(0, 3, 2, 1, 4)                  # (t, p, q, b, w*c)
    x = x.reshape(n_tiles * H0 * NT, wc)
    x = jnp.pad(x, ((0, 0), (0, K1_PAD - wc)))
    return x.astype(jnp.bfloat16)


def _const_spec(shape):
    """Full-block, constant index_map -> weight stays VMEM-resident across
    all (parallel) grid steps; DMA'd from HBM once per call."""
    if len(shape) == 2:
        return pl.BlockSpec(shape, lambda t: (0, 0))
    return pl.BlockSpec(shape, lambda t: (0, 0, 0))


@jax.jit
def discriminator5_forward(prepared, x):
    (we1, b1, we2, b2, we3, b3, fw1, fb1, fw2, fb2) = prepared
    n = x.shape[0]
    n_tiles = -(-n // NT)                           # grid steps (batch tiles)
    xp = _prep_x(x, n_tiles)

    out = pl.pallas_call(
        _disc5_kernel,
        out_shape=jax.ShapeDtypeStruct((n_tiles * NT, 1), jnp.float32),
        grid=(n_tiles,),
        in_specs=[pl.BlockSpec((H0 * NT, K1_PAD), lambda t: (t, 0))]
                 + [_const_spec(w.shape) for w in
                    (we1, b1, we2, b2, we3, b3, fw1, fb1, fw2, fb2)],
        out_specs=pl.BlockSpec((NT, 1), lambda t: (t, 0)),
        scratch_shapes=[pltpu.VMEM((8 * NT, N1), jnp.float32)],   # conv1 staging
        compiler_params=pltpu.CompilerParams(
            dimension_semantics=("parallel",)),
    )(xp, we1, b1, we2, b2, we3, b3, fw1, fb1, fw2, fb2)
    return out[:n]


# ---------------------------------------------------------------------------
# Deterministic parameter init (synthetic; mirrors the module's shapes)
# ---------------------------------------------------------------------------
def init_params(key, std=0.02):
    ks = jax.random.split(key, 5)
    return {
        "cw1": std * jax.random.normal(ks[0], (32, 3, 4, 4), jnp.float32),
        "cb1": jnp.zeros((32,), jnp.float32),
        "cw2": std * jax.random.normal(ks[1], (64, 32, 4, 4), jnp.float32),
        "cb2": jnp.zeros((64,), jnp.float32),
        "cw3": std * jax.random.normal(ks[2], (128, 64, 3, 3), jnp.float32),
        "cb3": jnp.zeros((128,), jnp.float32),
        # stored as (in, out) so forward is x @ W + b (== torch x @ W.T + b)
        "fw1": std * jax.random.normal(ks[3], (128, 512), jnp.float32),
        "fb1": jnp.zeros((512,), jnp.float32),
        "fw2": std * jax.random.normal(ks[4], (512, 1), jnp.float32),
        "fb2": jnp.zeros((1,), jnp.float32),
    }


# ---------------------------------------------------------------------------
# Pure-JAX f32 reference (faithful to the PyTorch module) for correctness
# ---------------------------------------------------------------------------
def reference_forward(params, x_nhwc):
    x = x_nhwc.astype(jnp.float32).transpose(0, 3, 1, 2)

    def conv(x, w, b, s):
        y = jax.lax.conv_general_dilated(
            x, w, window_strides=s, padding="VALID",
            dimension_numbers=("NCHW", "OIHW", "NCHW"))
        y = y + b[None, :, None, None]
        return jnp.where(y >= 0, y, NEG_SLOPE * y)

    x = conv(x, params["cw1"], params["cb1"], (2, 4))
    x = conv(x, params["cw2"], params["cb2"], (2, 4))
    x = conv(x, params["cw3"], params["cb3"], (2, 4))
    x = x.reshape(x.shape[0], -1)
    h = x @ params["fw1"] + params["fb1"]
    h = jnp.where(h >= 0, h, NEG_SLOPE * h)
    return h @ params["fw2"] + params["fb2"]


if __name__ == "__main__":
    # Smallest spatial size the module accepts (conv stack -> 1x1); B=16 gives
    # two batch tiles -> 2 parallel grid steps (both v7x TensorCores busy).
    B = 16

    key = jax.random.PRNGKey(0)
    pkey, xkey = jax.random.split(key)
    params = init_params(pkey)
    x = jax.random.normal(xkey, (B, H0, W0, C0), jnp.float32)

    prepared = prepare_params(params)           # one-time host-side prep
    out = jax.block_until_ready(discriminator5_forward(prepared, x))
    assert out.shape == (B, 1), out.shape

    ref = jax.block_until_ready(reference_forward(params, x))
    err = float(jnp.max(jnp.abs(out - ref)))
    scale = float(jnp.max(jnp.abs(ref)))
    # bf16 matmul operands / f32 accumulation -> loosened tolerance vs f32 ref.
    assert err <= 0.05 * scale + 1e-4, (err, scale)

    print("KERNEL_OK")
</pallas_src>

<mosaic_0001>
module attributes {stable_mosaic.version = 11 : i64} {
  func.func @_disc5_kernel(%arg0: i32, %arg1: memref<144x256xbf16, #tpu.memory_space<vmem>>, %arg2: memref<4x256x384xbf16, #tpu.memory_space<vmem>>, %arg3: memref<1x384xf32, #tpu.memory_space<vmem>>, %arg4: memref<4x384x256xbf16, #tpu.memory_space<vmem>>, %arg5: memref<1x256xf32, #tpu.memory_space<vmem>>, %arg6: memref<3x256x128xbf16, #tpu.memory_space<vmem>>, %arg7: memref<1x128xf32, #tpu.memory_space<vmem>>, %arg8: memref<128x512xbf16, #tpu.memory_space<vmem>>, %arg9: memref<1x512xf32, #tpu.memory_space<vmem>>, %arg10: memref<1x512xf32, #tpu.memory_space<vmem>>, %arg11: memref<1x1xf32, #tpu.memory_space<vmem>>, %arg12: memref<8x1xf32, #tpu.memory_space<vmem>>, %arg13: memref<64x384xf32, #tpu.memory_space<vmem>>) attributes {dimension_semantics = [#tpu.dimension_semantics<parallel>], iteration_bounds = array<i64: 2>, scalar_prefetch = 0 : i64, scratch_operands = 1 : i64, tpu.core_type = #tpu.core_type<tc>, window_params = [{transform_indices = @transform_0, window_bounds = array<i64: 144, 256>}, {pipeline_mode = #tpu.pipeline_mode<synchronous>, transform_indices = @transform_1, window_bounds = array<i64: 4, 256, 384>}, {pipeline_mode = #tpu.pipeline_mode<synchronous>, transform_indices = @transform_2, window_bounds = array<i64: 1, 384>}, {pipeline_mode = #tpu.pipeline_mode<synchronous>, transform_indices = @transform_3, window_bounds = array<i64: 4, 384, 256>}, {pipeline_mode = #tpu.pipeline_mode<synchronous>, transform_indices = @transform_4, window_bounds = array<i64: 1, 256>}, {pipeline_mode = #tpu.pipeline_mode<synchronous>, transform_indices = @transform_5, window_bounds = array<i64: 3, 256, 128>}, {pipeline_mode = #tpu.pipeline_mode<synchronous>, transform_indices = @transform_6, window_bounds = array<i64: 1, 128>}, {pipeline_mode = #tpu.pipeline_mode<synchronous>, transform_indices = @transform_7, window_bounds = array<i64: 128, 512>}, {pipeline_mode = #tpu.pipeline_mode<synchronous>, transform_indices = @transform_8, window_bounds = array<i64: 1, 512>}, {pipeline_mode = #tpu.pipeline_mode<synchronous>, transform_indices = @transform_9, window_bounds = array<i64: 1, 512>}, {pipeline_mode = #tpu.pipeline_mode<synchronous>, transform_indices = @transform_10, window_bounds = array<i64: 1, 1>}, {transform_indices = @transform_11, window_bounds = array<i64: 8, 1>}]} {
    %cst = arith.constant 0.000000e+00 : f32
    %0 = vector.broadcast %cst : f32 to vector<64x384xf32>
    %c0 = arith.constant 0 : index
    %c0_0 = arith.constant 0 : index
    %1 = vector.load %arg1[%c0, %c0_0] : memref<144x256xbf16, #tpu.memory_space<vmem>>, vector<64x256xbf16>
    %c0_1 = arith.constant 0 : index
    %c0_2 = arith.constant 0 : index
    %c0_3 = arith.constant 0 : index
    %2 = vector.load %arg2[%c0_1, %c0_2, %c0_3] : memref<4x256x384xbf16, #tpu.memory_space<vmem>>, vector<1x256x384xbf16>
    %3 = vector.shape_cast %2 : vector<1x256x384xbf16> to vector<256x384xbf16>
    %cst_4 = arith.constant dense<0.000000e+00> : vector<64x384xf32>
    %4 = tpu.matmul %1, %3, %cst_4 {dimension_numbers = #tpu.dot_dimension_numbers<[1], [0], [0], [1], [0, 0, 1, 1], [], []>} : vector<64x256xbf16>, vector<256x384xbf16>, vector<64x384xf32> -> vector<64x384xf32>
    %5 = arith.addf %0, %4 : vector<64x384xf32>
    %c72 = arith.constant 72 : index
    %c0_5 = arith.constant 0 : index
    %6 = vector.load %arg1[%c72, %c0_5] : memref<144x256xbf16, #tpu.memory_space<vmem>>, vector<64x256xbf16>
    %c1 = arith.constant 1 : index
    %c0_6 = arith.constant 0 : index
    %c0_7 = arith.constant 0 : index
    %7 = vector.load %arg2[%c1, %c0_6, %c0_7] : memref<4x256x384xbf16, #tpu.memory_space<vmem>>, vector<1x256x384xbf16>
    %8 = vector.shape_cast %7 : vector<1x256x384xbf16> to vector<256x384xbf16>
    %cst_8 = arith.constant dense<0.000000e+00> : vector<64x384xf32>
    %9 = tpu.matmul %6, %8, %cst_8 {dimension_numbers = #tpu.dot_dimension_numbers<[1], [0], [0], [1], [0, 0, 1, 1], [], []>} : vector<64x256xbf16>, vector<256x384xbf16>, vector<64x384xf32> -> vector<64x384xf32>
    %10 = arith.addf %5, %9 : vector<64x384xf32>
    %c8 = arith.constant 8 : index
    %c0_9 = arith.constant 0 : index
    %11 = vector.load %arg1[%c8, %c0_9] : memref<144x256xbf16, #tpu.memory_space<vmem>>, vector<64x256xbf16>
    %c2 = arith.constant 2 : index
    %c0_10 = arith.constant 0 : index
    %c0_11 = arith.constant 0 : index
    %12 = vector.load %arg2[%c2, %c0_10, %c0_11] : memref<4x256x384xbf16, #tpu.memory_space<vmem>>, vector<1x256x384xbf16>
    %13 = vector.shape_cast %12 : vector<1x256x384xbf16> to vector<256x384xbf16>
    %cst_12 = arith.constant dense<0.000000e+00> : vector<64x384xf32>
    %14 = tpu.matmul %11, %13, %cst_12 {dimension_numbers = #tpu.dot_dimension_numbers<[1], [0], [0], [1], [0, 0, 1, 1], [], []>} : vector<64x256xbf16>, vector<256x384xbf16>, vector<64x384xf32> -> vector<64x384xf32>
    %15 = arith.addf %10, %14 : vector<64x384xf32>
    %c80 = arith.constant 80 : index
    %c0_13 = arith.constant 0 : index
    %16 = vector.load %arg1[%c80, %c0_13] : memref<144x256xbf16, #tpu.memory_space<vmem>>, vector<64x256xbf16>
    %c3 = arith.constant 3 : index
    %c0_14 = arith.constant 0 : index
    %c0_15 = arith.constant 0 : index
    %17 = vector.load %arg2[%c3, %c0_14, %c0_15] : memref<4x256x384xbf16, #tpu.memory_space<vmem>>, vector<1x256x384xbf16>
    %18 = vector.shape_cast %17 : vector<1x256x384xbf16> to vector<256x384xbf16>
    %cst_16 = arith.constant dense<0.000000e+00> : vector<64x384xf32>
    %19 = tpu.matmul %16, %18, %cst_16 {dimension_numbers = #tpu.dot_dimension_numbers<[1], [0], [0], [1], [0, 0, 1, 1], [], []>} : vector<64x256xbf16>, vector<256x384xbf16>, vector<64x384xf32> -> vector<64x384xf32>
    %20 = arith.addf %15, %19 : vector<64x384xf32>
    %c0_17 = arith.constant 0 : index
    %c0_18 = arith.constant 0 : index
    %21 = vector.load %arg3[%c0_17, %c0_18] : memref<1x384xf32, #tpu.memory_space<vmem>>, vector<1x384xf32>
    %22 = vector.broadcast %21 : vector<1x384xf32> to vector<64x384xf32>
    %23 = arith.addf %20, %22 : vector<64x384xf32>
    %cst_19 = arith.constant 0.00999999977 : f32
    %24 = vector.broadcast %cst_19 : f32 to vector<64x384xf32>
    %25 = arith.mulf %24, %23 : vector<64x384xf32>
    %26 = arith.maximumf %23, %25 : vector<64x384xf32>
    %27 = vector.extract_strided_slice %26 {offsets = [0, 0], sizes = [8, 384], strides = [1, 1]} : vector<64x384xf32> to vector<8x384xf32>
    %c0_20 = arith.constant 0 : index
    %c0_21 = arith.constant 0 : index
    %28 = vector.load %arg13[%c0_20, %c0_21] : memref<64x384xf32, #tpu.memory_space<vmem>>, vector<8x384xf32>
    tpu.vector_store %arg13[%c0_20, %c0_21], %27 {strides = array<i32>} : memref<64x384xf32, #tpu.memory_space<vmem>>, vector<8x384xf32>,
    %29 = vector.extract_strided_slice %26 {offsets = [8, 0], sizes = [8, 384], strides = [1, 1]} : vector<64x384xf32> to vector<8x384xf32>
    %c32 = arith.constant 32 : index
    %c0_22 = arith.constant 0 : index
    %30 = vector.load %arg13[%c32, %c0_22] : memref<64x384xf32, #tpu.memory_space<vmem>>, vector<8x384xf32>
    tpu.vector_store %arg13[%c32, %c0_22], %29 {strides = array<i32>} : memref<64x384xf32, #tpu.memory_space<vmem>>, vector<8x384xf32>,
    %31 = vector.extract_strided_slice %26 {offsets = [16, 0], sizes = [8, 384], strides = [1, 1]} : vector<64x384xf32> to vector<8x384xf32>
    %c8_23 = arith.constant 8 : index
    %c0_24 = arith.constant 0 : index
    %32 = vector.load %arg13[%c8_23, %c0_24] : memref<64x384xf32, #tpu.memory_space<vmem>>, vector<8x384xf32>
    tpu.vector_store %arg13[%c8_23, %c0_24], %31 {strides = array<i32>} : memref<64x384xf32, #tpu.memory_space<vmem>>, vector<8x384xf32>,
    %33 = vector.extract_strided_slice %26 {offsets = [24, 0], sizes = [8, 384], strides = [1, 1]} : vector<64x384xf32> to vector<8x384xf32>
    %c40 = arith.constant 40 : index
    %c0_25 = arith.constant 0 : index
    %34 = vector.load %arg13[%c40, %c0_25] : memref<64x384xf32, #tpu.memory_space<vmem>>, vector<8x384xf32>
    tpu.vector_store %arg13[%c40, %c0_25], %33 {strides = array<i32>} : memref<64x384xf32, #tpu.memory_space<vmem>>, vector<8x384xf32>,
    %35 = vector.extract_strided_slice %26 {offsets = [32, 0], sizes = [8, 384], strides = [1, 1]} : vector<64x384xf32> to vector<8x384xf32>
    %c16 = arith.constant 16 : index
    %c0_26 = arith.constant 0 : index
    %36 = vector.load %arg13[%c16, %c0_26] : memref<64x384xf32, #tpu.memory_space<vmem>>, vector<8x384xf32>
    tpu.vector_store %arg13[%c16, %c0_26], %35 {strides = array<i32>} : memref<64x384xf32, #tpu.memory_space<vmem>>, vector<8x384xf32>,
    %37 = vector.extract_strided_slice %26 {offsets = [40, 0], sizes = [8, 384], strides = [1, 1]} : vector<64x384xf32> to vector<8x384xf32>
    %c48 = arith.constant 48 : index
    %c0_27 = arith.constant 0 : index
    %38 = vector.load %arg13[%c48, %c0_27] : memref<64x384xf32, #tpu.memory_space<vmem>>, vector<8x384xf32>
    tpu.vector_store %arg13[%c48, %c0_27], %37 {strides = array<i32>} : memref<64x384xf32, #tpu.memory_space<vmem>>, vector<8x384xf32>,
    %39 = vector.extract_strided_slice %26 {offsets = [48, 0], sizes = [8, 384], strides = [1, 1]} : vector<64x384xf32> to vector<8x384xf32>
    %c24 = arith.constant 24 : index
    %c0_28 = arith.constant 0 : index
    %40 = vector.load %arg13[%c24, %c0_28] : memref<64x384xf32, #tpu.memory_space<vmem>>, vector<8x384xf32>
    tpu.vector_store %arg13[%c24, %c0_28], %39 {strides = array<i32>} : memref<64x384xf32, #tpu.memory_space<vmem>>, vector<8x384xf32>,
    %41 = vector.extract_strided_slice %26 {offsets = [56, 0], sizes = [8, 384], strides = [1, 1]} : vector<64x384xf32> to vector<8x384xf32>
    %c56 = arith.constant 56 : index
    %c0_29 = arith.constant 0 : index
    %42 = vector.load %arg13[%c56, %c0_29] : memref<64x384xf32, #tpu.memory_space<vmem>>, vector<8x384xf32>
    tpu.vector_store %arg13[%c56, %c0_29], %41 {strides = array<i32>} : memref<64x384xf32, #tpu.memory_space<vmem>>, vector<8x384xf32>,
    %cst_30 = arith.constant 0.000000e+00 : f32
    %43 = vector.broadcast %cst_30 : f32 to vector<24x256xf32>
    %c0_31 = arith.constant 0 : index
    %c0_32 = arith.constant 0 : index
    %44 = vector.load %arg13[%c0_31, %c0_32] : memref<64x384xf32, #tpu.memory_space<vmem>>, vector<24x384xf32>
    %45 = arith.truncf %44 : vector<24x384xf32> to vector<24x384xbf16>
    %c0_33 = arith.constant 0 : index
    %c0_34 = arith.constant 0 : index
    %c0_35 = arith.constant 0 : index
    %46 = vector.load %arg4[%c0_33, %c0_34, %c0_35] : memref<4x384x256xbf16, #tpu.memory_space<vmem>>, vector<1x384x256xbf16>
    %47 = vector.shape_cast %46 : vector<1x384x256xbf16> to vector<384x256xbf16>
    %cst_36 = arith.constant dense<0.000000e+00> : vector<24x256xf32>
    %48 = tpu.matmul %45, %47, %cst_36 {dimension_numbers = #tpu.dot_dimension_numbers<[1], [0], [0], [1], [0, 0, 1, 1], [], []>} : vector<24x384xbf16>, vector<384x256xbf16>, vector<24x256xf32> -> vector<24x256xf32>
    %49 = arith.addf %43, %48 : vector<24x256xf32>
    %c32_37 = arith.constant 32 : index
    %c0_38 = arith.constant 0 : index
    %50 = vector.load %arg13[%c32_37, %c0_38] : memref<64x384xf32, #tpu.memory_space<vmem>>, vector<24x384xf32>
    %51 = arith.truncf %50 : vector<24x384xf32> to vector<24x384xbf16>
    %c1_39 = arith.constant 1 : index
    %c0_40 = arith.constant 0 : index
    %c0_41 = arith.constant 0 : index
    %52 = vector.load %arg4[%c1_39, %c0_40, %c0_41] : memref<4x384x256xbf16, #tpu.memory_space<vmem>>, vector<1x384x256xbf16>
    %53 = vector.shape_cast %52 : vector<1x384x256xbf16> to vector<384x256xbf16>
    %cst_42 = arith.constant dense<0.000000e+00> : vector<24x256xf32>
    %54 = tpu.matmul %51, %53, %cst_42 {dimension_numbers = #tpu.dot_dimension_numbers<[1], [0], [0], [1], [0, 0, 1, 1], [], []>} : vector<24x384xbf16>, vector<384x256xbf16>, vector<24x256xf32> -> vector<24x256xf32>
    %55 = arith.addf %49, %54 : vector<24x256xf32>
    %c8_43 = arith.constant 8 : index
    %c0_44 = arith.constant 0 : index
    %56 = vector.load %arg13[%c8_43, %c0_44] : memref<64x384xf32, #tpu.memory_space<vmem>>, vector<24x384xf32>
    %57 = arith.truncf %56 : vector<24x384xf32> to vector<24x384xbf16>
    %c2_45 = arith.constant 2 : index
    %c0_46 = arith.constant 0 : index
    %c0_47 = arith.constant 0 : index
    %58 = vector.load %arg4[%c2_45, %c0_46, %c0_47] : memref<4x384x256xbf16, #tpu.memory_space<vmem>>, vector<1x384x256xbf16>
    %59 = vector.shape_cast %58 : vector<1x384x256xbf16> to vector<384x256xbf16>
    %cst_48 = arith.constant dense<0.000000e+00> : vector<24x256xf32>
    %60 = tpu.matmul %57, %59, %cst_48 {dimension_numbers = #tpu.dot_dimension_numbers<[1], [0], [0], [1], [0, 0, 1, 1], [], []>} : vector<24x384xbf16>, vector<384x256xbf16>, vector<24x256xf32> -> vector<24x256xf32>
    %61 = arith.addf %55, %60 : vector<24x256xf32>
    %c40_49 = arith.constant 40 : index
    %c0_50 = arith.constant 0 : index
    %62 = vector.load %arg13[%c40_49, %c0_50] : memref<64x384xf32, #tpu.memory_space<vmem>>, vector<24x384xf32>
    %63 = arith.truncf %62 : vector<24x384xf32> to vector<24x384xbf16>
    %c3_51 = arith.constant 3 : index
    %c0_52 = arith.constant 0 : index
    %c0_53 = arith.constant 0 : index
    %64 = vector.load %arg4[%c3_51, %c0_52, %c0_53] : memref<4x384x256xbf16, #tpu.memory_space<vmem>>, vector<1x384x256xbf16>
    %65 = vector.shape_cast %64 : vector<1x384x256xbf16> to vector<384x256xbf16>
    %cst_54 = arith.constant dense<0.000000e+00> : vector<24x256xf32>
    %66 = tpu.matmul %63, %65, %cst_54 {dimension_numbers = #tpu.dot_dimension_numbers<[1], [0], [0], [1], [0, 0, 1, 1], [], []>} : vector<24x384xbf16>, vector<384x256xbf16>, vector<24x256xf32> -> vector<24x256xf32>
    %67 = arith.addf %61, %66 : vector<24x256xf32>
    %c0_55 = arith.constant 0 : index
    %c0_56 = arith.constant 0 : index
    %68 = vector.load %arg5[%c0_55, %c0_56] : memref<1x256xf32, #tpu.memory_space<vmem>>, vector<1x256xf32>
    %69 = vector.broadcast %68 : vector<1x256xf32> to vector<24x256xf32>
    %70 = arith.addf %67, %69 : vector<24x256xf32>
    %cst_57 = arith.constant 0.00999999977 : f32
    %71 = vector.broadcast %cst_57 : f32 to vector<24x256xf32>
    %72 = arith.mulf %71, %70 : vector<24x256xf32>
    %73 = arith.maximumf %70, %72 : vector<24x256xf32>
    %cst_58 = arith.constant 0.000000e+00 : f32
    %74 = vector.broadcast %cst_58 : f32 to vector<8x128xf32>
    %75 = vector.extract_strided_slice %73 {offsets = [0, 0], sizes = [8, 256], strides = [1, 1]} : vector<24x256xf32> to vector<8x256xf32>
    %76 = arith.truncf %75 : vector<8x256xf32> to vector<8x256xbf16>
    %c0_59 = arith.constant 0 : index
    %c0_60 = arith.constant 0 : index
    %c0_61 = arith.constant 0 : index
    %77 = vector.load %arg6[%c0_59, %c0_60, %c0_61] : memref<3x256x128xbf16, #tpu.memory_space<vmem>>, vector<1x256x128xbf16>
    %78 = vector.shape_cast %77 : vector<1x256x128xbf16> to vector<256x128xbf16>
    %cst_62 = arith.constant dense<0.000000e+00> : vector<8x128xf32>
    %79 = tpu.matmul %76, %78, %cst_62 {dimension_numbers = #tpu.dot_dimension_numbers<[1], [0], [0], [1], [0, 0, 1, 1], [], []>} : vector<8x256xbf16>, vector<256x128xbf16>, vector<8x128xf32> -> vector<8x128xf32>
    %80 = arith.addf %74, %79 : vector<8x128xf32>
    %81 = vector.extract_strided_slice %73 {offsets = [8, 0], sizes = [8, 256], strides = [1, 1]} : vector<24x256xf32> to vector<8x256xf32>
    %82 = arith.truncf %81 : vector<8x256xf32> to vector<8x256xbf16>
    %c1_63 = arith.constant 1 : index
    %c0_64 = arith.constant 0 : index
    %c0_65 = arith.constant 0 : index
    %83 = vector.load %arg6[%c1_63, %c0_64, %c0_65] : memref<3x256x128xbf16, #tpu.memory_space<vmem>>, vector<1x256x128xbf16>
    %84 = vector.shape_cast %83 : vector<1x256x128xbf16> to vector<256x128xbf16>
    %cst_66 = arith.constant dense<0.000000e+00> : vector<8x128xf32>
    %85 = tpu.matmul %82, %84, %cst_66 {dimension_numbers = #tpu.dot_dimension_numbers<[1], [0], [0], [1], [0, 0, 1, 1], [], []>} : vector<8x256xbf16>, vector<256x128xbf16>, vector<8x128xf32> -> vector<8x128xf32>
    %86 = arith.addf %80, %85 : vector<8x128xf32>
    %87 = vector.extract_strided_slice %73 {offsets = [16, 0], sizes = [8, 256], strides = [1, 1]} : vector<24x256xf32> to vector<8x256xf32>
    %88 = arith.truncf %87 : vector<8x256xf32> to vector<8x256xbf16>
    %c2_67 = arith.constant 2 : index
    %c0_68 = arith.constant 0 : index
    %c0_69 = arith.constant 0 : index
    %89 = vector.load %arg6[%c2_67, %c0_68, %c0_69] : memref<3x256x128xbf16, #tpu.memory_space<vmem>>, vector<1x256x128xbf16>
    %90 = vector.shape_cast %89 : vector<1x256x128xbf16> to vector<256x128xbf16>
    %cst_70 = arith.constant dense<0.000000e+00> : vector<8x128xf32>
    %91 = tpu.matmul %88, %90, %cst_70 {dimension_numbers = #tpu.dot_dimension_numbers<[1], [0], [0], [1], [0, 0, 1, 1], [], []>} : vector<8x256xbf16>, vector<256x128xbf16>, vector<8x128xf32> -> vector<8x128xf32>
    %92 = arith.addf %86, %91 : vector<8x128xf32>
    %c0_71 = arith.constant 0 : index
    %c0_72 = arith.constant 0 : index
    %93 = vector.load %arg7[%c0_71, %c0_72] : memref<1x128xf32, #tpu.memory_space<vmem>>, vector<1x128xf32>
    %94 = vector.broadcast %93 : vector<1x128xf32> to vector<8x128xf32>
    %95 = arith.addf %92, %94 : vector<8x128xf32>
    %cst_73 = arith.constant 0.00999999977 : f32
    %96 = vector.broadcast %cst_73 : f32 to vector<8x128xf32>
    %97 = arith.mulf %96, %95 : vector<8x128xf32>
    %98 = arith.maximumf %95, %97 : vector<8x128xf32>
    %99 = arith.truncf %98 : vector<8x128xf32> to vector<8x128xbf16>
    %c0_74 = arith.constant 0 : index
    %c0_75 = arith.constant 0 : index
    %100 = vector.load %arg8[%c0_74, %c0_75] : memref<128x512xbf16, #tpu.memory_space<vmem>>, vector<128x512xbf16>
    %cst_76 = arith.constant dense<0.000000e+00> : vector<8x512xf32>
    %101 = tpu.matmul %99, %100, %cst_76 {dimension_numbers = #tpu.dot_dimension_numbers<[1], [0], [0], [1], [0, 0, 1, 1], [], []>} : vector<8x128xbf16>, vector<128x512xbf16>, vector<8x512xf32> -> vector<8x512xf32>
    %c0_77 = arith.constant 0 : index
    %c0_78 = arith.constant 0 : index
    %102 = vector.load %arg9[%c0_77, %c0_78] : memref<1x512xf32, #tpu.memory_space<vmem>>, vector<1x512xf32>
    %103 = vector.broadcast %102 : vector<1x512xf32> to vector<8x512xf32>
    %104 = arith.addf %101, %103 : vector<8x512xf32>
    %cst_79 = arith.constant 0.00999999977 : f32
    %105 = vector.broadcast %cst_79 : f32 to vector<8x512xf32>
    %106 = arith.mulf %105, %104 : vector<8x512xf32>
    %107 = arith.maximumf %104, %106 : vector<8x512xf32>
    %c0_80 = arith.constant 0 : index
    %c0_81 = arith.constant 0 : index
    %108 = vector.load %arg10[%c0_80, %c0_81] : memref<1x512xf32, #tpu.memory_space<vmem>>, vector<1x512xf32>
    %109 = vector.broadcast %108 : vector<1x512xf32> to vector<8x512xf32>
    %110 = arith.mulf %107, %109 : vector<8x512xf32>
    %cst_82 = arith.constant dense<0.000000e+00> : vector<8xf32>
    %111 = vector.multi_reduction <add>, %110, %cst_82 [1] : vector<8x512xf32> to vector<8xf32>
    %112 = vector.shape_cast %111 : vector<8xf32> to vector<8x1xf32>
    %c0_83 = arith.constant 0 : index
    %c0_84 = arith.constant 0 : index
    %113 = vector.load %arg11[%c0_83, %c0_84] : memref<1x1xf32, #tpu.memory_space<vmem>>, vector<1x1xf32>
    %114 = vector.broadcast %113 : vector<1x1xf32> to vector<8x1xf32>
    %115 = arith.addf %112, %114 : vector<8x1xf32>
    %c0_85 = arith.constant 0 : index
    %c0_86 = arith.constant 0 : index
    %116 = vector.load %arg12[%c0_85, %c0_86] : memref<8x1xf32, #tpu.memory_space<vmem>>, vector<8x1xf32>
    tpu.vector_store %arg12[%c0_85, %c0_86], %115 {strides = array<i32>} : memref<8x1xf32, #tpu.memory_space<vmem>>, vector<8x1xf32>,
    return
  }
  func.func @transform_0(%arg0: i32) -> (i32, i32) {
    %c0_i32 = arith.constant 0 : i32
    %c0_i32_0 = arith.constant 0 : i32
    return %arg0, %c0_i32 : i32, i32
  }
  func.func @transform_1(%arg0: i32) -> (i32, i32, i32) {
    %c0_i32 = arith.constant 0 : i32
    %c0_i32_0 = arith.constant 0 : i32
    %c0_i32_1 = arith.constant 0 : i32
    %c0_i32_2 = arith.constant 0 : i32
    return %c0_i32, %c0_i32_0, %c0_i32_1 : i32, i32, i32
  }
  func.func @transform_2(%arg0: i32) -> (i32, i32) {
    %c0_i32 = arith.constant 0 : i32
    %c0_i32_0 = arith.constant 0 : i32
    %c0_i32_1 = arith.constant 0 : i32
    return %c0_i32, %c0_i32_0 : i32, i32
  }
  func.func @transform_3(%arg0: i32) -> (i32, i32, i32) {
    %c0_i32 = arith.constant 0 : i32
    %c0_i32_0 = arith.constant 0 : i32
    %c0_i32_1 = arith.constant 0 : i32
    %c0_i32_2 = arith.constant 0 : i32
    return %c0_i32, %c0_i32_0, %c0_i32_1 : i32, i32, i32
  }
  func.func @transform_4(%arg0: i32) -> (i32, i32) {
    %c0_i32 = arith.constant 0 : i32
    %c0_i32_0 = arith.constant 0 : i32
    %c0_i32_1 = arith.constant 0 : i32
    return %c0_i32, %c0_i32_0 : i32, i32
  }
  func.func @transform_5(%arg0: i32) -> (i32, i32, i32) {
    %c0_i32 = arith.constant 0 : i32
    %c0_i32_0 = arith.constant 0 : i32
    %c0_i32_1 = arith.constant 0 : i32
    %c0_i32_2 = arith.constant 0 : i32
    return %c0_i32, %c0_i32_0, %c0_i32_1 : i32, i32, i32
  }
  func.func @transform_6(%arg0: i32) -> (i32, i32) {
    %c0_i32 = arith.constant 0 : i32
    %c0_i32_0 = arith.constant 0 : i32
    %c0_i32_1 = arith.constant 0 : i32
    return %c0_i32, %c0_i32_0 : i32, i32
  }
  func.func @transform_7(%arg0: i32) -> (i32, i32) {
    %c0_i32 = arith.constant 0 : i32
    %c0_i32_0 = arith.constant 0 : i32
    %c0_i32_1 = arith.constant 0 : i32
    return %c0_i32, %c0_i32_0 : i32, i32
  }
  func.func @transform_8(%arg0: i32) -> (i32, i32) {
    %c0_i32 = arith.constant 0 : i32
    %c0_i32_0 = arith.constant 0 : i32
    %c0_i32_1 = arith.constant 0 : i32
    return %c0_i32, %c0_i32_0 : i32, i32
  }
  func.func @transform_9(%arg0: i32) -> (i32, i32) {
    %c0_i32 = arith.constant 0 : i32
    %c0_i32_0 = arith.constant 0 : i32
    %c0_i32_1 = arith.constant 0 : i32
    return %c0_i32, %c0_i32_0 : i32, i32
  }
  func.func @transform_10(%arg0: i32) -> (i32, i32) {
    %c0_i32 = arith.constant 0 : i32
    %c0_i32_0 = arith.constant 0 : i32
    %c0_i32_1 = arith.constant 0 : i32
    return %c0_i32, %c0_i32_0 : i32, i32
  }
  func.func @transform_11(%arg0: i32) -> (i32, i32) {
    %c0_i32 = arith.constant 0 : i32
    %c0_i32_0 = arith.constant 0 : i32
    return %arg0, %c0_i32 : i32, i32
  }
}

</mosaic_0001>

<llo_original>
// kernel: discriminator5_forward.1
$region0: #{discriminator5_forward.1}
  #allocation0 [shape = 'u32[]', space=smem, size = 0x4, offset = 0x4, fixed_abs, tag = 'smem constant byte address 0x4 - core index']
  #allocation1 [shape = 'u32[72,128]{1,0:T(1,128)}', space=vmem, size = 0x9000, scoped, tag = 'internal scratch']
  #allocation2 [shape = 'f32[64,384]{1,0:T(8,128)}', space=vmem, size = 0x18000, scoped, tag = 'scratch operand']
  #allocation3 [shape = 'f32[1,1]{1,0:T(1,128)S(1)}', space=vmem, size = 0x200, scoped, tag = 'scoped memory for discriminator5_forward.1']
  %s0 = inlined_call_operand.vmem [shape: bf16[288,256], index: 0, kind: input, shape index: {}]
  %s1 = inlined_call_operand.vmem [shape: bf16[4,256,384], index: 1, kind: input, shape index: {}]
  %s2 = inlined_call_operand.vmem [shape: f32[1,384], index: 2, kind: input, shape index: {}]
  %s3 = inlined_call_operand.vmem [shape: bf16[4,384,256], index: 3, kind: input, shape index: {}]
  %s4 = inlined_call_operand.vmem [shape: f32[1,256], index: 4, kind: input, shape index: {}]
  %s5 = inlined_call_operand.vmem [shape: bf16[3,256,128], index: 5, kind: input, shape index: {}]
  %s6 = inlined_call_operand.vmem [shape: f32[1,128], index: 6, kind: input, shape index: {}]
  %s7 = inlined_call_operand.vmem [shape: bf16[128,512], index: 7, kind: input, shape index: {}]
  %s8 = inlined_call_operand.vmem [shape: f32[1,512], index: 8, kind: input, shape index: {}]
  %s9 = inlined_call_operand.vmem [shape: f32[1,512], index: 9, kind: input, shape index: {}]
  %s10 = inlined_call_operand.<no memory space> [shape: f32[1,1], index: 10, kind: input, shape index: {}]
  %s11 = inlined_call_operand.vmem [shape: f32[16,1], index: 11, kind: output, shape index: {}]
  %s12 = sld [smem:[#allocation0]]
  $region77: #{discriminator5_forward.1} parent=0
    _
  %s14 = ssub.s32 1, %s12
  %s15 = scalar_select 0, %s14, %s12
  %v16 = vstv %s10
  %17 = vst [vmem:[#allocation3] sm:$0x1] %v16
  loop: start=0, step=1, limit=4
  $region2: #{discriminator5_forward.1} parent=0 // loop_pre_header
    _
  $region3: #{discriminator5_forward.1} parent=0 // loop_header
    %s19 = sphi 0, %s23
    %p20 = scmp.ge.s32.totalorder %s19, 4
    %s29 = sphi 0, %s31
    %s32 = sphi 0, %s29
    %s33 = sphi 0, %s32
    %s49 = sphi 0, %s33
    %s53 = sphi 0, %s53
    %s55 = sphi 0, %s53
    %s56 = sphi 0, %s55
    %s70 = sphi 0, %s56
    %s74 = sphi 0, %s74
    %s76 = sphi 0, %s74
    %s77 = sphi 0, %s76
    %s91 = sphi 0, %s77
    %s95 = sphi 0, %s95
    %s97 = sphi 0, %s95
    %s98 = sphi 0, %s97
    %s112 = sphi 0, %s98
    %s116 = sphi 0, %s116
    %s118 = sphi 0, %s116
    %s119 = sphi 0, %s118
    %s133 = sphi 0, %s119
    %s137 = sphi 0, %s137
    %s139 = sphi 0, %s137
    %s140 = sphi 0, %s139
    %s154 = sphi 0, %s140
    %s158 = sphi 0, %s158
    %s160 = sphi 0, %s158
    %s161 = sphi 0, %s160
    %s175 = sphi 0, %s161
    %s179 = sphi 0, %s179
    %s181 = sphi 0, %s179
    %s182 = sphi 0, %s181
    %s196 = sphi 0, %s182
    %s200 = sphi 0, %s200
    %s202 = sphi 0, %s200
    %s203 = sphi 0, %s202
    %s217 = sphi 0, %s203
    %s221 = sphi 0, %s221
    %s223 = sphi 0, %s221
    %s224 = sphi 0, %s223
    %s238 = sphi 0, %s224
    %s242 = sphi 0, %s242
    %s244 = sphi 0, %s242
    %s245 = sphi 0, %s244
    %s259 = sphi 0, %s245
    %s265 = sphi 0, %s267
    %s268 = sphi 0, %s265
    %s269 = sphi 0, %s268
    %s285 = sphi 0, %s269
  $region4: #{discriminator5_forward.1} parent=0 // loop_header_branch
    %22 = sbr.rel (%p20) target = $region8
  $region5: #{discriminator5_forward.1} parent=0 // loop_body
    %s24 = ssub.s32 %s19, 1
    %s25 = ssub.s32 %s19, 2
    %s26 = sadd.s32 %s19, 1
    %s27 = ssub.s32 %s19, %s26
    %p28 = scmp.eq.s32.totalorder %s27, 0
    %s30 = sadd.s32 %s29, 1
    %s31 = scalar_select %p28, %s29, %s30
    %p34 = pneg %p28
    %p35 = scmp.eq.s32.totalorder %s19, 1
    %p36 = por %p34, %p35
    %p37 = scmp.ne.s32.totalorder %s29, %s32
    %p38 = scmp.eq.s32.totalorder %s19, 0
    %p39 = por %p37, %p38
    %p40 = scmp.ne.s32.totalorder %s29, %s32
    %p41 = scmp.eq.s32.totalorder %s24, 1
    %p42 = por %p40, %p41
    %p43 = scmp.ne.s32.totalorder %s32, %s33
    %p44 = scmp.eq.s32.totalorder %s24, 0
    %p45 = por %p43, %p44
    %p46 = scmp.ne.s32.totalorder %s32, %s33
    %p47 = scmp.eq.s32.totalorder %s25, 1
    %p48 = por %p46, %p47
    %p50 = scmp.ne.s32.totalorder %s33, %s49
    %p51 = scmp.eq.s32.totalorder %s25, 0
    %p52 = por %p50, %p51
    %s54 = sadd.s32 %s53, 1
    %p57 = scmp.eq.s32.totalorder %s19, 1
    %p58 = scmp.ne.s32.totalorder %s53, %s55
    %p59 = scmp.eq.s32.totalorder %s19, 0
    %p60 = por %p58, %p59
    %p61 = scmp.ne.s32.totalorder %s53, %s55
    %p62 = scmp.eq.s32.totalorder %s24, 1
    %p63 = por %p61, %p62
    %p64 = scmp.ne.s32.totalorder %s55, %s56
    %p65 = scmp.eq.s32.totalorder %s24, 0
    %p66 = por %p64, %p65
    %p67 = scmp.ne.s32.totalorder %s55, %s56
    %p68 = scmp.eq.s32.totalorder %s25, 1
    %p69 = por %p67, %p68
    %p71 = scmp.ne.s32.totalorder %s56, %s70
    %p72 = scmp.eq.s32.totalorder %s25, 0
    %p73 = por %p71, %p72
    %s75 = sadd.s32 %s74, 1
    %p78 = scmp.eq.s32.totalorder %s19, 1
    %p79 = scmp.ne.s32.totalorder %s74, %s76
    %p80 = scmp.eq.s32.totalorder %s19, 0
    %p81 = por %p79, %p80
    %p82 = scmp.ne.s32.totalorder %s74, %s76
    %p83 = scmp.eq.s32.totalorder %s24, 1
    %p84 = por %p82, %p83
    %p85 = scmp.ne.s32.totalorder %s76, %s77
    %p86 = scmp.eq.s32.totalorder %s24, 0
    %p87 = por %p85, %p86
    %p88 = scmp.ne.s32.totalorder %s76, %s77
    %p89 = scmp.eq.s32.totalorder %s25, 1
    %p90 = por %p88, %p89
    %p92 = scmp.ne.s32.totalorder %s77, %s91
    %p93 = scmp.eq.s32.totalorder %s25, 0
    %p94 = por %p92, %p93
    %s96 = sadd.s32 %s95, 1
    %p99 = scmp.eq.s32.totalorder %s19, 1
    %p100 = scmp.ne.s32.totalorder %s95, %s97
    %p101 = scmp.eq.s32.totalorder %s19, 0
    %p102 = por %p100, %p101
    %p103 = scmp.ne.s32.totalorder %s95, %s97
    %p104 = scmp.eq.s32.totalorder %s24, 1
    %p105 = por %p103, %p104
    %p106 = scmp.ne.s32.totalorder %s97, %s98
    %p107 = scmp.eq.s32.totalorder %s24, 0
    %p108 = por %p106, %p107
    %p109 = scmp.ne.s32.totalorder %s97, %s98
    %p110 = scmp.eq.s32.totalorder %s25, 1
    %p111 = por %p109, %p110
    %p113 = scmp.ne.s32.totalorder %s98, %s112
    %p114 = scmp.eq.s32.totalorder %s25, 0
    %p115 = por %p113, %p114
    %s117 = sadd.s32 %s116, 1
    %p120 = scmp.eq.s32.totalorder %s19, 1
    %p121 = scmp.ne.s32.totalorder %s116, %s118
    %p122 = scmp.eq.s32.totalorder %s19, 0
    %p123 = por %p121, %p122
    %p124 = scmp.ne.s32.totalorder %s116, %s118
    %p125 = scmp.eq.s32.totalorder %s24, 1
    %p126 = por %p124, %p125
    %p127 = scmp.ne.s32.totalorder %s118, %s119
    %p128 = scmp.eq.s32.totalorder %s24, 0
    %p129 = por %p127, %p128
    %p130 = scmp.ne.s32.totalorder %s118, %s119
    %p131 = scmp.eq.s32.totalorder %s25, 1
    %p132 = por %p130, %p131
    %p134 = scmp.ne.s32.totalorder %s119, %s133
    %p135 = scmp.eq.s32.totalorder %s25, 0
    %p136 = por %p134, %p135
    %s138 = sadd.s32 %s137, 1
    %p141 = scmp.eq.s32.totalorder %s19, 1
    %p142 = scmp.ne.s32.totalorder %s137, %s139
    %p143 = scmp.eq.s32.totalorder %s19, 0
    %p144 = por %p142, %p143
    %p145 = scmp.ne.s32.totalorder %s137, %s139
    %p146 = scmp.eq.s32.totalorder %s24, 1
    %p147 = por %p145, %p146
    %p148 = scmp.ne.s32.totalorder %s139, %s140
    %p149 = scmp.eq.s32.totalorder %s24, 0
    %p150 = por %p148, %p149
    %p151 = scmp.ne.s32.totalorder %s139, %s140
    %p152 = scmp.eq.s32.totalorder %s25, 1
    %p153 = por %p151, %p152
    %p155 = scmp.ne.s32.totalorder %s140, %s154
    %p156 = scmp.eq.s32.totalorder %s25, 0
    %p157 = por %p155, %p156
    %s159 = sadd.s32 %s158, 1
    %p162 = scmp.eq.s32.totalorder %s19, 1
    %p163 = scmp.ne.s32.totalorder %s158, %s160
    %p164 = scmp.eq.s32.totalorder %s19, 0
    %p165 = por %p163, %p164
    %p166 = scmp.ne.s32.totalorder %s158, %s160
    %p167 = scmp.eq.s32.totalorder %s24, 1
    %p168 = por %p166, %p167
    %p169 = scmp.ne.s32.totalorder %s160, %s161
    %p170 = scmp.eq.s32.totalorder %s24, 0
    %p171 = por %p169, %p170
    %p172 = scmp.ne.s32.totalorder %s160, %s161
    %p173 = scmp.eq.s32.totalorder %s25, 1
    %p174 = por %p172, %p173
    %p176 = scmp.ne.s32.totalorder %s161, %s175
    %p177 = scmp.eq.s32.totalorder %s25, 0
    %p178 = por %p176, %p177
    %s180 = sadd.s32 %s179, 1
    %p183 = scmp.eq.s32.totalorder %s19, 1
    %p184 = scmp.ne.s32.totalorder %s179, %s181
    %p185 = scmp.eq.s32.totalorder %s19, 0
    %p186 = por %p184, %p185
    %p187 = scmp.ne.s32.totalorder %s179, %s181
    %p188 = scmp.eq.s32.totalorder %s24, 1
    %p189 = por %p187, %p188
    %p190 = scmp.ne.s32.totalorder %s181, %s182
    %p191 = scmp.eq.s32.totalorder %s24, 0
    %p192 = por %p190, %p191
    %p193 = scmp.ne.s32.totalorder %s181, %s182
    %p194 = scmp.eq.s32.totalorder %s25, 1
    %p195 = por %p193, %p194
    %p197 = scmp.ne.s32.totalorder %s182, %s196
    %p198 = scmp.eq.s32.totalorder %s25, 0
    %p199 = por %p197, %p198
    %s201 = sadd.s32 %s200, 1
    %p204 = scmp.eq.s32.totalorder %s19, 1
    %p205 = scmp.ne.s32.totalorder %s200, %s202
    %p206 = scmp.eq.s32.totalorder %s19, 0
    %p207 = por %p205, %p206
    %p208 = scmp.ne.s32.totalorder %s200, %s202
    %p209 = scmp.eq.s32.totalorder %s24, 1
    %p210 = por %p208, %p209
    %p211 = scmp.ne.s32.totalorder %s202, %s203
    %p212 = scmp.eq.s32.totalorder %s24, 0
    %p213 = por %p211, %p212
    %p214 = scmp.ne.s32.totalorder %s202, %s203
    %p215 = scmp.eq.s32.totalorder %s25, 1
    %p216 = por %p214, %p215
    %p218 = scmp.ne.s32.totalorder %s203, %s217
    %p219 = scmp.eq.s32.totalorder %s25, 0
    %p220 = por %p218, %p219
    %s222 = sadd.s32 %s221, 1
    %p225 = scmp.eq.s32.totalorder %s19, 1
    %p226 = scmp.ne.s32.totalorder %s221, %s223
    %p227 = scmp.eq.s32.totalorder %s19, 0
    %p228 = por %p226, %p227
    %p229 = scmp.ne.s32.totalorder %s221, %s223
    %p230 = scmp.eq.s32.totalorder %s24, 1
    %p231 = por %p229, %p230
    %p232 = scmp.ne.s32.totalorder %s223, %s224
    %p233 = scmp.eq.s32.totalorder %s24, 0
    %p234 = por %p232, %p233
    %p235 = scmp.ne.s32.totalorder %s223, %s224
    %p236 = scmp.eq.s32.totalorder %s25, 1
    %p237 = por %p235, %p236
    %p239 = scmp.ne.s32.totalorder %s224, %s238
    %p240 = scmp.eq.s32.totalorder %s25, 0
    %p241 = por %p239, %p240
    %s243 = sadd.s32 %s242, 1
    %p246 = scmp.eq.s32.totalorder %s19, 1
    %p247 = scmp.ne.s32.totalorder %s242, %s244
    %p248 = scmp.eq.s32.totalorder %s19, 0
    %p249 = por %p247, %p248
    %p250 = scmp.ne.s32.totalorder %s242, %s244
    %p251 = scmp.eq.s32.totalorder %s24, 1
    %p252 = por %p250, %p251
    %p253 = scmp.ne.s32.totalorder %s244, %s245
    %p254 = scmp.eq.s32.totalorder %s24, 0
    %p255 = por %p253, %p254
    %p256 = scmp.ne.s32.totalorder %s244, %s245
    %p257 = scmp.eq.s32.totalorder %s25, 1
    %p258 = por %p256, %p257
    %p260 = scmp.ne.s32.totalorder %s245, %s259
    %p261 = scmp.eq.s32.totalorder %s25, 0
    %p262 = por %p260, %p261
    %s263 = ssub.s32 %s19, %s26
    %p264 = scmp.eq.s32.totalorder %s263, 0
    %s266 = sadd.s32 %s265, 1
    %s267 = scalar_select %p264, %s265, %s266
    %p270 = pneg %p264
    %p271 = scmp.eq.s32.totalorder %s19, 1
    %p272 = por %p270, %p271
    %p273 = scmp.ne.s32.totalorder %s265, %s268
    %p274 = scmp.eq.s32.totalorder %s19, 0
    %p275 = por %p273, %p274
    %p276 = scmp.ne.s32.totalorder %s265, %s268
    %p277 = scmp.eq.s32.totalorder %s24, 1
    %p278 = por %p276, %p277
    %p279 = scmp.ne.s32.totalorder %s268, %s269
    %p280 = scmp.eq.s32.totalorder %s24, 0
    %p281 = por %p279, %p280
    %p282 = scmp.ne.s32.totalorder %s268, %s269
    %p283 = scmp.eq.s32.totalorder %s25, 1
    %p284 = por %p282, %p283
    %p286 = scmp.ne.s32.totalorder %s269, %s285
    %p287 = scmp.eq.s32.totalorder %s25, 0
    %p288 = por %p286, %p287
    %p289 = scmp.le.s32.totalorder 1, %s19
    %p290 = scmp.lt.s32.totalorder %s19, 3
    %p291 = pnand %p289, %p290
    %p292 = pneg %p291
    // Predicated region
    $region9: #{discriminator5_forward.1} parent=5 // pred_check
      _
    $region10: #{discriminator5_forward.1} parent=5 // pred_check_branch
      %294 = sbr.rel (%p291) target = $region12
    $region11: #{discriminator5_forward.1} parent=5 // pred_region
      %s295 = ssub.s32 %s19, 1
      // Predicated region
      $region13: #{discriminator5_forward.1} parent=11 // pred_check
        %p296 = pneg %p66
      $region14: #{discriminator5_forward.1} parent=11 // pred_check_branch
        %298 = sbr.rel (%p296) target = $region16
      $region15: #{discriminator5_forward.1} parent=11 // pred_region
        _
      $region16: #{discriminator5_forward.1} parent=11 // pred_fallthru
        _
      // Predicated region
      $region17: #{discriminator5_forward.1} parent=11 // pred_check
        %p299 = pneg %p87
      $region18: #{discriminator5_forward.1} parent=11 // pred_check_branch
        %301 = sbr.rel (%p299) target = $region20
      $region19: #{discriminator5_forward.1} parent=11 // pred_region
        _
      $region20: #{discriminator5_forward.1} parent=11 // pred_fallthru
        _
      // Predicated region
      $region21: #{discriminator5_forward.1} parent=11 // pred_check
        %p302 = pneg %p108
      $region22: #{discriminator5_forward.1} parent=11 // pred_check_branch
        %304 = sbr.rel (%p302) target = $region24
      $region23: #{discriminator5_forward.1} parent=11 // pred_region
        _
      $region24: #{discriminator5_forward.1} parent=11 // pred_fallthru
        _
      // Predicated region
      $region25: #{discriminator5_forward.1} parent=11 // pred_check
        %p305 = pneg %p129
      $region26: #{discriminator5_forward.1} parent=11 // pred_check_branch
        %307 = sbr.rel (%p305) target = $region28
      $region27: #{discriminator5_forward.1} parent=11 // pred_region
        _
      $region28: #{discriminator5_forward.1} parent=11 // pred_fallthru
        _
      // Predicated region
      $region29: #{discriminator5_forward.1} parent=11 // pred_check
        %p308 = pneg %p150
      $region30: #{discriminator5_forward.1} parent=11 // pred_check_branch
        %310 = sbr.rel (%p308) target = $region32
      $region31: #{discriminator5_forward.1} parent=11 // pred_region
        _
      $region32: #{discriminator5_forward.1} parent=11 // pred_fallthru
        _
      // Predicated region
      $region33: #{discriminator5_forward.1} parent=11 // pred_check
        %p311 = pneg %p171
      $region34: #{discriminator5_forward.1} parent=11 // pred_check_branch
        %313 = sbr.rel (%p311) target = $region36
      $region35: #{discriminator5_forward.1} parent=11 // pred_region
        _
      $region36: #{discriminator5_forward.1} parent=11 // pred_fallthru
        _
      // Predicated region
      $region37: #{discriminator5_forward.1} parent=11 // pred_check
        %p314 = pneg %p192
      $region38: #{discriminator5_forward.1} parent=11 // pred_check_branch
        %316 = sbr.rel (%p314) target = $region40
      $region39: #{discriminator5_forward.1} parent=11 // pred_region
        _
      $region40: #{discriminator5_forward.1} parent=11 // pred_fallthru
        _
      // Predicated region
      $region41: #{discriminator5_forward.1} parent=11 // pred_check
        %p317 = pneg %p213
      $region42: #{discriminator5_forward.1} parent=11 // pred_check_branch
        %319 = sbr.rel (%p317) target = $region44
      $region43: #{discriminator5_forward.1} parent=11 // pred_region
        _
      $region44: #{discriminator5_forward.1} parent=11 // pred_fallthru
        _
      // Predicated region
      $region45: #{discriminator5_forward.1} parent=11 // pred_check
        %p320 = pneg %p234
      $region46: #{discriminator5_forward.1} parent=11 // pred_check_branch
        %322 = sbr.rel (%p320) target = $region48
      $region47: #{discriminator5_forward.1} parent=11 // pred_region
        _
      $region48: #{discriminator5_forward.1} parent=11 // pred_fallthru
        _
      // Predicated region
      $region49: #{discriminator5_forward.1} parent=11 // pred_check
        %p323 = pneg %p255
      $region50: #{discriminator5_forward.1} parent=11 // pred_check_branch
        %325 = sbr.rel (%p323) target = $region52
      $region51: #{discriminator5_forward.1} parent=11 // pred_region
        _
      $region52: #{discriminator5_forward.1} parent=11 // pred_fallthru
        _
    $region12: #{discriminator5_forward.1} parent=5 // pred_fallthru
      _
    %p326 = scmp.lt.s32.totalorder %s19, 2
    // Predicated region
    $region53: #{discriminator5_forward.1} parent=5 // pred_check
      %p327 = pneg %p326
    $region54: #{discriminator5_forward.1} parent=5 // pred_check_branch
      %329 = sbr.rel (%p327) target = $region56
    $region55: #{discriminator5_forward.1} parent=5 // pred_region
      // Predicated region
      $region57: #{discriminator5_forward.1} parent=55 // pred_check
        %p330 = pneg %p39
      $region58: #{discriminator5_forward.1} parent=55 // pred_check_branch
        %332 = sbr.rel (%p330) target = $region60
      $region59: #{discriminator5_forward.1} parent=55 // pred_region
        %s333 = smul.u32 18, %s19
        %p334 = scmp.lt.s32.totalorder %s333, 35
        %s335 = scalar_select %p334, %s333, 35
        %s336 = smul.addr %s335, 2
        %s337 = smul.addr %s336, 4
        %s338 = scalar_lea.vmem %s0, %s337
        %s339 = smul.u32 18, %s19
      $region60: #{discriminator5_forward.1} parent=55 // pred_fallthru
        _
    $region56: #{discriminator5_forward.1} parent=5 // pred_fallthru
      _
    %p340 = scmp.le.s32.totalorder 1, %s19
    %p341 = scmp.lt.s32.totalorder %s19, 3
    %p342 = pnand %p340, %p341
    %p343 = pneg %p342
    // Predicated region
    $region61: #{discriminator5_forward.1} parent=5 // pred_check
      _
    $region62: #{discriminator5_forward.1} parent=5 // pred_check_branch
      %345 = sbr.rel (%p342) target = $region64
    $region63: #{discriminator5_forward.1} parent=5 // pred_region
      %s346 = ssub.s32 %s19, 1
      %s347 = smul.u32 18, %s24
      %p348 = scmp.lt.s32.totalorder %s347, 35
      %s349 = scalar_select %p348, %s347, 35
      %s350 = smul.addr %s349, 2
      %s351 = smul.addr %s350, 4
      %s352 = scalar_lea.vmem %s0, %s351
      %p353 = pneg %p45
      %p354 = pneg %p42
      %p355 = pneg %p66
      %p356 = pneg %p63
      %p357 = pneg %p87
      %p358 = pneg %p84
      %p359 = pneg %p108
      %p360 = pneg %p105
      %p361 = pneg %p129
      %p362 = pneg %p126
      %p363 = pneg %p150
      %p364 = pneg %p147
      %p365 = pneg %p171
      %p366 = pneg %p168
      %p367 = pneg %p192
      %p368 = pneg %p189
      %p369 = pneg %p213
      %p370 = pneg %p210
      %p371 = pneg %p234
      %p372 = pneg %p231
      %p373 = pneg %p255
      %p374 = pneg %p252
      %p375 = pneg %p281
      %p376 = pneg %p278
      %p377 = scmp.lt.s32.totalorder %s24, 1
      %s378 = scalar_select %p377, %s24, 1
      %s379 = smul.addr %s378, 8
      %s380 = scalar_lea.vmem %s11, %s379
      %s381 = smul.u32 18, %s24
      %p382 = scmp.lt.s32.totalorder %s381, 35
      %s383 = scalar_select %p382, %s381, 35
      %s384 = smul.addr %s383, 2
      %s385 = smul.addr %s384, 4
      %s386 = scalar_lea.vmem %s0, %s385
      %s387 = smul.u32 18, %s24
      %p388 = scmp.lt.s32.totalorder %s24, 1
      %s389 = scalar_select %p388, %s24, 1
      %s390 = smul.addr %s389, 8
      %s391 = scalar_lea.vmem %s11, %s390
      %v392 = vld [vmem:[%s386] sm:$0xff]
      %v393 = vld [vmem:[%s386 + $0x8] sm:$0xff]
      %v394 = vld [vmem:[%s386 + $0x10] sm:$0xff]
      %v395 = vld [vmem:[%s386 + $0x18] sm:$0xff]
      %v396 = vld [vmem:[%s386 + $0x20] sm:$0xff]
      %v397 = vld [vmem:[%s386 + $0x28] sm:$0xff]
      %v398 = vld [vmem:[%s386 + $0x30] sm:$0xff]
      %v399 = vld [vmem:[%s386 + $0x38] sm:$0xff]
      %v400 = vld [vmem:[%s1] sm:$0xff]
      %v401 = vld [vmem:[%s1 + $0x8] sm:$0xf]
      %v402 = vld [vmem:[%s1 + $0xc] sm:$0xff]
      %v403 = vld [vmem:[%s1 + $0x14] sm:$0xf]
      %v404 = vld [vmem:[%s1 + $0x18] sm:$0xff]
      %v405 = vld [vmem:[%s1 + $0x20] sm:$0xf]
      %v406 = vld [vmem:[%s1 + $0x24] sm:$0xff]
      %v407 = vld [vmem:[%s1 + $0x2c] sm:$0xf]
      %v408 = vld [vmem:[%s1 + $0x30] sm:$0xff]
      %v409 = vld [vmem:[%s1 + $0x38] sm:$0xf]
      %v410 = vld [vmem:[%s1 + $0x3c] sm:$0xff]
      %v411 = vld [vmem:[%s1 + $0x44] sm:$0xf]
      %v412 = vld [vmem:[%s1 + $0x48] sm:$0xff]
      %v413 = vld [vmem:[%s1 + $0x50] sm:$0xf]
      %v414 = vld [vmem:[%s1 + $0x54] sm:$0xff]
      %v415 = vld [vmem:[%s1 + $0x5c] sm:$0xf]
      %v416 = vld [vmem:[%s1 + $0x60] sm:$0xff]
      %v417 = vld [vmem:[%s1 + $0x68] sm:$0xf]
      %v418 = vld [vmem:[%s1 + $0x6c] sm:$0xff]
      %v419 = vld [vmem:[%s1 + $0x74] sm:$0xf]
      %v420 = vld [vmem:[%s1 + $0x78] sm:$0xff]
      %v421 = vld [vmem:[%s1 + $0x80] sm:$0xf]
      %v422 = vld [vmem:[%s1 + $0x84] sm:$0xff]
      %v423 = vld [vmem:[%s1 + $0x8c] sm:$0xf]
      %v424 = vld [vmem:[%s1 + $0x90] sm:$0xff]
      %v425 = vld [vmem:[%s1 + $0x98] sm:$0xf]
      %v426 = vld [vmem:[%s1 + $0x9c] sm:$0xff]
      %v427 = vld [vmem:[%s1 + $0xa4] sm:$0xf]
      %v428 = vld [vmem:[%s1 + $0xa8] sm:$0xff]
      %v429 = vld [vmem:[%s1 + $0xb0] sm:$0xf]
      %v430 = vld [vmem:[%s1 + $0xb4] sm:$0xff]
      %v431 = vld [vmem:[%s1 + $0xbc] sm:$0xf]
      %v432 = vld [vmem:[%s1 + $0xc0] sm:$0xff]
      %v433 = vld [vmem:[%s1 + $0xc8] sm:$0xf]
      %v434 = vld [vmem:[%s1 + $0xcc] sm:$0xff]
      %v435 = vld [vmem:[%s1 + $0xd4] sm:$0xf]
      %v436 = vld [vmem:[%s1 + $0xd8] sm:$0xff]
      %v437 = vld [vmem:[%s1 + $0xe0] sm:$0xf]
      %v438 = vld [vmem:[%s1 + $0xe4] sm:$0xff]
      %v439 = vld [vmem:[%s1 + $0xec] sm:$0xf]
      %v440 = vld [vmem:[%s1 + $0xf0] sm:$0xff]
      %v441 = vld [vmem:[%s1 + $0xf8] sm:$0xf]
      %v442 = vld [vmem:[%s1 + $0xfc] sm:$0xff]
      %v443 = vld [vmem:[%s1 + $0x104] sm:$0xf]
      %v444 = vld [vmem:[%s1 + $0x108] sm:$0xff]
      %v445 = vld [vmem:[%s1 + $0x110] sm:$0xf]
      %v446 = vld [vmem:[%s1 + $0x114] sm:$0xff]
      %v447 = vld [vmem:[%s1 + $0x11c] sm:$0xf]
      %v448 = vld [vmem:[%s1 + $0x120] sm:$0xff]
      %v449 = vld [vmem:[%s1 + $0x128] sm:$0xf]
      %v450 = vld [vmem:[%s1 + $0x12c] sm:$0xff]
      %v451 = vld [vmem:[%s1 + $0x134] sm:$0xf]
      %v452 = vld [vmem:[%s1 + $0x138] sm:$0xff]
      %v453 = vld [vmem:[%s1 + $0x140] sm:$0xf]
      %v454 = vld [vmem:[%s1 + $0x144] sm:$0xff]
      %v455 = vld [vmem:[%s1 + $0x14c] sm:$0xf]
      %v456 = vld [vmem:[%s1 + $0x150] sm:$0xff]
      %v457 = vld [vmem:[%s1 + $0x158] sm:$0xf]
      %v458 = vld [vmem:[%s1 + $0x15c] sm:$0xff]
      %v459 = vld [vmem:[%s1 + $0x164] sm:$0xf]
      %v460 = vld [vmem:[%s1 + $0x168] sm:$0xff]
      %v461 = vld [vmem:[%s1 + $0x170] sm:$0xf]
      %v462 = vld [vmem:[%s1 + $0x174] sm:$0xff]
      %v463 = vld [vmem:[%s1 + $0x17c] sm:$0xf]
      %v464 = vld [vmem:[%s386 + $0x48] sm:$0xff]
      %v465 = vld [vmem:[%s386 + $0x50] sm:$0xff]
      %v466 = vld [vmem:[%s386 + $0x58] sm:$0xff]
      %v467 = vld [vmem:[%s386 + $0x60] sm:$0xff]
      %v468 = vld [vmem:[%s386 + $0x68] sm:$0xff]
      %v469 = vld [vmem:[%s386 + $0x70] sm:$0xff]
      %v470 = vld [vmem:[%s386 + $0x78] sm:$0xff]
      %v471 = vld [vmem:[%s386 + $0x80] sm:$0xff]
      %s472 = scalar_lea.vmem %s1, 384
      %v473 = vld [vmem:[%s472] sm:$0xff]
      %v474 = vld [vmem:[%s472 + $0x8] sm:$0xf]
      %v475 = vld [vmem:[%s472 + $0xc] sm:$0xff]
      %v476 = vld [vmem:[%s472 + $0x14] sm:$0xf]
      %v477 = vld [vmem:[%s472 + $0x18] sm:$0xff]
      %v478 = vld [vmem:[%s472 + $0x20] sm:$0xf]
      %v479 = vld [vmem:[%s472 + $0x24] sm:$0xff]
      %v480 = vld [vmem:[%s472 + $0x2c] sm:$0xf]
      %v481 = vld [vmem:[%s472 + $0x30] sm:$0xff]
      %v482 = vld [vmem:[%s472 + $0x38] sm:$0xf]
      %v483 = vld [vmem:[%s472 + $0x3c] sm:$0xff]
      %v484 = vld [vmem:[%s472 + $0x44] sm:$0xf]
      %v485 = vld [vmem:[%s472 + $0x48] sm:$0xff]
      %v486 = vld [vmem:[%s472 + $0x50] sm:$0xf]
      %v487 = vld [vmem:[%s472 + $0x54] sm:$0xff]
      %v488 = vld [vmem:[%s472 + $0x5c] sm:$0xf]
      %v489 = vld [vmem:[%s472 + $0x60] sm:$0xff]
      %v490 = vld [vmem:[%s472 + $0x68] sm:$0xf]
      %v491 = vld [vmem:[%s472 + $0x6c] sm:$0xff]
      %v492 = vld [vmem:[%s472 + $0x74] sm:$0xf]
      %v493 = vld [vmem:[%s472 + $0x78] sm:$0xff]
      %v494 = vld [vmem:[%s472 + $0x80] sm:$0xf]
      %v495 = vld [vmem:[%s472 + $0x84] sm:$0xff]
      %v496 = vld [vmem:[%s472 + $0x8c] sm:$0xf]
      %v497 = vld [vmem:[%s472 + $0x90] sm:$0xff]
      %v498 = vld [vmem:[%s472 + $0x98] sm:$0xf]
      %v499 = vld [vmem:[%s472 + $0x9c] sm:$0xff]
      %v500 = vld [vmem:[%s472 + $0xa4] sm:$0xf]
      %v501 = vld [vmem:[%s472 + $0xa8] sm:$0xff]
      %v502 = vld [vmem:[%s472 + $0xb0] sm:$0xf]
      %v503 = vld [vmem:[%s472 + $0xb4] sm:$0xff]
      %v504 = vld [vmem:[%s472 + $0xbc] sm:$0xf]
      %v505 = vld [vmem:[%s472 + $0xc0] sm:$0xff]
      %v506 = vld [vmem:[%s472 + $0xc8] sm:$0xf]
      %v507 = vld [vmem:[%s472 + $0xcc] sm:$0xff]
      %v508 = vld [vmem:[%s472 + $0xd4] sm:$0xf]
      %v509 = vld [vmem:[%s472 + $0xd8] sm:$0xff]
      %v510 = vld [vmem:[%s472 + $0xe0] sm:$0xf]
      %v511 = vld [vmem:[%s472 + $0xe4] sm:$0xff]
      %v512 = vld [vmem:[%s472 + $0xec] sm:$0xf]
      %v513 = vld [vmem:[%s472 + $0xf0] sm:$0xff]
      %v514 = vld [vmem:[%s472 + $0xf8] sm:$0xf]
      %v515 = vld [vmem:[%s472 + $0xfc] sm:$0xff]
      %v516 = vld [vmem:[%s472 + $0x104] sm:$0xf]
      %v517 = vld [vmem:[%s472 + $0x108] sm:$0xff]
      %v518 = vld [vmem:[%s472 + $0x110] sm:$0xf]
      %v519 = vld [vmem:[%s472 + $0x114] sm:$0xff]
      %v520 = vld [vmem:[%s472 + $0x11c] sm:$0xf]
      %v521 = vld [vmem:[%s472 + $0x120] sm:$0xff]
      %v522 = vld [vmem:[%s472 + $0x128] sm:$0xf]
      %v523 = vld [vmem:[%s472 + $0x12c] sm:$0xff]
      %v524 = vld [vmem:[%s472 + $0x134] sm:$0xf]
      %v525 = vld [vmem:[%s472 + $0x138] sm:$0xff]
      %v526 = vld [vmem:[%s472 + $0x140] sm:$0xf]
      %v527 = vld [vmem:[%s472 + $0x144] sm:$0xff]
      %v528 = vld [vmem:[%s472 + $0x14c] sm:$0xf]
      %v529 = vld [vmem:[%s472 + $0x150] sm:$0xff]
      %v530 = vld [vmem:[%s472 + $0x158] sm:$0xf]
      %v531 = vld [vmem:[%s472 + $0x15c] sm:$0xff]
      %v532 = vld [vmem:[%s472 + $0x164] sm:$0xf]
      %v533 = vld [vmem:[%s472 + $0x168] sm:$0xff]
      %v534 = vld [vmem:[%s472 + $0x170] sm:$0xf]
      %v535 = vld [vmem:[%s472 + $0x174] sm:$0xff]
      %v536 = vld [vmem:[%s472 + $0x17c] sm:$0xf]
      %v545 = vunpack.c.l.b16 %v464
      %v546 = vunpack.c.h.b16 %v464
      %v547 = vunpack.c.l.b16 %v465
      %v548 = vunpack.c.h.b16 %v465
      %v549 = vunpack.c.l.b16 %v466
      %v550 = vunpack.c.h.b16 %v466
      %v551 = vunpack.c.l.b16 %v467
      %v552 = vunpack.c.h.b16 %v467
      %v553 = vunpack.c.l.b16 %v468
      %v554 = vunpack.c.h.b16 %v468
      %v555 = vunpack.c.l.b16 %v469
      %v556 = vunpack.c.h.b16 %v469
      %v557 = vunpack.c.l.b16 %v470
      %v558 = vunpack.c.h.b16 %v470
      %v559 = vunpack.c.l.b16 %v471
      %v560 = vunpack.c.h.b16 %v471
      %v561 = vpack.c.b16 %v547, %v545
      %v562 = vpack.c.b16 %v548, %v546
      %v563 = vpack.c.b16 %v551, %v549
      %v564 = vpack.c.b16 %v552, %v550
      %v565 = vpack.c.b16 %v555, %v553
      %v566 = vpack.c.b16 %v556, %v554
      %v567 = vpack.c.b16 %v559, %v557
      %v568 = vpack.c.b16 %v560, %v558
      %v641 = vunpack.c.l.b16 %v473
      %v642 = vunpack.c.h.b16 %v473
      %v643 = vunpack.c.l.b16 %v474
      %v644 = vunpack.c.l.b16 %v475
      %v645 = vunpack.c.h.b16 %v475
      %v646 = vunpack.c.l.b16 %v476
      %v647 = vunpack.c.l.b16 %v477
      %v648 = vunpack.c.h.b16 %v477
      %v649 = vunpack.c.l.b16 %v478
      %v650 = vunpack.c.l.b16 %v479
      %v651 = vunpack.c.h.b16 %v479
      %v652 = vunpack.c.l.b16 %v480
      %v653 = vunpack.c.l.b16 %v481
      %v654 = vunpack.c.h.b16 %v481
      %v655 = vunpack.c.l.b16 %v482
      %v656 = vunpack.c.l.b16 %v483
      %v657 = vunpack.c.h.b16 %v483
      %v658 = vunpack.c.l.b16 %v484
      %v659 = vunpack.c.l.b16 %v485
      %v660 = vunpack.c.h.b16 %v485
      %v661 = vunpack.c.l.b16 %v486
      %v662 = vunpack.c.l.b16 %v487
      %v663 = vunpack.c.h.b16 %v487
      %v664 = vunpack.c.l.b16 %v488
      %v665 = vunpack.c.l.b16 %v489
      %v666 = vunpack.c.h.b16 %v489
      %v667 = vunpack.c.l.b16 %v490
      %v668 = vunpack.c.l.b16 %v491
      %v669 = vunpack.c.h.b16 %v491
      %v670 = vunpack.c.l.b16 %v492
      %v671 = vunpack.c.l.b16 %v493
      %v672 = vunpack.c.h.b16 %v493
      %v673 = vunpack.c.l.b16 %v494
      %v674 = vunpack.c.l.b16 %v495
      %v675 = vunpack.c.h.b16 %v495
      %v676 = vunpack.c.l.b16 %v496
      %v677 = vunpack.c.l.b16 %v497
      %v678 = vunpack.c.h.b16 %v497
      %v679 = vunpack.c.l.b16 %v498
      %v680 = vunpack.c.l.b16 %v499
      %v681 = vunpack.c.h.b16 %v499
      %v682 = vunpack.c.l.b16 %v500
      %v683 = vunpack.c.l.b16 %v501
      %v684 = vunpack.c.h.b16 %v501
      %v685 = vunpack.c.l.b16 %v502
      %v686 = vunpack.c.l.b16 %v503
      %v687 = vunpack.c.h.b16 %v503
      %v688 = vunpack.c.l.b16 %v504
      %v689 = vunpack.c.l.b16 %v505
      %v690 = vunpack.c.h.b16 %v505
      %v691 = vunpack.c.l.b16 %v506
      %v692 = vunpack.c.l.b16 %v507
      %v693 = vunpack.c.h.b16 %v507
      %v694 = vunpack.c.l.b16 %v508
      %v695 = vunpack.c.l.b16 %v509
      %v696 = vunpack.c.h.b16 %v509
      %v697 = vunpack.c.l.b16 %v510
      %v698 = vunpack.c.l.b16 %v511
      %v699 = vunpack.c.h.b16 %v511
      %v700 = vunpack.c.l.b16 %v512
      %v701 = vunpack.c.l.b16 %v513
      %v702 = vunpack.c.h.b16 %v513
      %v703 = vunpack.c.l.b16 %v514
      %v704 = vunpack.c.l.b16 %v515
      %v705 = vunpack.c.h.b16 %v515
      %v706 = vunpack.c.l.b16 %v516
      %v707 = vunpack.c.l.b16 %v517
      %v708 = vunpack.c.h.b16 %v517
      %v709 = vunpack.c.l.b16 %v518
      %v710 = vunpack.c.l.b16 %v519
      %v711 = vunpack.c.h.b16 %v519
      %v712 = vunpack.c.l.b16 %v520
      %v713 = vunpack.c.l.b16 %v521
      %v714 = vunpack.c.h.b16 %v521
      %v715 = vunpack.c.l.b16 %v522
      %v716 = vunpack.c.l.b16 %v523
      %v717 = vunpack.c.h.b16 %v523
      %v718 = vunpack.c.l.b16 %v524
      %v719 = vunpack.c.l.b16 %v525
      %v720 = vunpack.c.h.b16 %v525
      %v721 = vunpack.c.l.b16 %v526
      %v722 = vunpack.c.l.b16 %v527
      %v723 = vunpack.c.h.b16 %v527
      %v724 = vunpack.c.l.b16 %v528
      %v725 = vunpack.c.l.b16 %v529
      %v726 = vunpack.c.h.b16 %v529
      %v727 = vunpack.c.l.b16 %v530
      %v728 = vunpack.c.l.b16 %v531
      %v729 = vunpack.c.h.b16 %v531
      %v730 = vunpack.c.l.b16 %v532
      %v731 = vunpack.c.l.b16 %v533
      %v732 = vunpack.c.h.b16 %v533
      %v733 = vunpack.c.l.b16 %v534
      %v734 = vunpack.c.l.b16 %v535
      %v735 = vunpack.c.h.b16 %v535
      %v736 = vunpack.c.l.b16 %v536
      %v737 = vpack.c.b16 %v644, %v641
      %v738 = vpack.c.b16 %v645, %v642
      %v739 = vpack.c.b16 %v646, %v643
      %v740 = vpack.c.b16 %v650, %v647
      %v741 = vpack.c.b16 %v651, %v648
      %v742 = vpack.c.b16 %v652, %v649
      %v743 = vpack.c.b16 %v656, %v653
      %v744 = vpack.c.b16 %v657, %v654
      %v745 = vpack.c.b16 %v658, %v655
      %v746 = vpack.c.b16 %v662, %v659
      %v747 = vpack.c.b16 %v663, %v660
      %v748 = vpack.c.b16 %v664, %v661
      %v749 = vpack.c.b16 %v668, %v665
      %v750 = vpack.c.b16 %v669, %v666
      %v751 = vpack.c.b16 %v670, %v667
      %v752 = vpack.c.b16 %v674, %v671
      %v753 = vpack.c.b16 %v675, %v672
      %v754 = vpack.c.b16 %v676, %v673
      %v755 = vpack.c.b16 %v680, %v677
      %v756 = vpack.c.b16 %v681, %v678
      %v757 = vpack.c.b16 %v682, %v679
      %v758 = vpack.c.b16 %v686, %v683
      %v759 = vpack.c.b16 %v687, %v684
      %v760 = vpack.c.b16 %v688, %v685
      %v761 = vpack.c.b16 %v692, %v689
      %v762 = vpack.c.b16 %v693, %v690
      %v763 = vpack.c.b16 %v694, %v691
      %v764 = vpack.c.b16 %v698, %v695
      %v765 = vpack.c.b16 %v699, %v696
      %v766 = vpack.c.b16 %v700, %v697
      %v767 = vpack.c.b16 %v704, %v701
      %v768 = vpack.c.b16 %v705, %v702
      %v769 = vpack.c.b16 %v706, %v703
      %v770 = vpack.c.b16 %v710, %v707
      %v771 = vpack.c.b16 %v711, %v708
      %v772 = vpack.c.b16 %v712, %v709
      %v773 = vpack.c.b16 %v716, %v713
      %v774 = vpack.c.b16 %v717, %v714
      %v775 = vpack.c.b16 %v718, %v715
      %v776 = vpack.c.b16 %v722, %v719
      %v777 = vpack.c.b16 %v723, %v720
      %v778 = vpack.c.b16 %v724, %v721
      %v779 = vpack.c.b16 %v728, %v725
      %v780 = vpack.c.b16 %v729, %v726
      %v781 = vpack.c.b16 %v730, %v727
      %v782 = vpack.c.b16 %v734, %v731
      %v783 = vpack.c.b16 %v735, %v732
      %v784 = vpack.c.b16 %v736, %v733
      %833 = vmatpush.bf16.msra.mxu0 %v758
      %834 = vmatpush.bf16.msra.mxu0 %v755
      %835 = vmatpush.bf16.msra.mxu0 %v752
      %836 = vmatpush.bf16.msra.mxu0 %v749
      %837 = vmatpush.bf16.msra.mxu0 %v746
      %838 = vmatpush.bf16.msra.mxu0 %v743
      %839 = vmatpush.bf16.msra.mxu0 %v740
      %840 = vmatpush.bf16.msra.mxu0 %v737
      %841 = vmatmul.bf16.gmra.mxu0 %v561
      %v842 = vpop.f32.mrf.mxu0
      %v843 = vadd.f32 0.0, %v842
      %v844 = vpop.f32.mrf.mxu0
      %v845 = vadd.f32 0.0, %v844
      %846 = vmatmul.bf16.gmra.mxu0 %v563
      %v847 = vpop.f32.mrf.mxu0
      %v848 = vadd.f32 0.0, %v847
      %v849 = vpop.f32.mrf.mxu0
      %v850 = vadd.f32 0.0, %v849
      %851 = vmatmul.bf16.gmra.mxu0 %v565
      %v852 = vpop.f32.mrf.mxu0
      %v853 = vadd.f32 0.0, %v852
      %v854 = vpop.f32.mrf.mxu0
      %v855 = vadd.f32 0.0, %v854
      %856 = vmatmul.bf16.gmra.mxu0 %v567
      %v857 = vpop.f32.mrf.mxu0
      %v858 = vadd.f32 0.0, %v857
      %v859 = vpop.f32.mrf.mxu0
      %v860 = vadd.f32 0.0, %v859
      %861 = vdwg.mxu0
      %862 = vmatpush.bf16.msra.mxu0 %v782
      %863 = vmatpush.bf16.msra.mxu0 %v779
      %864 = vmatpush.bf16.msra.mxu0 %v776
      %865 = vmatpush.bf16.msra.mxu0 %v773
      %866 = vmatpush.bf16.msra.mxu0 %v770
      %867 = vmatpush.bf16.msra.mxu0 %v767
      %868 = vmatpush.bf16.msra.mxu0 %v764
      %869 = vmatpush.bf16.msra.mxu0 %v761
      %870 = vmatmul.bf16.gmra.mxu0 %v562
      %v871 = vpop.f32.mrf.mxu0
      %v872 = vadd.f32 %v843, %v871
      %v873 = vpop.f32.mrf.mxu0
      %v874 = vadd.f32 %v845, %v873
      %875 = vmatmul.bf16.gmra.mxu0 %v564
      %v876 = vpop.f32.mrf.mxu0
      %v877 = vadd.f32 %v848, %v876
      %v878 = vpop.f32.mrf.mxu0
      %v879 = vadd.f32 %v850, %v878
      %880 = vmatmul.bf16.gmra.mxu0 %v566
      %v881 = vpop.f32.mrf.mxu0
      %v882 = vadd.f32 %v853, %v881
      %v883 = vpop.f32.mrf.mxu0
      %v884 = vadd.f32 %v855, %v883
      %885 = vmatmul.bf16.gmra.mxu0 %v568
      %v886 = vpop.f32.mrf.mxu0
      %v887 = vadd.f32 %v858, %v886
      %v888 = vpop.f32.mrf.mxu0
      %v889 = vadd.f32 %v860, %v888
      %890 = vdwg.mxu0
      %891 = vmatpush.bf16.msra.mxu0 %v759
      %892 = vmatpush.bf16.msra.mxu0 %v756
      %893 = vmatpush.bf16.msra.mxu0 %v753
      %894 = vmatpush.bf16.msra.mxu0 %v750
      %895 = vmatpush.bf16.msra.mxu0 %v747
      %896 = vmatpush.bf16.msra.mxu0 %v744
      %897 = vmatpush.bf16.msra.mxu0 %v741
      %898 = vmatpush.bf16.msra.mxu0 %v738
      %899 = vmatmul.bf16.gmra.mxu0 %v561
      %v900 = vpop.f32.mrf.mxu0
      %v901 = vadd.f32 0.0, %v900
      %v902 = vpop.f32.mrf.mxu0
      %v903 = vadd.f32 0.0, %v902
      %904 = vmatmul.bf16.gmra.mxu0 %v563
      %v905 = vpop.f32.mrf.mxu0
      %v906 = vadd.f32 0.0, %v905
      %v907 = vpop.f32.mrf.mxu0
      %v908 = vadd.f32 0.0, %v907
      %909 = vmatmul.bf16.gmra.mxu0 %v565
      %v910 = vpop.f32.mrf.mxu0
      %v911 = vadd.f32 0.0, %v910
      %v912 = vpop.f32.mrf.mxu0
      %v913 = vadd.f32 0.0, %v912
      %914 = vmatmul.bf16.gmra.mxu0 %v567
      %v915 = vpop.f32.mrf.mxu0
      %v916 = vadd.f32 0.0, %v915
      %v917 = vpop.f32.mrf.mxu0
      %v918 = vadd.f32 0.0, %v917
      %919 = vdwg.mxu0
      %920 = vmatpush.bf16.msra.mxu0 %v783
      %921 = vmatpush.bf16.msra.mxu0 %v780
      %922 = vmatpush.bf16.msra.mxu0 %v777
      %923 = vmatpush.bf16.msra.mxu0 %v774
      %924 = vmatpush.bf16.msra.mxu0 %v771
      %925 = vmatpush.bf16.msra.mxu0 %v768
      %926 = vmatpush.bf16.msra.mxu0 %v765
      %927 = vmatpush.bf16.msra.mxu0 %v762
      %928 = vmatmul.bf16.gmra.mxu0 %v562
      %v929 = vpop.f32.mrf.mxu0
      %v930 = vadd.f32 %v901, %v929
      %v931 = vpop.f32.mrf.mxu0
      %v932 = vadd.f32 %v903, %v931
      %933 = vmatmul.bf16.gmra.mxu0 %v564
      %v934 = vpop.f32.mrf.mxu0
      %v935 = vadd.f32 %v906, %v934
      %v936 = vpop.f32.mrf.mxu0
      %v937 = vadd.f32 %v908, %v936
      %938 = vmatmul.bf16.gmra.mxu0 %v566
      %v939 = vpop.f32.mrf.mxu0
      %v940 = vadd.f32 %v911, %v939
      %v941 = vpop.f32.mrf.mxu0
      %v942 = vadd.f32 %v913, %v941
      %943 = vmatmul.bf16.gmra.mxu0 %v568
      %v944 = vpop.f32.mrf.mxu0
      %v945 = vadd.f32 %v916, %v944
      %v946 = vpop.f32.mrf.mxu0
      %v947 = vadd.f32 %v918, %v946
      %948 = vdwg.mxu0
      %949 = vmatpush.bf16.msra.mxu0 %v760
      %950 = vmatpush.bf16.msra.mxu0 %v757
      %951 = vmatpush.bf16.msra.mxu0 %v754
      %952 = vmatpush.bf16.msra.mxu0 %v751
      %953 = vmatpush.bf16.msra.mxu0 %v748
      %954 = vmatpush.bf16.msra.mxu0 %v745
      %955 = vmatpush.bf16.msra.mxu0 %v742
      %956 = vmatpush.bf16.msra.mxu0 %v739
      %957 = vmatmul.bf16.gmra.mxu0 %v561
      %v958 = vpop.f32.mrf.mxu0
      %v959 = vadd.f32 0.0, %v958
      %v960 = vpop.f32.mrf.mxu0
      %v961 = vadd.f32 0.0, %v960
      %962 = vmatmul.bf16.gmra.mxu0 %v563
      %v963 = vpop.f32.mrf.mxu0
      %v964 = vadd.f32 0.0, %v963
      %v965 = vpop.f32.mrf.mxu0
      %v966 = vadd.f32 0.0, %v965
      %967 = vmatmul.bf16.gmra.mxu0 %v565
      %v968 = vpop.f32.mrf.mxu0
      %v969 = vadd.f32 0.0, %v968
      %v970 = vpop.f32.mrf.mxu0
      %v971 = vadd.f32 0.0, %v970
      %972 = vmatmul.bf16.gmra.mxu0 %v567
      %v973 = vpop.f32.mrf.mxu0
      %v974 = vadd.f32 0.0, %v973
      %v975 = vpop.f32.mrf.mxu0
      %v976 = vadd.f32 0.0, %v975
      %977 = vdwg.mxu0
      %978 = vmatpush.bf16.msra.mxu0 %v784
      %979 = vmatpush.bf16.msra.mxu0 %v781
      %980 = vmatpush.bf16.msra.mxu0 %v778
      %981 = vmatpush.bf16.msra.mxu0 %v775
      %982 = vmatpush.bf16.msra.mxu0 %v772
      %983 = vmatpush.bf16.msra.mxu0 %v769
      %984 = vmatpush.bf16.msra.mxu0 %v766
      %985 = vmatpush.bf16.msra.mxu0 %v763
      %986 = vmatmul.bf16.gmra.mxu0 %v562
      %v987 = vpop.f32.mrf.mxu0
      %v988 = vadd.f32 %v959, %v987
      %v989 = vpop.f32.mrf.mxu0
      %v990 = vadd.f32 %v961, %v989
      %991 = vmatmul.bf16.gmra.mxu0 %v564
      %v992 = vpop.f32.mrf.mxu0
      %v993 = vadd.f32 %v964, %v992
      %v994 = vpop.f32.mrf.mxu0
      %v995 = vadd.f32 %v966, %v994
      %996 = vmatmul.bf16.gmra.mxu0 %v566
      %v997 = vpop.f32.mrf.mxu0
      %v998 = vadd.f32 %v969, %v997
      %v999 = vpop.f32.mrf.mxu0
      %v1000 = vadd.f32 %v971, %v999
      %1001 = vmatmul.bf16.gmra.mxu0 %v568
      %v1002 = vpop.f32.mrf.mxu0
      %v1003 = vadd.f32 %v974, %v1002
      %v1004 = vpop.f32.mrf.mxu0
      %v1005 = vadd.f32 %v976, %v1004
      %1006 = vdwg.mxu0
      %v1015 = vunpack.c.l.b16 %v392
      %v1016 = vunpack.c.h.b16 %v392
      %v1017 = vunpack.c.l.b16 %v393
      %v1018 = vunpack.c.h.b16 %v393
      %v1019 = vunpack.c.l.b16 %v394
      %v1020 = vunpack.c.h.b16 %v394
      %v1021 = vunpack.c.l.b16 %v395
      %v1022 = vunpack.c.h.b16 %v395
      %v1023 = vunpack.c.l.b16 %v396
      %v1024 = vunpack.c.h.b16 %v396
      %v1025 = vunpack.c.l.b16 %v397
      %v1026 = vunpack.c.h.b16 %v397
      %v1027 = vunpack.c.l.b16 %v398
      %v1028 = vunpack.c.h.b16 %v398
      %v1029 = vunpack.c.l.b16 %v399
      %v1030 = vunpack.c.h.b16 %v399
      %v1031 = vpack.c.b16 %v1017, %v1015
      %v1032 = vpack.c.b16 %v1018, %v1016
      %v1033 = vpack.c.b16 %v1021, %v1019
      %v1034 = vpack.c.b16 %v1022, %v1020
      %v1035 = vpack.c.b16 %v1025, %v1023
      %v1036 = vpack.c.b16 %v1026, %v1024
      %v1037 = vpack.c.b16 %v1029, %v1027
      %v1038 = vpack.c.b16 %v1030, %v1028
      %v1111 = vunpack.c.l.b16 %v400
      %v1112 = vunpack.c.h.b16 %v400
      %v1113 = vunpack.c.l.b16 %v401
      %v1114 = vunpack.c.l.b16 %v402
      %v1115 = vunpack.c.h.b16 %v402
      %v1116 = vunpack.c.l.b16 %v403
      %v1117 = vunpack.c.l.b16 %v404
      %v1118 = vunpack.c.h.b16 %v404
      %v1119 = vunpack.c.l.b16 %v405
      %v1120 = vunpack.c.l.b16 %v406
      %v1121 = vunpack.c.h.b16 %v406
      %v1122 = vunpack.c.l.b16 %v407
      %v1123 = vunpack.c.l.b16 %v408
      %v1124 = vunpack.c.h.b16 %v408
      %v1125 = vunpack.c.l.b16 %v409
      %v1126 = vunpack.c.l.b16 %v410
      %v1127 = vunpack.c.h.b16 %v410
      %v1128 = vunpack.c.l.b16 %v411
      %v1129 = vunpack.c.l.b16 %v412
      %v1130 = vunpack.c.h.b16 %v412
      %v1131 = vunpack.c.l.b16 %v413
      %v1132 = vunpack.c.l.b16 %v414
      %v1133 = vunpack.c.h.b16 %v414
      %v1134 = vunpack.c.l.b16 %v415
      %v1135 = vunpack.c.l.b16 %v416
      %v1136 = vunpack.c.h.b16 %v416
      %v1137 = vunpack.c.l.b16 %v417
      %v1138 = vunpack.c.l.b16 %v418
      %v1139 = vunpack.c.h.b16 %v418
      %v1140 = vunpack.c.l.b16 %v419
      %v1141 = vunpack.c.l.b16 %v420
      %v1142 = vunpack.c.h.b16 %v420
      %v1143 = vunpack.c.l.b16 %v421
      %v1144 = vunpack.c.l.b16 %v422
      %v1145 = vunpack.c.h.b16 %v422
      %v1146 = vunpack.c.l.b16 %v423
      %v1147 = vunpack.c.l.b16 %v424
      %v1148 = vunpack.c.h.b16 %v424
      %v1149 = vunpack.c.l.b16 %v425
      %v1150 = vunpack.c.l.b16 %v426
      %v1151 = vunpack.c.h.b16 %v426
      %v1152 = vunpack.c.l.b16 %v427
      %v1153 = vunpack.c.l.b16 %v428
      %v1154 = vunpack.c.h.b16 %v428
      %v1155 = vunpack.c.l.b16 %v429
      %v1156 = vunpack.c.l.b16 %v430
      %v1157 = vunpack.c.h.b16 %v430
      %v1158 = vunpack.c.l.b16 %v431
      %v1159 = vunpack.c.l.b16 %v432
      %v1160 = vunpack.c.h.b16 %v432
      %v1161 = vunpack.c.l.b16 %v433
      %v1162 = vunpack.c.l.b16 %v434
      %v1163 = vunpack.c.h.b16 %v434
      %v1164 = vunpack.c.l.b16 %v435
      %v1165 = vunpack.c.l.b16 %v436
      %v1166 = vunpack.c.h.b16 %v436
      %v1167 = vunpack.c.l.b16 %v437
      %v1168 = vunpack.c.l.b16 %v438
      %v1169 = vunpack.c.h.b16 %v438
      %v1170 = vunpack.c.l.b16 %v439
      %v1171 = vunpack.c.l.b16 %v440
      %v1172 = vunpack.c.h.b16 %v440
      %v1173 = vunpack.c.l.b16 %v441
      %v1174 = vunpack.c.l.b16 %v442
      %v1175 = vunpack.c.h.b16 %v442
      %v1176 = vunpack.c.l.b16 %v443
      %v1177 = vunpack.c.l.b16 %v444
      %v1178 = vunpack.c.h.b16 %v444
      %v1179 = vunpack.c.l.b16 %v445
      %v1180 = vunpack.c.l.b16 %v446
      %v1181 = vunpack.c.h.b16 %v446
      %v1182 = vunpack.c.l.b16 %v447
      %v1183 = vunpack.c.l.b16 %v448
      %v1184 = vunpack.c.h.b16 %v448
      %v1185 = vunpack.c.l.b16 %v449
      %v1186 = vunpack.c.l.b16 %v450
      %v1187 = vunpack.c.h.b16 %v450
      %v1188 = vunpack.c.l.b16 %v451
      %v1189 = vunpack.c.l.b16 %v452
      %v1190 = vunpack.c.h.b16 %v452
      %v1191 = vunpack.c.l.b16 %v453
      %v1192 = vunpack.c.l.b16 %v454
      %v1193 = vunpack.c.h.b16 %v454
      %v1194 = vunpack.c.l.b16 %v455
      %v1195 = vunpack.c.l.b16 %v456
      %v1196 = vunpack.c.h.b16 %v456
      %v1197 = vunpack.c.l.b16 %v457
      %v1198 = vunpack.c.l.b16 %v458
      %v1199 = vunpack.c.h.b16 %v458
      %v1200 = vunpack.c.l.b16 %v459
      %v1201 = vunpack.c.l.b16 %v460
      %v1202 = vunpack.c.h.b16 %v460
      %v1203 = vunpack.c.l.b16 %v461
      %v1204 = vunpack.c.l.b16 %v462
      %v1205 = vunpack.c.h.b16 %v462
      %v1206 = vunpack.c.l.b16 %v463
      %v1207 = vpack.c.b16 %v1114, %v1111
      %v1208 = vpack.c.b16 %v1115, %v1112
      %v1209 = vpack.c.b16 %v1116, %v1113
      %v1210 = vpack.c.b16 %v1120, %v1117
      %v1211 = vpack.c.b16 %v1121, %v1118
      %v1212 = vpack.c.b16 %v1122, %v1119
      %v1213 = vpack.c.b16 %v1126, %v1123
      %v1214 = vpack.c.b16 %v1127, %v1124
      %v1215 = vpack.c.b16 %v1128, %v1125
      %v1216 = vpack.c.b16 %v1132, %v1129
      %v1217 = vpack.c.b16 %v1133, %v1130
      %v1218 = vpack.c.b16 %v1134, %v1131
      %v1219 = vpack.c.b16 %v1138, %v1135
      %v1220 = vpack.c.b16 %v1139, %v1136
      %v1221 = vpack.c.b16 %v1140, %v1137
      %v1222 = vpack.c.b16 %v1144, %v1141
      %v1223 = vpack.c.b16 %v1145, %v1142
      %v1224 = vpack.c.b16 %v1146, %v1143
      %v1225 = vpack.c.b16 %v1150, %v1147
      %v1226 = vpack.c.b16 %v1151, %v1148
      %v1227 = vpack.c.b16 %v1152, %v1149
      %v1228 = vpack.c.b16 %v1156, %v1153
      %v1229 = vpack.c.b16 %v1157, %v1154
      %v1230 = vpack.c.b16 %v1158, %v1155
      %v1231 = vpack.c.b16 %v1162, %v1159
      %v1232 = vpack.c.b16 %v1163, %v1160
      %v1233 = vpack.c.b16 %v1164, %v1161
      %v1234 = vpack.c.b16 %v1168, %v1165
      %v1235 = vpack.c.b16 %v1169, %v1166
      %v1236 = vpack.c.b16 %v1170, %v1167
      %v1237 = vpack.c.b16 %v1174, %v1171
      %v1238 = vpack.c.b16 %v1175, %v1172
      %v1239 = vpack.c.b16 %v1176, %v1173
      %v1240 = vpack.c.b16 %v1180, %v1177
      %v1241 = vpack.c.b16 %v1181, %v1178
      %v1242 = vpack.c.b16 %v1182, %v1179
      %v1243 = vpack.c.b16 %v1186, %v1183
      %v1244 = vpack.c.b16 %v1187, %v1184
      %v1245 = vpack.c.b16 %v1188, %v1185
      %v1246 = vpack.c.b16 %v1192, %v1189
      %v1247 = vpack.c.b16 %v1193, %v1190
      %v1248 = vpack.c.b16 %v1194, %v1191
      %v1249 = vpack.c.b16 %v1198, %v1195
      %v1250 = vpack.c.b16 %v1199, %v1196
      %v1251 = vpack.c.b16 %v1200, %v1197
      %v1252 = vpack.c.b16 %v1204, %v1201
      %v1253 = vpack.c.b16 %v1205, %v1202
      %v1254 = vpack.c.b16 %v1206, %v1203
      %1303 = vmatpush.bf16.msra.mxu0 %v1228
      %1304 = vmatpush.bf16.msra.mxu0 %v1225
      %1305 = vmatpush.bf16.msra.mxu0 %v1222
      %1306 = vmatpush.bf16.msra.mxu0 %v1219
      %1307 = vmatpush.bf16.msra.mxu0 %v1216
      %1308 = vmatpush.bf16.msra.mxu0 %v1213
      %1309 = vmatpush.bf16.msra.mxu0 %v1210
      %1310 = vmatpush.bf16.msra.mxu0 %v1207
      %1311 = vmatmul.bf16.gmra.mxu0 %v1031
      %v1312 = vpop.f32.mrf.mxu0
      %v1313 = vadd.f32 %v872, %v1312
      %v1314 = vpop.f32.mrf.mxu0
      %v1315 = vadd.f32 %v874, %v1314
      %1316 = vmatmul.bf16.gmra.mxu0 %v1033
      %v1317 = vpop.f32.mrf.mxu0
      %v1318 = vadd.f32 %v877, %v1317
      %v1319 = vpop.f32.mrf.mxu0
      %v1320 = vadd.f32 %v879, %v1319
      %1321 = vmatmul.bf16.gmra.mxu0 %v1035
      %v1322 = vpop.f32.mrf.mxu0
      %v1323 = vadd.f32 %v882, %v1322
      %v1324 = vpop.f32.mrf.mxu0
      %v1325 = vadd.f32 %v884, %v1324
      %1326 = vmatmul.bf16.gmra.mxu0 %v1037
      %v1327 = vpop.f32.mrf.mxu0
      %v1328 = vadd.f32 %v887, %v1327
      %v1329 = vpop.f32.mrf.mxu0
      %v1330 = vadd.f32 %v889, %v1329
      %1331 = vdwg.mxu0
      %1332 = vmatpush.bf16.msra.mxu0 %v1252
      %1333 = vmatpush.bf16.msra.mxu0 %v1249
      %1334 = vmatpush.bf16.msra.mxu0 %v1246
      %1335 = vmatpush.bf16.msra.mxu0 %v1243
      %1336 = vmatpush.bf16.msra.mxu0 %v1240
      %1337 = vmatpush.bf16.msra.mxu0 %v1237
      %1338 = vmatpush.bf16.msra.mxu0 %v1234
      %1339 = vmatpush.bf16.msra.mxu0 %v1231
      %1340 = vmatmul.bf16.gmra.mxu0 %v1032
      %v1341 = vpop.f32.mrf.mxu0
      %v1342 = vadd.f32 %v1313, %v1341
      %v1343 = vpop.f32.mrf.mxu0
      %v1344 = vadd.f32 %v1315, %v1343
      %1345 = vmatmul.bf16.gmra.mxu0 %v1034
      %v1346 = vpop.f32.mrf.mxu0
      %v1347 = vadd.f32 %v1318, %v1346
      %v1348 = vpop.f32.mrf.mxu0
      %v1349 = vadd.f32 %v1320, %v1348
      %1350 = vmatmul.bf16.gmra.mxu0 %v1036
      %v1351 = vpop.f32.mrf.mxu0
      %v1352 = vadd.f32 %v1323, %v1351
      %v1353 = vpop.f32.mrf.mxu0
      %v1354 = vadd.f32 %v1325, %v1353
      %1355 = vmatmul.bf16.gmra.mxu0 %v1038
      %v1356 = vpop.f32.mrf.mxu0
      %v1357 = vadd.f32 %v1328, %v1356
      %v1358 = vpop.f32.mrf.mxu0
      %v1359 = vadd.f32 %v1330, %v1358
      %1360 = vdwg.mxu0
      %1361 = vmatpush.bf16.msra.mxu0 %v1229
      %1362 = vmatpush.bf16.msra.mxu0 %v1226
      %1363 = vmatpush.bf16.msra.mxu0 %v1223
      %1364 = vmatpush.bf16.msra.mxu0 %v1220
      %1365 = vmatpush.bf16.msra.mxu0 %v1217
      %1366 = vmatpush.bf16.msra.mxu0 %v1214
      %1367 = vmatpush.bf16.msra.mxu0 %v1211
      %1368 = vmatpush.bf16.msra.mxu0 %v1208
      %1369 = vmatmul.bf16.gmra.mxu0 %v1031
      %v1370 = vpop.f32.mrf.mxu0
      %v1371 = vadd.f32 %v930, %v1370
      %v1372 = vpop.f32.mrf.mxu0
      %v1373 = vadd.f32 %v932, %v1372
      %1374 = vmatmul.bf16.gmra.mxu0 %v1033
      %v1375 = vpop.f32.mrf.mxu0
      %v1376 = vadd.f32 %v935, %v1375
      %v1377 = vpop.f32.mrf.mxu0
      %v1378 = vadd.f32 %v937, %v1377
      %1379 = vmatmul.bf16.gmra.mxu0 %v1035
      %v1380 = vpop.f32.mrf.mxu0
      %v1381 = vadd.f32 %v940, %v1380
      %v1382 = vpop.f32.mrf.mxu0
      %v1383 = vadd.f32 %v942, %v1382
      %1384 = vmatmul.bf16.gmra.mxu0 %v1037
      %v1385 = vpop.f32.mrf.mxu0
      %v1386 = vadd.f32 %v945, %v1385
      %v1387 = vpop.f32.mrf.mxu0
      %v1388 = vadd.f32 %v947, %v1387
      %1389 = vdwg.mxu0
      %1390 = vmatpush.bf16.msra.mxu0 %v1253
      %1391 = vmatpush.bf16.msra.mxu0 %v1250
      %1392 = vmatpush.bf16.msra.mxu0 %v1247
      %1393 = vmatpush.bf16.msra.mxu0 %v1244
      %1394 = vmatpush.bf16.msra.mxu0 %v1241
      %1395 = vmatpush.bf16.msra.mxu0 %v1238
      %1396 = vmatpush.bf16.msra.mxu0 %v1235
      %1397 = vmatpush.bf16.msra.mxu0 %v1232
      %1398 = vmatmul.bf16.gmra.mxu0 %v1032
      %v1399 = vpop.f32.mrf.mxu0
      %v1400 = vadd.f32 %v1371, %v1399
      %v1401 = vpop.f32.mrf.mxu0
      %v1402 = vadd.f32 %v1373, %v1401
      %1403 = vmatmul.bf16.gmra.mxu0 %v1034
      %v1404 = vpop.f32.mrf.mxu0
      %v1405 = vadd.f32 %v1376, %v1404
      %v1406 = vpop.f32.mrf.mxu0
      %v1407 = vadd.f32 %v1378, %v1406
      %1408 = vmatmul.bf16.gmra.mxu0 %v1036
      %v1409 = vpop.f32.mrf.mxu0
      %v1410 = vadd.f32 %v1381, %v1409
      %v1411 = vpop.f32.mrf.mxu0
      %v1412 = vadd.f32 %v1383, %v1411
      %1413 = vmatmul.bf16.gmra.mxu0 %v1038
      %v1414 = vpop.f32.mrf.mxu0
      %v1415 = vadd.f32 %v1386, %v1414
      %v1416 = vpop.f32.mrf.mxu0
      %v1417 = vadd.f32 %v1388, %v1416
      %1418 = vdwg.mxu0
      %1419 = vmatpush.bf16.msra.mxu0 %v1230
      %1420 = vmatpush.bf16.msra.mxu0 %v1227
      %1421 = vmatpush.bf16.msra.mxu0 %v1224
      %1422 = vmatpush.bf16.msra.mxu0 %v1221
      %1423 = vmatpush.bf16.msra.mxu0 %v1218
      %1424 = vmatpush.bf16.msra.mxu0 %v1215
      %1425 = vmatpush.bf16.msra.mxu0 %v1212
      %1426 = vmatpush.bf16.msra.mxu0 %v1209
      %1427 = vmatmul.bf16.gmra.mxu0 %v1031
      %v1428 = vpop.f32.mrf.mxu0
      %v1429 = vadd.f32 %v988, %v1428
      %v1430 = vpop.f32.mrf.mxu0
      %v1431 = vadd.f32 %v990, %v1430
      %1432 = vmatmul.bf16.gmra.mxu0 %v1033
      %v1433 = vpop.f32.mrf.mxu0
      %v1434 = vadd.f32 %v993, %v1433
      %v1435 = vpop.f32.mrf.mxu0
      %v1436 = vadd.f32 %v995, %v1435
      %1437 = vmatmul.bf16.gmra.mxu0 %v1035
      %v1438 = vpop.f32.mrf.mxu0
      %v1439 = vadd.f32 %v998, %v1438
      %v1440 = vpop.f32.mrf.mxu0
      %v1441 = vadd.f32 %v1000, %v1440
      %1442 = vmatmul.bf16.gmra.mxu0 %v1037
      %v1443 = vpop.f32.mrf.mxu0
      %v1444 = vadd.f32 %v1003, %v1443
      %v1445 = vpop.f32.mrf.mxu0
      %v1446 = vadd.f32 %v1005, %v1445
      %1447 = vdwg.mxu0
      %1448 = vmatpush.bf16.msra.mxu0 %v1254
      %1449 = vmatpush.bf16.msra.mxu0 %v1251
      %1450 = vmatpush.bf16.msra.mxu0 %v1248
      %1451 = vmatpush.bf16.msra.mxu0 %v1245
      %1452 = vmatpush.bf16.msra.mxu0 %v1242
      %1453 = vmatpush.bf16.msra.mxu0 %v1239
      %1454 = vmatpush.bf16.msra.mxu0 %v1236
      %1455 = vmatpush.bf16.msra.mxu0 %v1233
      %1456 = vmatmul.bf16.gmra.mxu0 %v1032
      %v1457 = vpop.f32.mrf.mxu0
      %v1458 = vadd.f32 %v1429, %v1457
      %v1459 = vpop.f32.mrf.mxu0
      %v1460 = vadd.f32 %v1431, %v1459
      %1461 = vmatmul.bf16.gmra.mxu0 %v1034
      %v1462 = vpop.f32.mrf.mxu0
      %v1463 = vadd.f32 %v1434, %v1462
      %v1464 = vpop.f32.mrf.mxu0
      %v1465 = vadd.f32 %v1436, %v1464
      %1466 = vmatmul.bf16.gmra.mxu0 %v1036
      %v1467 = vpop.f32.mrf.mxu0
      %v1468 = vadd.f32 %v1439, %v1467
      %v1469 = vpop.f32.mrf.mxu0
      %v1470 = vadd.f32 %v1441, %v1469
      %1471 = vmatmul.bf16.gmra.mxu0 %v1038
      %v1472 = vpop.f32.mrf.mxu0
      %v1473 = vadd.f32 %v1444, %v1472
      %v1474 = vpop.f32.mrf.mxu0
      %v1475 = vadd.f32 %v1446, %v1474
      %1476 = vdwg.mxu0
      %v1477 = vld [vmem:[%s386 + $0x8] sm:$0xff]
      %v1478 = vld [vmem:[%s386 + $0x10] sm:$0xff]
      %v1479 = vld [vmem:[%s386 + $0x18] sm:$0xff]
      %v1480 = vld [vmem:[%s386 + $0x20] sm:$0xff]
      %v1481 = vld [vmem:[%s386 + $0x28] sm:$0xff]
      %v1482 = vld [vmem:[%s386 + $0x30] sm:$0xff]
      %v1483 = vld [vmem:[%s386 + $0x38] sm:$0xff]
      %v1484 = vld [vmem:[%s386 + $0x40] sm:$0xff]
      %s1485 = scalar_lea.vmem %s1, 768
      %v1486 = vld [vmem:[%s1485] sm:$0xff]
      %v1487 = vld [vmem:[%s1485 + $0x8] sm:$0xf]
      %v1488 = vld [vmem:[%s1485 + $0xc] sm:$0xff]
      %v1489 = vld [vmem:[%s1485 + $0x14] sm:$0xf]
      %v1490 = vld [vmem:[%s1485 + $0x18] sm:$0xff]
      %v1491 = vld [vmem:[%s1485 + $0x20] sm:$0xf]
      %v1492 = vld [vmem:[%s1485 + $0x24] sm:$0xff]
      %v1493 = vld [vmem:[%s1485 + $0x2c] sm:$0xf]
      %v1494 = vld [vmem:[%s1485 + $0x30] sm:$0xff]
      %v1495 = vld [vmem:[%s1485 + $0x38] sm:$0xf]
      %v1496 = vld [vmem:[%s1485 + $0x3c] sm:$0xff]
      %v1497 = vld [vmem:[%s1485 + $0x44] sm:$0xf]
      %v1498 = vld [vmem:[%s1485 + $0x48] sm:$0xff]
      %v1499 = vld [vmem:[%s1485 + $0x50] sm:$0xf]
      %v1500 = vld [vmem:[%s1485 + $0x54] sm:$0xff]
      %v1501 = vld [vmem:[%s1485 + $0x5c] sm:$0xf]
      %v1502 = vld [vmem:[%s1485 + $0x60] sm:$0xff]
      %v1503 = vld [vmem:[%s1485 + $0x68] sm:$0xf]
      %v1504 = vld [vmem:[%s1485 + $0x6c] sm:$0xff]
      %v1505 = vld [vmem:[%s1485 + $0x74] sm:$0xf]
      %v1506 = vld [vmem:[%s1485 + $0x78] sm:$0xff]
      %v1507 = vld [vmem:[%s1485 + $0x80] sm:$0xf]
      %v1508 = vld [vmem:[%s1485 + $0x84] sm:$0xff]
      %v1509 = vld [vmem:[%s1485 + $0x8c] sm:$0xf]
      %v1510 = vld [vmem:[%s1485 + $0x90] sm:$0xff]
      %v1511 = vld [vmem:[%s1485 + $0x98] sm:$0xf]
      %v1512 = vld [vmem:[%s1485 + $0x9c] sm:$0xff]
      %v1513 = vld [vmem:[%s1485 + $0xa4] sm:$0xf]
      %v1514 = vld [vmem:[%s1485 + $0xa8] sm:$0xff]
      %v1515 = vld [vmem:[%s1485 + $0xb0] sm:$0xf]
      %v1516 = vld [vmem:[%s1485 + $0xb4] sm:$0xff]
      %v1517 = vld [vmem:[%s1485 + $0xbc] sm:$0xf]
      %v1518 = vld [vmem:[%s1485 + $0xc0] sm:$0xff]
      %v1519 = vld [vmem:[%s1485 + $0xc8] sm:$0xf]
      %v1520 = vld [vmem:[%s1485 + $0xcc] sm:$0xff]
      %v1521 = vld [vmem:[%s1485 + $0xd4] sm:$0xf]
      %v1522 = vld [vmem:[%s1485 + $0xd8] sm:$0xff]
      %v1523 = vld [vmem:[%s1485 + $0xe0] sm:$0xf]
      %v1524 = vld [vmem:[%s1485 + $0xe4] sm:$0xff]
      %v1525 = vld [vmem:[%s1485 + $0xec] sm:$0xf]
      %v1526 = vld [vmem:[%s1485 + $0xf0] sm:$0xff]
      %v1527 = vld [vmem:[%s1485 + $0xf8] sm:$0xf]
      %v1528 = vld [vmem:[%s1485 + $0xfc] sm:$0xff]
      %v1529 = vld [vmem:[%s1485 + $0x104] sm:$0xf]
      %v1530 = vld [vmem:[%s1485 + $0x108] sm:$0xff]
      %v1531 = vld [vmem:[%s1485 + $0x110] sm:$0xf]
      %v1532 = vld [vmem:[%s1485 + $0x114] sm:$0xff]
      %v1533 = vld [vmem:[%s1485 + $0x11c] sm:$0xf]
      %v1534 = vld [vmem:[%s1485 + $0x120] sm:$0xff]
      %v1535 = vld [vmem:[%s1485 + $0x128] sm:$0xf]
      %v1536 = vld [vmem:[%s1485 + $0x12c] sm:$0xff]
      %v1537 = vld [vmem:[%s1485 + $0x134] sm:$0xf]
      %v1538 = vld [vmem:[%s1485 + $0x138] sm:$0xff]
      %v1539 = vld [vmem:[%s1485 + $0x140] sm:$0xf]
      %v1540 = vld [vmem:[%s1485 + $0x144] sm:$0xff]
      %v1541 = vld [vmem:[%s1485 + $0x14c] sm:$0xf]
      %v1542 = vld [vmem:[%s1485 + $0x150] sm:$0xff]
      %v1543 = vld [vmem:[%s1485 + $0x158] sm:$0xf]
      %v1544 = vld [vmem:[%s1485 + $0x15c] sm:$0xff]
      %v1545 = vld [vmem:[%s1485 + $0x164] sm:$0xf]
      %v1546 = vld [vmem:[%s1485 + $0x168] sm:$0xff]
      %v1547 = vld [vmem:[%s1485 + $0x170] sm:$0xf]
      %v1548 = vld [vmem:[%s1485 + $0x174] sm:$0xff]
      %v1549 = vld [vmem:[%s1485 + $0x17c] sm:$0xf]
      %v1558 = vunpack.c.l.b16 %v1477
      %v1559 = vunpack.c.h.b16 %v1477
      %v1560 = vunpack.c.l.b16 %v1478
      %v1561 = vunpack.c.h.b16 %v1478
      %v1562 = vunpack.c.l.b16 %v1479
      %v1563 = vunpack.c.h.b16 %v1479
      %v1564 = vunpack.c.l.b16 %v1480
      %v1565 = vunpack.c.h.b16 %v1480
      %v1566 = vunpack.c.l.b16 %v1481
      %v1567 = vunpack.c.h.b16 %v1481
      %v1568 = vunpack.c.l.b16 %v1482
      %v1569 = vunpack.c.h.b16 %v1482
      %v1570 = vunpack.c.l.b16 %v1483
      %v1571 = vunpack.c.h.b16 %v1483
      %v1572 = vunpack.c.l.b16 %v1484
      %v1573 = vunpack.c.h.b16 %v1484
      %v1574 = vpack.c.b16 %v1560, %v1558
      %v1575 = vpack.c.b16 %v1561, %v1559
      %v1576 = vpack.c.b16 %v1564, %v1562
      %v1577 = vpack.c.b16 %v1565, %v1563
      %v1578 = vpack.c.b16 %v1568, %v1566
      %v1579 = vpack.c.b16 %v1569, %v1567
      %v1580 = vpack.c.b16 %v1572, %v1570
      %v1581 = vpack.c.b16 %v1573, %v1571
      %v1654 = vunpack.c.l.b16 %v1486
      %v1655 = vunpack.c.h.b16 %v1486
      %v1656 = vunpack.c.l.b16 %v1487
      %v1657 = vunpack.c.l.b16 %v1488
      %v1658 = vunpack.c.h.b16 %v1488
      %v1659 = vunpack.c.l.b16 %v1489
      %v1660 = vunpack.c.l.b16 %v1490
      %v1661 = vunpack.c.h.b16 %v1490
      %v1662 = vunpack.c.l.b16 %v1491
      %v1663 = vunpack.c.l.b16 %v1492
      %v1664 = vunpack.c.h.b16 %v1492
      %v1665 = vunpack.c.l.b16 %v1493
      %v1666 = vunpack.c.l.b16 %v1494
      %v1667 = vunpack.c.h.b16 %v1494
      %v1668 = vunpack.c.l.b16 %v1495
      %v1669 = vunpack.c.l.b16 %v1496
      %v1670 = vunpack.c.h.b16 %v1496
      %v1671 = vunpack.c.l.b16 %v1497
      %v1672 = vunpack.c.l.b16 %v1498
      %v1673 = vunpack.c.h.b16 %v1498
      %v1674 = vunpack.c.l.b16 %v1499
      %v1675 = vunpack.c.l.b16 %v1500
      %v1676 = vunpack.c.h.b16 %v1500
      %v1677 = vunpack.c.l.b16 %v1501
      %v1678 = vunpack.c.l.b16 %v1502
      %v1679 = vunpack.c.h.b16 %v1502
      %v1680 = vunpack.c.l.b16 %v1503
      %v1681 = vunpack.c.l.b16 %v1504
      %v1682 = vunpack.c.h.b16 %v1504
      %v1683 = vunpack.c.l.b16 %v1505
      %v1684 = vunpack.c.l.b16 %v1506
      %v1685 = vunpack.c.h.b16 %v1506
      %v1686 = vunpack.c.l.b16 %v1507
      %v1687 = vunpack.c.l.b16 %v1508
      %v1688 = vunpack.c.h.b16 %v1508
      %v1689 = vunpack.c.l.b16 %v1509
      %v1690 = vunpack.c.l.b16 %v1510
      %v1691 = vunpack.c.h.b16 %v1510
      %v1692 = vunpack.c.l.b16 %v1511
      %v1693 = vunpack.c.l.b16 %v1512
      %v1694 = vunpack.c.h.b16 %v1512
      %v1695 = vunpack.c.l.b16 %v1513
      %v1696 = vunpack.c.l.b16 %v1514
      %v1697 = vunpack.c.h.b16 %v1514
      %v1698 = vunpack.c.l.b16 %v1515
      %v1699 = vunpack.c.l.b16 %v1516
      %v1700 = vunpack.c.h.b16 %v1516
      %v1701 = vunpack.c.l.b16 %v1517
      %v1702 = vunpack.c.l.b16 %v1518
      %v1703 = vunpack.c.h.b16 %v1518
      %v1704 = vunpack.c.l.b16 %v1519
      %v1705 = vunpack.c.l.b16 %v1520
      %v1706 = vunpack.c.h.b16 %v1520
      %v1707 = vunpack.c.l.b16 %v1521
      %v1708 = vunpack.c.l.b16 %v1522
      %v1709 = vunpack.c.h.b16 %v1522
      %v1710 = vunpack.c.l.b16 %v1523
      %v1711 = vunpack.c.l.b16 %v1524
      %v1712 = vunpack.c.h.b16 %v1524
      %v1713 = vunpack.c.l.b16 %v1525
      %v1714 = vunpack.c.l.b16 %v1526
      %v1715 = vunpack.c.h.b16 %v1526
      %v1716 = vunpack.c.l.b16 %v1527
      %v1717 = vunpack.c.l.b16 %v1528
      %v1718 = vunpack.c.h.b16 %v1528
      %v1719 = vunpack.c.l.b16 %v1529
      %v1720 = vunpack.c.l.b16 %v1530
      %v1721 = vunpack.c.h.b16 %v1530
      %v1722 = vunpack.c.l.b16 %v1531
      %v1723 = vunpack.c.l.b16 %v1532
      %v1724 = vunpack.c.h.b16 %v1532
      %v1725 = vunpack.c.l.b16 %v1533
      %v1726 = vunpack.c.l.b16 %v1534
      %v1727 = vunpack.c.h.b16 %v1534
      %v1728 = vunpack.c.l.b16 %v1535
      %v1729 = vunpack.c.l.b16 %v1536
      %v1730 = vunpack.c.h.b16 %v1536
      %v1731 = vunpack.c.l.b16 %v1537
      %v1732 = vunpack.c.l.b16 %v1538
      %v1733 = vunpack.c.h.b16 %v1538
      %v1734 = vunpack.c.l.b16 %v1539
      %v1735 = vunpack.c.l.b16 %v1540
      %v1736 = vunpack.c.h.b16 %v1540
      %v1737 = vunpack.c.l.b16 %v1541
      %v1738 = vunpack.c.l.b16 %v1542
      %v1739 = vunpack.c.h.b16 %v1542
      %v1740 = vunpack.c.l.b16 %v1543
      %v1741 = vunpack.c.l.b16 %v1544
      %v1742 = vunpack.c.h.b16 %v1544
      %v1743 = vunpack.c.l.b16 %v1545
      %v1744 = vunpack.c.l.b16 %v1546
      %v1745 = vunpack.c.h.b16 %v1546
      %v1746 = vunpack.c.l.b16 %v1547
      %v1747 = vunpack.c.l.b16 %v1548
      %v1748 = vunpack.c.h.b16 %v1548
      %v1749 = vunpack.c.l.b16 %v1549
      %v1750 = vpack.c.b16 %v1657, %v1654
      %v1751 = vpack.c.b16 %v1658, %v1655
      %v1752 = vpack.c.b16 %v1659, %v1656
      %v1753 = vpack.c.b16 %v1663, %v1660
      %v1754 = vpack.c.b16 %v1664, %v1661
      %v1755 = vpack.c.b16 %v1665, %v1662
      %v1756 = vpack.c.b16 %v1669, %v1666
      %v1757 = vpack.c.b16 %v1670, %v1667
      %v1758 = vpack.c.b16 %v1671, %v1668
      %v1759 = vpack.c.b16 %v1675, %v1672
      %v1760 = vpack.c.b16 %v1676, %v1673
      %v1761 = vpack.c.b16 %v1677, %v1674
      %v1762 = vpack.c.b16 %v1681, %v1678
      %v1763 = vpack.c.b16 %v1682, %v1679
      %v1764 = vpack.c.b16 %v1683, %v1680
      %v1765 = vpack.c.b16 %v1687, %v1684
      %v1766 = vpack.c.b16 %v1688, %v1685
      %v1767 = vpack.c.b16 %v1689, %v1686
      %v1768 = vpack.c.b16 %v1693, %v1690
      %v1769 = vpack.c.b16 %v1694, %v1691
      %v1770 = vpack.c.b16 %v1695, %v1692
      %v1771 = vpack.c.b16 %v1699, %v1696
      %v1772 = vpack.c.b16 %v1700, %v1697
      %v1773 = vpack.c.b16 %v1701, %v1698
      %v1774 = vpack.c.b16 %v1705, %v1702
      %v1775 = vpack.c.b16 %v1706, %v1703
      %v1776 = vpack.c.b16 %v1707, %v1704
      %v1777 = vpack.c.b16 %v1711, %v1708
      %v1778 = vpack.c.b16 %v1712, %v1709
      %v1779 = vpack.c.b16 %v1713, %v1710
      %v1780 = vpack.c.b16 %v1717, %v1714
      %v1781 = vpack.c.b16 %v1718, %v1715
      %v1782 = vpack.c.b16 %v1719, %v1716
      %v1783 = vpack.c.b16 %v1723, %v1720
      %v1784 = vpack.c.b16 %v1724, %v1721
      %v1785 = vpack.c.b16 %v1725, %v1722
      %v1786 = vpack.c.b16 %v1729, %v1726
      %v1787 = vpack.c.b16 %v1730, %v1727
      %v1788 = vpack.c.b16 %v1731, %v1728
      %v1789 = vpack.c.b16 %v1735, %v1732
      %v1790 = vpack.c.b16 %v1736, %v1733
      %v1791 = vpack.c.b16 %v1737, %v1734
      %v1792 = vpack.c.b16 %v1741, %v1738
      %v1793 = vpack.c.b16 %v1742, %v1739
      %v1794 = vpack.c.b16 %v1743, %v1740
      %v1795 = vpack.c.b16 %v1747, %v1744
      %v1796 = vpack.c.b16 %v1748, %v1745
      %v1797 = vpack.c.b16 %v1749, %v1746
      %1846 = vmatpush.bf16.msra.mxu0 %v1771
      %1847 = vmatpush.bf16.msra.mxu0 %v1768
      %1848 = vmatpush.bf16.msra.mxu0 %v1765
      %1849 = vmatpush.bf16.msra.mxu0 %v1762
      %1850 = vmatpush.bf16.msra.mxu0 %v1759
      %1851 = vmatpush.bf16.msra.mxu0 %v1756
      %1852 = vmatpush.bf16.msra.mxu0 %v1753
      %1853 = vmatpush.bf16.msra.mxu0 %v1750
      %1854 = vmatmul.bf16.gmra.mxu0 %v1574
      %v1855 = vpop.f32.mrf.mxu0
      %v1856 = vadd.f32 0.0, %v1855
      %v1857 = vpop.f32.mrf.mxu0
      %v1858 = vadd.f32 0.0, %v1857
      %1859 = vmatmul.bf16.gmra.mxu0 %v1576
      %v1860 = vpop.f32.mrf.mxu0
      %v1861 = vadd.f32 0.0, %v1860
      %v1862 = vpop.f32.mrf.mxu0
      %v1863 = vadd.f32 0.0, %v1862
      %1864 = vmatmul.bf16.gmra.mxu0 %v1578
      %v1865 = vpop.f32.mrf.mxu0
      %v1866 = vadd.f32 0.0, %v1865
      %v1867 = vpop.f32.mrf.mxu0
      %v1868 = vadd.f32 0.0, %v1867
      %1869 = vmatmul.bf16.gmra.mxu0 %v1580
      %v1870 = vpop.f32.mrf.mxu0
      %v1871 = vadd.f32 0.0, %v1870
      %v1872 = vpop.f32.mrf.mxu0
      %v1873 = vadd.f32 0.0, %v1872
      %1874 = vdwg.mxu0
      %1875 = vmatpush.bf16.msra.mxu0 %v1795
      %1876 = vmatpush.bf16.msra.mxu0 %v1792
      %1877 = vmatpush.bf16.msra.mxu0 %v1789
      %1878 = vmatpush.bf16.msra.mxu0 %v1786
      %1879 = vmatpush.bf16.msra.mxu0 %v1783
      %1880 = vmatpush.bf16.msra.mxu0 %v1780
      %1881 = vmatpush.bf16.msra.mxu0 %v1777
      %1882 = vmatpush.bf16.msra.mxu0 %v1774
      %1883 = vmatmul.bf16.gmra.mxu0 %v1575
      %v1884 = vpop.f32.mrf.mxu0
      %v1885 = vadd.f32 %v1856, %v1884
      %v1886 = vpop.f32.mrf.mxu0
      %v1887 = vadd.f32 %v1858, %v1886
      %1888 = vmatmul.bf16.gmra.mxu0 %v1577
      %v1889 = vpop.f32.mrf.mxu0
      %v1890 = vadd.f32 %v1861, %v1889
      %v1891 = vpop.f32.mrf.mxu0
      %v1892 = vadd.f32 %v1863, %v1891
      %1893 = vmatmul.bf16.gmra.mxu0 %v1579
      %v1894 = vpop.f32.mrf.mxu0
      %v1895 = vadd.f32 %v1866, %v1894
      %v1896 = vpop.f32.mrf.mxu0
      %v1897 = vadd.f32 %v1868, %v1896
      %1898 = vmatmul.bf16.gmra.mxu0 %v1581
      %v1899 = vpop.f32.mrf.mxu0
      %v1900 = vadd.f32 %v1871, %v1899
      %v1901 = vpop.f32.mrf.mxu0
      %v1902 = vadd.f32 %v1873, %v1901
      %1903 = vdwg.mxu0
      %1904 = vmatpush.bf16.msra.mxu0 %v1772
      %1905 = vmatpush.bf16.msra.mxu0 %v1769
      %1906 = vmatpush.bf16.msra.mxu0 %v1766
      %1907 = vmatpush.bf16.msra.mxu0 %v1763
      %1908 = vmatpush.bf16.msra.mxu0 %v1760
      %1909 = vmatpush.bf16.msra.mxu0 %v1757
      %1910 = vmatpush.bf16.msra.mxu0 %v1754
      %1911 = vmatpush.bf16.msra.mxu0 %v1751
      %1912 = vmatmul.bf16.gmra.mxu0 %v1574
      %v1913 = vpop.f32.mrf.mxu0
      %v1914 = vadd.f32 0.0, %v1913
      %v1915 = vpop.f32.mrf.mxu0
      %v1916 = vadd.f32 0.0, %v1915
      %1917 = vmatmul.bf16.gmra.mxu0 %v1576
      %v1918 = vpop.f32.mrf.mxu0
      %v1919 = vadd.f32 0.0, %v1918
      %v1920 = vpop.f32.mrf.mxu0
      %v1921 = vadd.f32 0.0, %v1920
      %1922 = vmatmul.bf16.gmra.mxu0 %v1578
      %v1923 = vpop.f32.mrf.mxu0
      %v1924 = vadd.f32 0.0, %v1923
      %v1925 = vpop.f32.mrf.mxu0
      %v1926 = vadd.f32 0.0, %v1925
      %1927 = vmatmul.bf16.gmra.mxu0 %v1580
      %v1928 = vpop.f32.mrf.mxu0
      %v1929 = vadd.f32 0.0, %v1928
      %v1930 = vpop.f32.mrf.mxu0
      %v1931 = vadd.f32 0.0, %v1930
      %1932 = vdwg.mxu0
      %1933 = vmatpush.bf16.msra.mxu0 %v1796
      %1934 = vmatpush.bf16.msra.mxu0 %v1793
      %1935 = vmatpush.bf16.msra.mxu0 %v1790
      %1936 = vmatpush.bf16.msra.mxu0 %v1787
      %1937 = vmatpush.bf16.msra.mxu0 %v1784
      %1938 = vmatpush.bf16.msra.mxu0 %v1781
      %1939 = vmatpush.bf16.msra.mxu0 %v1778
      %1940 = vmatpush.bf16.msra.mxu0 %v1775
      %1941 = vmatmul.bf16.gmra.mxu0 %v1575
      %v1942 = vpop.f32.mrf.mxu0
      %v1943 = vadd.f32 %v1914, %v1942
      %v1944 = vpop.f32.mrf.mxu0
      %v1945 = vadd.f32 %v1916, %v1944
      %1946 = vmatmul.bf16.gmra.mxu0 %v1577
      %v1947 = vpop.f32.mrf.mxu0
      %v1948 = vadd.f32 %v1919, %v1947
      %v1949 = vpop.f32.mrf.mxu0
      %v1950 = vadd.f32 %v1921, %v1949
      %1951 = vmatmul.bf16.gmra.mxu0 %v1579
      %v1952 = vpop.f32.mrf.mxu0
      %v1953 = vadd.f32 %v1924, %v1952
      %v1954 = vpop.f32.mrf.mxu0
      %v1955 = vadd.f32 %v1926, %v1954
      %1956 = vmatmul.bf16.gmra.mxu0 %v1581
      %v1957 = vpop.f32.mrf.mxu0
      %v1958 = vadd.f32 %v1929, %v1957
      %v1959 = vpop.f32.mrf.mxu0
      %v1960 = vadd.f32 %v1931, %v1959
      %1961 = vdwg.mxu0
      %1962 = vmatpush.bf16.msra.mxu0 %v1773
      %1963 = vmatpush.bf16.msra.mxu0 %v1770
      %1964 = vmatpush.bf16.msra.mxu0 %v1767
      %1965 = vmatpush.bf16.msra.mxu0 %v1764
      %1966 = vmatpush.bf16.msra.mxu0 %v1761
      %1967 = vmatpush.bf16.msra.mxu0 %v1758
      %1968 = vmatpush.bf16.msra.mxu0 %v1755
      %1969 = vmatpush.bf16.msra.mxu0 %v1752
      %1970 = vmatmul.bf16.gmra.mxu0 %v1574
      %v1971 = vpop.f32.mrf.mxu0
      %v1972 = vadd.f32 0.0, %v1971
      %v1973 = vpop.f32.mrf.mxu0
      %v1974 = vadd.f32 0.0, %v1973
      %1975 = vmatmul.bf16.gmra.mxu0 %v1576
      %v1976 = vpop.f32.mrf.mxu0
      %v1977 = vadd.f32 0.0, %v1976
      %v1978 = vpop.f32.mrf.mxu0
      %v1979 = vadd.f32 0.0, %v1978
      %1980 = vmatmul.bf16.gmra.mxu0 %v1578
      %v1981 = vpop.f32.mrf.mxu0
      %v1982 = vadd.f32 0.0, %v1981
      %v1983 = vpop.f32.mrf.mxu0
      %v1984 = vadd.f32 0.0, %v1983
      %1985 = vmatmul.bf16.gmra.mxu0 %v1580
      %v1986 = vpop.f32.mrf.mxu0
      %v1987 = vadd.f32 0.0, %v1986
      %v1988 = vpop.f32.mrf.mxu0
      %v1989 = vadd.f32 0.0, %v1988
      %1990 = vdwg.mxu0
      %1991 = vmatpush.bf16.msra.mxu0 %v1797
      %1992 = vmatpush.bf16.msra.mxu0 %v1794
      %1993 = vmatpush.bf16.msra.mxu0 %v1791
      %1994 = vmatpush.bf16.msra.mxu0 %v1788
      %1995 = vmatpush.bf16.msra.mxu0 %v1785
      %1996 = vmatpush.bf16.msra.mxu0 %v1782
      %1997 = vmatpush.bf16.msra.mxu0 %v1779
      %1998 = vmatpush.bf16.msra.mxu0 %v1776
      %1999 = vmatmul.bf16.gmra.mxu0 %v1575
      %v2000 = vpop.f32.mrf.mxu0
      %v2001 = vadd.f32 %v1972, %v2000
      %v2002 = vpop.f32.mrf.mxu0
      %v2003 = vadd.f32 %v1974, %v2002
      %2004 = vmatmul.bf16.gmra.mxu0 %v1577
      %v2005 = vpop.f32.mrf.mxu0
      %v2006 = vadd.f32 %v1977, %v2005
      %v2007 = vpop.f32.mrf.mxu0
      %v2008 = vadd.f32 %v1979, %v2007
      %2009 = vmatmul.bf16.gmra.mxu0 %v1579
      %v2010 = vpop.f32.mrf.mxu0
      %v2011 = vadd.f32 %v1982, %v2010
      %v2012 = vpop.f32.mrf.mxu0
      %v2013 = vadd.f32 %v1984, %v2012
      %2014 = vmatmul.bf16.gmra.mxu0 %v1581
      %v2015 = vpop.f32.mrf.mxu0
      %v2016 = vadd.f32 %v1987, %v2015
      %v2017 = vpop.f32.mrf.mxu0
      %v2018 = vadd.f32 %v1989, %v2017
      %2019 = vdwg.mxu0
      %v2020 = vadd.f32 %v1342, %v1885
      %v2021 = vadd.f32 %v1400, %v1943
      %v2022 = vadd.f32 %v1458, %v2001
      %v2023 = vadd.f32 %v1344, %v1887
      %v2024 = vadd.f32 %v1402, %v1945
      %v2025 = vadd.f32 %v1460, %v2003
      %v2026 = vadd.f32 %v1347, %v1890
      %v2027 = vadd.f32 %v1405, %v1948
      %v2028 = vadd.f32 %v1463, %v2006
      %v2029 = vadd.f32 %v1349, %v1892
      %v2030 = vadd.f32 %v1407, %v1950
      %v2031 = vadd.f32 %v1465, %v2008
      %v2032 = vadd.f32 %v1352, %v1895
      %v2033 = vadd.f32 %v1410, %v1953
      %v2034 = vadd.f32 %v1468, %v2011
      %v2035 = vadd.f32 %v1354, %v1897
      %v2036 = vadd.f32 %v1412, %v1955
      %v2037 = vadd.f32 %v1470, %v2013
      %v2038 = vadd.f32 %v1357, %v1900
      %v2039 = vadd.f32 %v1415, %v1958
      %v2040 = vadd.f32 %v1473, %v2016
      %v2041 = vadd.f32 %v1359, %v1902
      %v2042 = vadd.f32 %v1417, %v1960
      %v2043 = vadd.f32 %v1475, %v2018
      %v2044 = vld [vmem:[%s386 + $0x50] sm:$0xff]
      %v2045 = vld [vmem:[%s386 + $0x58] sm:$0xff]
      %v2046 = vld [vmem:[%s386 + $0x60] sm:$0xff]
      %v2047 = vld [vmem:[%s386 + $0x68] sm:$0xff]
      %v2048 = vld [vmem:[%s386 + $0x70] sm:$0xff]
      %v2049 = vld [vmem:[%s386 + $0x78] sm:$0xff]
      %v2050 = vld [vmem:[%s386 + $0x80] sm:$0xff]
      %v2051 = vld [vmem:[%s386 + $0x88] sm:$0xff]
      %s2052 = scalar_lea.vmem %s1, 1152
      %v2053 = vld [vmem:[%s2052] sm:$0xff]
      %v2054 = vld [vmem:[%s2052 + $0x8] sm:$0xf]
      %v2055 = vld [vmem:[%s2052 + $0xc] sm:$0xff]
      %v2056 = vld [vmem:[%s2052 + $0x14] sm:$0xf]
      %v2057 = vld [vmem:[%s2052 + $0x18] sm:$0xff]
      %v2058 = vld [vmem:[%s2052 + $0x20] sm:$0xf]
      %v2059 = vld [vmem:[%s2052 + $0x24] sm:$0xff]
      %v2060 = vld [vmem:[%s2052 + $0x2c] sm:$0xf]
      %v2061 = vld [vmem:[%s2052 + $0x30] sm:$0xff]
      %v2062 = vld [vmem:[%s2052 + $0x38] sm:$0xf]
      %v2063 = vld [vmem:[%s2052 + $0x3c] sm:$0xff]
      %v2064 = vld [vmem:[%s2052 + $0x44] sm:$0xf]
      %v2065 = vld [vmem:[%s2052 + $0x48] sm:$0xff]
      %v2066 = vld [vmem:[%s2052 + $0x50] sm:$0xf]
      %v2067 = vld [vmem:[%s2052 + $0x54] sm:$0xff]
      %v2068 = vld [vmem:[%s2052 + $0x5c] sm:$0xf]
      %v2069 = vld [vmem:[%s2052 + $0x60] sm:$0xff]
      %v2070 = vld [vmem:[%s2052 + $0x68] sm:$0xf]
      %v2071 = vld [vmem:[%s2052 + $0x6c] sm:$0xff]
      %v2072 = vld [vmem:[%s2052 + $0x74] sm:$0xf]
      %v2073 = vld [vmem:[%s2052 + $0x78] sm:$0xff]
      %v2074 = vld [vmem:[%s2052 + $0x80] sm:$0xf]
      %v2075 = vld [vmem:[%s2052 + $0x84] sm:$0xff]
      %v2076 = vld [vmem:[%s2052 + $0x8c] sm:$0xf]
      %v2077 = vld [vmem:[%s2052 + $0x90] sm:$0xff]
      %v2078 = vld [vmem:[%s2052 + $0x98] sm:$0xf]
      %v2079 = vld [vmem:[%s2052 + $0x9c] sm:$0xff]
      %v2080 = vld [vmem:[%s2052 + $0xa4] sm:$0xf]
      %v2081 = vld [vmem:[%s2052 + $0xa8] sm:$0xff]
      %v2082 = vld [vmem:[%s2052 + $0xb0] sm:$0xf]
      %v2083 = vld [vmem:[%s2052 + $0xb4] sm:$0xff]
      %v2084 = vld [vmem:[%s2052 + $0xbc] sm:$0xf]
      %v2085 = vld [vmem:[%s2052 + $0xc0] sm:$0xff]
      %v2086 = vld [vmem:[%s2052 + $0xc8] sm:$0xf]
      %v2087 = vld [vmem:[%s2052 + $0xcc] sm:$0xff]
      %v2088 = vld [vmem:[%s2052 + $0xd4] sm:$0xf]
      %v2089 = vld [vmem:[%s2052 + $0xd8] sm:$0xff]
      %v2090 = vld [vmem:[%s2052 + $0xe0] sm:$0xf]
      %v2091 = vld [vmem:[%s2052 + $0xe4] sm:$0xff]
      %v2092 = vld [vmem:[%s2052 + $0xec] sm:$0xf]
      %v2093 = vld [vmem:[%s2052 + $0xf0] sm:$0xff]
      %v2094 = vld [vmem:[%s2052 + $0xf8] sm:$0xf]
      %v2095 = vld [vmem:[%s2052 + $0xfc] sm:$0xff]
      %v2096 = vld [vmem:[%s2052 + $0x104] sm:$0xf]
      %v2097 = vld [vmem:[%s2052 + $0x108] sm:$0xff]
      %v2098 = vld [vmem:[%s2052 + $0x110] sm:$0xf]
      %v2099 = vld [vmem:[%s2052 + $0x114] sm:$0xff]
      %v2100 = vld [vmem:[%s2052 + $0x11c] sm:$0xf]
      %v2101 = vld [vmem:[%s2052 + $0x120] sm:$0xff]
      %v2102 = vld [vmem:[%s2052 + $0x128] sm:$0xf]
      %v2103 = vld [vmem:[%s2052 + $0x12c] sm:$0xff]
      %v2104 = vld [vmem:[%s2052 + $0x134] sm:$0xf]
      %v2105 = vld [vmem:[%s2052 + $0x138] sm:$0xff]
      %v2106 = vld [vmem:[%s2052 + $0x140] sm:$0xf]
      %v2107 = vld [vmem:[%s2052 + $0x144] sm:$0xff]
      %v2108 = vld [vmem:[%s2052 + $0x14c] sm:$0xf]
      %v2109 = vld [vmem:[%s2052 + $0x150] sm:$0xff]
      %v2110 = vld [vmem:[%s2052 + $0x158] sm:$0xf]
      %v2111 = vld [vmem:[%s2052 + $0x15c] sm:$0xff]
      %v2112 = vld [vmem:[%s2052 + $0x164] sm:$0xf]
      %v2113 = vld [vmem:[%s2052 + $0x168] sm:$0xff]
      %v2114 = vld [vmem:[%s2052 + $0x170] sm:$0xf]
      %v2115 = vld [vmem:[%s2052 + $0x174] sm:$0xff]
      %v2116 = vld [vmem:[%s2052 + $0x17c] sm:$0xf]
      %v2125 = vunpack.c.l.b16 %v2044
      %v2126 = vunpack.c.h.b16 %v2044
      %v2127 = vunpack.c.l.b16 %v2045
      %v2128 = vunpack.c.h.b16 %v2045
      %v2129 = vunpack.c.l.b16 %v2046
      %v2130 = vunpack.c.h.b16 %v2046
      %v2131 = vunpack.c.l.b16 %v2047
      %v2132 = vunpack.c.h.b16 %v2047
      %v2133 = vunpack.c.l.b16 %v2048
      %v2134 = vunpack.c.h.b16 %v2048
      %v2135 = vunpack.c.l.b16 %v2049
      %v2136 = vunpack.c.h.b16 %v2049
      %v2137 = vunpack.c.l.b16 %v2050
      %v2138 = vunpack.c.h.b16 %v2050
      %v2139 = vunpack.c.l.b16 %v2051
      %v2140 = vunpack.c.h.b16 %v2051
      %v2141 = vpack.c.b16 %v2127, %v2125
      %v2142 = vpack.c.b16 %v2128, %v2126
      %v2143 = vpack.c.b16 %v2131, %v2129
      %v2144 = vpack.c.b16 %v2132, %v2130
      %v2145 = vpack.c.b16 %v2135, %v2133
      %v2146 = vpack.c.b16 %v2136, %v2134
      %v2147 = vpack.c.b16 %v2139, %v2137
      %v2148 = vpack.c.b16 %v2140, %v2138
      %v2221 = vunpack.c.l.b16 %v2053
      %v2222 = vunpack.c.h.b16 %v2053
      %v2223 = vunpack.c.l.b16 %v2054
      %v2224 = vunpack.c.l.b16 %v2055
      %v2225 = vunpack.c.h.b16 %v2055
      %v2226 = vunpack.c.l.b16 %v2056
      %v2227 = vunpack.c.l.b16 %v2057
      %v2228 = vunpack.c.h.b16 %v2057
      %v2229 = vunpack.c.l.b16 %v2058
      %v2230 = vunpack.c.l.b16 %v2059
      %v2231 = vunpack.c.h.b16 %v2059
      %v2232 = vunpack.c.l.b16 %v2060
      %v2233 = vunpack.c.l.b16 %v2061
      %v2234 = vunpack.c.h.b16 %v2061
      %v2235 = vunpack.c.l.b16 %v2062
      %v2236 = vunpack.c.l.b16 %v2063
      %v2237 = vunpack.c.h.b16 %v2063
      %v2238 = vunpack.c.l.b16 %v2064
      %v2239 = vunpack.c.l.b16 %v2065
      %v2240 = vunpack.c.h.b16 %v2065
      %v2241 = vunpack.c.l.b16 %v2066
      %v2242 = vunpack.c.l.b16 %v2067
      %v2243 = vunpack.c.h.b16 %v2067
      %v2244 = vunpack.c.l.b16 %v2068
      %v2245 = vunpack.c.l.b16 %v2069
      %v2246 = vunpack.c.h.b16 %v2069
      %v2247 = vunpack.c.l.b16 %v2070
      %v2248 = vunpack.c.l.b16 %v2071
      %v2249 = vunpack.c.h.b16 %v2071
      %v2250 = vunpack.c.l.b16 %v2072
      %v2251 = vunpack.c.l.b16 %v2073
      %v2252 = vunpack.c.h.b16 %v2073
      %v2253 = vunpack.c.l.b16 %v2074
      %v2254 = vunpack.c.l.b16 %v2075
      %v2255 = vunpack.c.h.b16 %v2075
      %v2256 = vunpack.c.l.b16 %v2076
      %v2257 = vunpack.c.l.b16 %v2077
      %v2258 = vunpack.c.h.b16 %v2077
      %v2259 = vunpack.c.l.b16 %v2078
      %v2260 = vunpack.c.l.b16 %v2079
      %v2261 = vunpack.c.h.b16 %v2079
      %v2262 = vunpack.c.l.b16 %v2080
      %v2263 = vunpack.c.l.b16 %v2081
      %v2264 = vunpack.c.h.b16 %v2081
      %v2265 = vunpack.c.l.b16 %v2082
      %v2266 = vunpack.c.l.b16 %v2083
      %v2267 = vunpack.c.h.b16 %v2083
      %v2268 = vunpack.c.l.b16 %v2084
      %v2269 = vunpack.c.l.b16 %v2085
      %v2270 = vunpack.c.h.b16 %v2085
      %v2271 = vunpack.c.l.b16 %v2086
      %v2272 = vunpack.c.l.b16 %v2087
      %v2273 = vunpack.c.h.b16 %v2087
      %v2274 = vunpack.c.l.b16 %v2088
      %v2275 = vunpack.c.l.b16 %v2089
      %v2276 = vunpack.c.h.b16 %v2089
      %v2277 = vunpack.c.l.b16 %v2090
      %v2278 = vunpack.c.l.b16 %v2091
      %v2279 = vunpack.c.h.b16 %v2091
      %v2280 = vunpack.c.l.b16 %v2092
      %v2281 = vunpack.c.l.b16 %v2093
      %v2282 = vunpack.c.h.b16 %v2093
      %v2283 = vunpack.c.l.b16 %v2094
      %v2284 = vunpack.c.l.b16 %v2095
      %v2285 = vunpack.c.h.b16 %v2095
      %v2286 = vunpack.c.l.b16 %v2096
      %v2287 = vunpack.c.l.b16 %v2097
      %v2288 = vunpack.c.h.b16 %v2097
      %v2289 = vunpack.c.l.b16 %v2098
      %v2290 = vunpack.c.l.b16 %v2099
      %v2291 = vunpack.c.h.b16 %v2099
      %v2292 = vunpack.c.l.b16 %v2100
      %v2293 = vunpack.c.l.b16 %v2101
      %v2294 = vunpack.c.h.b16 %v2101
      %v2295 = vunpack.c.l.b16 %v2102
      %v2296 = vunpack.c.l.b16 %v2103
      %v2297 = vunpack.c.h.b16 %v2103
      %v2298 = vunpack.c.l.b16 %v2104
      %v2299 = vunpack.c.l.b16 %v2105
      %v2300 = vunpack.c.h.b16 %v2105
      %v2301 = vunpack.c.l.b16 %v2106
      %v2302 = vunpack.c.l.b16 %v2107
      %v2303 = vunpack.c.h.b16 %v2107
      %v2304 = vunpack.c.l.b16 %v2108
      %v2305 = vunpack.c.l.b16 %v2109
      %v2306 = vunpack.c.h.b16 %v2109
      %v2307 = vunpack.c.l.b16 %v2110
      %v2308 = vunpack.c.l.b16 %v2111
      %v2309 = vunpack.c.h.b16 %v2111
      %v2310 = vunpack.c.l.b16 %v2112
      %v2311 = vunpack.c.l.b16 %v2113
      %v2312 = vunpack.c.h.b16 %v2113
      %v2313 = vunpack.c.l.b16 %v2114
      %v2314 = vunpack.c.l.b16 %v2115
      %v2315 = vunpack.c.h.b16 %v2115
      %v2316 = vunpack.c.l.b16 %v2116
      %v2317 = vpack.c.b16 %v2224, %v2221
      %v2318 = vpack.c.b16 %v2225, %v2222
      %v2319 = vpack.c.b16 %v2226, %v2223
      %v2320 = vpack.c.b16 %v2230, %v2227
      %v2321 = vpack.c.b16 %v2231, %v2228
      %v2322 = vpack.c.b16 %v2232, %v2229
      %v2323 = vpack.c.b16 %v2236, %v2233
      %v2324 = vpack.c.b16 %v2237, %v2234
      %v2325 = vpack.c.b16 %v2238, %v2235
      %v2326 = vpack.c.b16 %v2242, %v2239
      %v2327 = vpack.c.b16 %v2243, %v2240
      %v2328 = vpack.c.b16 %v2244, %v2241
      %v2329 = vpack.c.b16 %v2248, %v2245
      %v2330 = vpack.c.b16 %v2249, %v2246
      %v2331 = vpack.c.b16 %v2250, %v2247
      %v2332 = vpack.c.b16 %v2254, %v2251
      %v2333 = vpack.c.b16 %v2255, %v2252
      %v2334 = vpack.c.b16 %v2256, %v2253
      %v2335 = vpack.c.b16 %v2260, %v2257
      %v2336 = vpack.c.b16 %v2261, %v2258
      %v2337 = vpack.c.b16 %v2262, %v2259
      %v2338 = vpack.c.b16 %v2266, %v2263
      %v2339 = vpack.c.b16 %v2267, %v2264
      %v2340 = vpack.c.b16 %v2268, %v2265
      %v2341 = vpack.c.b16 %v2272, %v2269
      %v2342 = vpack.c.b16 %v2273, %v2270
      %v2343 = vpack.c.b16 %v2274, %v2271
      %v2344 = vpack.c.b16 %v2278, %v2275
      %v2345 = vpack.c.b16 %v2279, %v2276
      %v2346 = vpack.c.b16 %v2280, %v2277
      %v2347 = vpack.c.b16 %v2284, %v2281
      %v2348 = vpack.c.b16 %v2285, %v2282
      %v2349 = vpack.c.b16 %v2286, %v2283
      %v2350 = vpack.c.b16 %v2290, %v2287
      %v2351 = vpack.c.b16 %v2291, %v2288
      %v2352 = vpack.c.b16 %v2292, %v2289
      %v2353 = vpack.c.b16 %v2296, %v2293
      %v2354 = vpack.c.b16 %v2297, %v2294
      %v2355 = vpack.c.b16 %v2298, %v2295
      %v2356 = vpack.c.b16 %v2302, %v2299
      %v2357 = vpack.c.b16 %v2303, %v2300
      %v2358 = vpack.c.b16 %v2304, %v2301
      %v2359 = vpack.c.b16 %v2308, %v2305
      %v2360 = vpack.c.b16 %v2309, %v2306
      %v2361 = vpack.c.b16 %v2310, %v2307
      %v2362 = vpack.c.b16 %v2314, %v2311
      %v2363 = vpack.c.b16 %v2315, %v2312
      %v2364 = vpack.c.b16 %v2316, %v2313
      %2413 = vmatpush.bf16.msra.mxu0 %v2338
      %2414 = vmatpush.bf16.msra.mxu0 %v2335
      %2415 = vmatpush.bf16.msra.mxu0 %v2332
      %2416 = vmatpush.bf16.msra.mxu0 %v2329
      %2417 = vmatpush.bf16.msra.mxu0 %v2326
      %2418 = vmatpush.bf16.msra.mxu0 %v2323
      %2419 = vmatpush.bf16.msra.mxu0 %v2320
      %2420 = vmatpush.bf16.msra.mxu0 %v2317
      %2421 = vmatmul.bf16.gmra.mxu0 %v2141
      %v2422 = vpop.f32.mrf.mxu0
      %v2423 = vadd.f32 0.0, %v2422
      %v2424 = vpop.f32.mrf.mxu0
      %v2425 = vadd.f32 0.0, %v2424
      %2426 = vmatmul.bf16.gmra.mxu0 %v2143
      %v2427 = vpop.f32.mrf.mxu0
      %v2428 = vadd.f32 0.0, %v2427
      %v2429 = vpop.f32.mrf.mxu0
      %v2430 = vadd.f32 0.0, %v2429
      %2431 = vmatmul.bf16.gmra.mxu0 %v2145
      %v2432 = vpop.f32.mrf.mxu0
      %v2433 = vadd.f32 0.0, %v2432
      %v2434 = vpop.f32.mrf.mxu0
      %v2435 = vadd.f32 0.0, %v2434
      %2436 = vmatmul.bf16.gmra.mxu0 %v2147
      %v2437 = vpop.f32.mrf.mxu0
      %v2438 = vadd.f32 0.0, %v2437
      %v2439 = vpop.f32.mrf.mxu0
      %v2440 = vadd.f32 0.0, %v2439
      %2441 = vdwg.mxu0
      %2442 = vmatpush.bf16.msra.mxu0 %v2362
      %2443 = vmatpush.bf16.msra.mxu0 %v2359
      %2444 = vmatpush.bf16.msra.mxu0 %v2356
      %2445 = vmatpush.bf16.msra.mxu0 %v2353
      %2446 = vmatpush.bf16.msra.mxu0 %v2350
      %2447 = vmatpush.bf16.msra.mxu0 %v2347
      %2448 = vmatpush.bf16.msra.mxu0 %v2344
      %2449 = vmatpush.bf16.msra.mxu0 %v2341
      %2450 = vmatmul.bf16.gmra.mxu0 %v2142
      %v2451 = vpop.f32.mrf.mxu0
      %v2452 = vadd.f32 %v2423, %v2451
      %v2453 = vpop.f32.mrf.mxu0
      %v2454 = vadd.f32 %v2425, %v2453
      %2455 = vmatmul.bf16.gmra.mxu0 %v2144
      %v2456 = vpop.f32.mrf.mxu0
      %v2457 = vadd.f32 %v2428, %v2456
      %v2458 = vpop.f32.mrf.mxu0
      %v2459 = vadd.f32 %v2430, %v2458
      %2460 = vmatmul.bf16.gmra.mxu0 %v2146
      %v2461 = vpop.f32.mrf.mxu0
      %v2462 = vadd.f32 %v2433, %v2461
      %v2463 = vpop.f32.mrf.mxu0
      %v2464 = vadd.f32 %v2435, %v2463
      %2465 = vmatmul.bf16.gmra.mxu0 %v2148
      %v2466 = vpop.f32.mrf.mxu0
      %v2467 = vadd.f32 %v2438, %v2466
      %v2468 = vpop.f32.mrf.mxu0
      %v2469 = vadd.f32 %v2440, %v2468
      %2470 = vdwg.mxu0
      %2471 = vmatpush.bf16.msra.mxu0 %v2339
      %2472 = vmatpush.bf16.msra.mxu0 %v2336
      %2473 = vmatpush.bf16.msra.mxu0 %v2333
      %2474 = vmatpush.bf16.msra.mxu0 %v2330
      %2475 = vmatpush.bf16.msra.mxu0 %v2327
      %2476 = vmatpush.bf16.msra.mxu0 %v2324
      %2477 = vmatpush.bf16.msra.mxu0 %v2321
      %2478 = vmatpush.bf16.msra.mxu0 %v2318
      %2479 = vmatmul.bf16.gmra.mxu0 %v2141
      %v2480 = vpop.f32.mrf.mxu0
      %v2481 = vadd.f32 0.0, %v2480
      %v2482 = vpop.f32.mrf.mxu0
      %v2483 = vadd.f32 0.0, %v2482
      %2484 = vmatmul.bf16.gmra.mxu0 %v2143
      %v2485 = vpop.f32.mrf.mxu0
      %v2486 = vadd.f32 0.0, %v2485
      %v2487 = vpop.f32.mrf.mxu0
      %v2488 = vadd.f32 0.0, %v2487
      %2489 = vmatmul.bf16.gmra.mxu0 %v2145
      %v2490 = vpop.f32.mrf.mxu0
      %v2491 = vadd.f32 0.0, %v2490
      %v2492 = vpop.f32.mrf.mxu0
      %v2493 = vadd.f32 0.0, %v2492
      %2494 = vmatmul.bf16.gmra.mxu0 %v2147
      %v2495 = vpop.f32.mrf.mxu0
      %v2496 = vadd.f32 0.0, %v2495
      %v2497 = vpop.f32.mrf.mxu0
      %v2498 = vadd.f32 0.0, %v2497
      %2499 = vdwg.mxu0
      %2500 = vmatpush.bf16.msra.mxu0 %v2363
      %2501 = vmatpush.bf16.msra.mxu0 %v2360
      %2502 = vmatpush.bf16.msra.mxu0 %v2357
      %2503 = vmatpush.bf16.msra.mxu0 %v2354
      %2504 = vmatpush.bf16.msra.mxu0 %v2351
      %2505 = vmatpush.bf16.msra.mxu0 %v2348
      %2506 = vmatpush.bf16.msra.mxu0 %v2345
      %2507 = vmatpush.bf16.msra.mxu0 %v2342
      %2508 = vmatmul.bf16.gmra.mxu0 %v2142
      %v2509 = vpop.f32.mrf.mxu0
      %v2510 = vadd.f32 %v2481, %v2509
      %v2511 = vpop.f32.mrf.mxu0
      %v2512 = vadd.f32 %v2483, %v2511
      %2513 = vmatmul.bf16.gmra.mxu0 %v2144
      %v2514 = vpop.f32.mrf.mxu0
      %v2515 = vadd.f32 %v2486, %v2514
      %v2516 = vpop.f32.mrf.mxu0
      %v2517 = vadd.f32 %v2488, %v2516
      %2518 = vmatmul.bf16.gmra.mxu0 %v2146
      %v2519 = vpop.f32.mrf.mxu0
      %v2520 = vadd.f32 %v2491, %v2519
      %v2521 = vpop.f32.mrf.mxu0
      %v2522 = vadd.f32 %v2493, %v2521
      %2523 = vmatmul.bf16.gmra.mxu0 %v2148
      %v2524 = vpop.f32.mrf.mxu0
      %v2525 = vadd.f32 %v2496, %v2524
      %v2526 = vpop.f32.mrf.mxu0
      %v2527 = vadd.f32 %v2498, %v2526
      %2528 = vdwg.mxu0
      %2529 = vmatpush.bf16.msra.mxu0 %v2340
      %2530 = vmatpush.bf16.msra.mxu0 %v2337
      %2531 = vmatpush.bf16.msra.mxu0 %v2334
      %2532 = vmatpush.bf16.msra.mxu0 %v2331
      %2533 = vmatpush.bf16.msra.mxu0 %v2328
      %2534 = vmatpush.bf16.msra.mxu0 %v2325
      %2535 = vmatpush.bf16.msra.mxu0 %v2322
      %2536 = vmatpush.bf16.msra.mxu0 %v2319
      %2537 = vmatmul.bf16.gmra.mxu0 %v2141
      %v2538 = vpop.f32.mrf.mxu0
      %v2539 = vadd.f32 0.0, %v2538
      %v2540 = vpop.f32.mrf.mxu0
      %v2541 = vadd.f32 0.0, %v2540
      %2542 = vmatmul.bf16.gmra.mxu0 %v2143
      %v2543 = vpop.f32.mrf.mxu0
      %v2544 = vadd.f32 0.0, %v2543
      %v2545 = vpop.f32.mrf.mxu0
      %v2546 = vadd.f32 0.0, %v2545
      %2547 = vmatmul.bf16.gmra.mxu0 %v2145
      %v2548 = vpop.f32.mrf.mxu0
      %v2549 = vadd.f32 0.0, %v2548
      %v2550 = vpop.f32.mrf.mxu0
      %v2551 = vadd.f32 0.0, %v2550
      %2552 = vmatmul.bf16.gmra.mxu0 %v2147
      %v2553 = vpop.f32.mrf.mxu0
      %v2554 = vadd.f32 0.0, %v2553
      %v2555 = vpop.f32.mrf.mxu0
      %v2556 = vadd.f32 0.0, %v2555
      %2557 = vdwg.mxu0
      %2558 = vmatpush.bf16.msra.mxu0 %v2364
      %2559 = vmatpush.bf16.msra.mxu0 %v2361
      %2560 = vmatpush.bf16.msra.mxu0 %v2358
      %2561 = vmatpush.bf16.msra.mxu0 %v2355
      %2562 = vmatpush.bf16.msra.mxu0 %v2352
      %2563 = vmatpush.bf16.msra.mxu0 %v2349
      %2564 = vmatpush.bf16.msra.mxu0 %v2346
      %2565 = vmatpush.bf16.msra.mxu0 %v2343
      %2566 = vmatmul.bf16.gmra.mxu0 %v2142
      %v2567 = vpop.f32.mrf.mxu0
      %v2568 = vadd.f32 %v2539, %v2567
      %v2569 = vpop.f32.mrf.mxu0
      %v2570 = vadd.f32 %v2541, %v2569
      %2571 = vmatmul.bf16.gmra.mxu0 %v2144
      %v2572 = vpop.f32.mrf.mxu0
      %v2573 = vadd.f32 %v2544, %v2572
      %v2574 = vpop.f32.mrf.mxu0
      %v2575 = vadd.f32 %v2546, %v2574
      %2576 = vmatmul.bf16.gmra.mxu0 %v2146
      %v2577 = vpop.f32.mrf.mxu0
      %v2578 = vadd.f32 %v2549, %v2577
      %v2579 = vpop.f32.mrf.mxu0
      %v2580 = vadd.f32 %v2551, %v2579
      %2581 = vmatmul.bf16.gmra.mxu0 %v2148
      %v2582 = vpop.f32.mrf.mxu0
      %v2583 = vadd.f32 %v2554, %v2582
      %v2584 = vpop.f32.mrf.mxu0
      %v2585 = vadd.f32 %v2556, %v2584
      %2586 = vdwg.mxu0
      %v2587 = vadd.f32 %v2020, %v2452
      %v2588 = vadd.f32 %v2021, %v2510
      %v2589 = vadd.f32 %v2022, %v2568
      %v2590 = vadd.f32 %v2023, %v2454
      %v2591 = vadd.f32 %v2024, %v2512
      %v2592 = vadd.f32 %v2025, %v2570
      %v2593 = vadd.f32 %v2026, %v2457
      %v2594 = vadd.f32 %v2027, %v2515
      %v2595 = vadd.f32 %v2028, %v2573
      %v2596 = vadd.f32 %v2029, %v2459
      %v2597 = vadd.f32 %v2030, %v2517
      %v2598 = vadd.f32 %v2031, %v2575
      %v2599 = vadd.f32 %v2032, %v2462
      %v2600 = vadd.f32 %v2033, %v2520
      %v2601 = vadd.f32 %v2034, %v2578
      %v2602 = vadd.f32 %v2035, %v2464
      %v2603 = vadd.f32 %v2036, %v2522
      %v2604 = vadd.f32 %v2037, %v2580
      %v2605 = vadd.f32 %v2038, %v2467
      %v2606 = vadd.f32 %v2039, %v2525
      %v2607 = vadd.f32 %v2040, %v2583
      %v2608 = vadd.f32 %v2041, %v2469
      %v2609 = vadd.f32 %v2042, %v2527
      %v2610 = vadd.f32 %v2043, %v2585
      %v2611 = vld [vmem:[%s2] sm:$0x7]
      %v2613 = vperm.slane %v2611, 0
      %v2614 = vperm.slane %v2611, 1
      %v2615 = vperm.slane %v2611, 2
      %v2619 = vadd.f32 %v2587, %v2613
      %v2620 = vadd.f32 %v2588, %v2614
      %v2621 = vadd.f32 %v2589, %v2615
      %v2622 = vadd.f32 %v2590, %v2613
      %v2623 = vadd.f32 %v2591, %v2614
      %v2624 = vadd.f32 %v2592, %v2615
      %v2625 = vadd.f32 %v2593, %v2613
      %v2626 = vadd.f32 %v2594, %v2614
      %v2627 = vadd.f32 %v2595, %v2615
      %v2628 = vadd.f32 %v2596, %v2613
      %v2629 = vadd.f32 %v2597, %v2614
      %v2630 = vadd.f32 %v2598, %v2615
      %v2631 = vadd.f32 %v2599, %v2613
      %v2632 = vadd.f32 %v2600, %v2614
      %v2633 = vadd.f32 %v2601, %v2615
      %v2634 = vadd.f32 %v2602, %v2613
      %v2635 = vadd.f32 %v2603, %v2614
      %v2636 = vadd.f32 %v2604, %v2615
      %v2637 = vadd.f32 %v2605, %v2613
      %v2638 = vadd.f32 %v2606, %v2614
      %v2639 = vadd.f32 %v2607, %v2615
      %v2640 = vadd.f32 %v2608, %v2613
      %v2641 = vadd.f32 %v2609, %v2614
      %v2642 = vadd.f32 %v2610, %v2615
      %v2643 = vmul.f32 %v2619, 0.01
      %v2644 = vmul.f32 %v2620, 0.01
      %v2645 = vmul.f32 %v2621, 0.01
      %v2646 = vmul.f32 %v2622, 0.01
      %v2647 = vmul.f32 %v2623, 0.01
      %v2648 = vmul.f32 %v2624, 0.01
      %v2649 = vmul.f32 %v2625, 0.01
      %v2650 = vmul.f32 %v2626, 0.01
      %v2651 = vmul.f32 %v2627, 0.01
      %v2652 = vmul.f32 %v2628, 0.01
      %v2653 = vmul.f32 %v2629, 0.01
      %v2654 = vmul.f32 %v2630, 0.01
      %v2655 = vmul.f32 %v2631, 0.01
      %v2656 = vmul.f32 %v2632, 0.01
      %v2657 = vmul.f32 %v2633, 0.01
      %v2658 = vmul.f32 %v2634, 0.01
      %v2659 = vmul.f32 %v2635, 0.01
      %v2660 = vmul.f32 %v2636, 0.01
      %v2661 = vmul.f32 %v2637, 0.01
      %v2662 = vmul.f32 %v2638, 0.01
      %v2663 = vmul.f32 %v2639, 0.01
      %v2664 = vmul.f32 %v2640, 0.01
      %v2665 = vmul.f32 %v2641, 0.01
      %v2666 = vmul.f32 %v2642, 0.01
      %v2667 = vmax.f32 %v2619, %v2643
      %v2668 = vmax.f32 %v2620, %v2644
      %v2669 = vmax.f32 %v2621, %v2645
      %v2670 = vmax.f32 %v2622, %v2646
      %v2671 = vmax.f32 %v2623, %v2647
      %v2672 = vmax.f32 %v2624, %v2648
      %v2673 = vmax.f32 %v2625, %v2649
      %v2674 = vmax.f32 %v2626, %v2650
      %v2675 = vmax.f32 %v2627, %v2651
      %v2676 = vmax.f32 %v2628, %v2652
      %v2677 = vmax.f32 %v2629, %v2653
      %v2678 = vmax.f32 %v2630, %v2654
      %v2679 = vmax.f32 %v2631, %v2655
      %v2680 = vmax.f32 %v2632, %v2656
      %v2681 = vmax.f32 %v2633, %v2657
      %v2682 = vmax.f32 %v2634, %v2658
      %v2683 = vmax.f32 %v2635, %v2659
      %v2684 = vmax.f32 %v2636, %v2660
      %v2685 = vmax.f32 %v2637, %v2661
      %v2686 = vmax.f32 %v2638, %v2662
      %v2687 = vmax.f32 %v2639, %v2663
      %v2688 = vmax.f32 %v2640, %v2664
      %v2689 = vmax.f32 %v2641, %v2665
      %v2690 = vmax.f32 %v2642, %v2666
      %2691 = vst [vmem:[#allocation2] sm:$0xff] %v2667
      %2692 = vst [vmem:[#allocation2 + $0x8] sm:$0xff] %v2668
      %2693 = vst [vmem:[#allocation2 + $0x10] sm:$0xff] %v2669
      %2694 = vst [vmem:[#allocation2 + $0x60] sm:$0xff] %v2670
      %2695 = vst [vmem:[#allocation2 + $0x68] sm:$0xff] %v2671
      %2696 = vst [vmem:[#allocation2 + $0x70] sm:$0xff] %v2672
      %2697 = vst [vmem:[#allocation2 + $0x18] sm:$0xff] %v2673
      %2698 = vst [vmem:[#allocation2 + $0x20] sm:$0xff] %v2674
      %2699 = vst [vmem:[#allocation2 + $0x28] sm:$0xff] %v2675
      %2700 = vst [vmem:[#allocation2 + $0x78] sm:$0xff] %v2676
      %2701 = vst [vmem:[#allocation2 + $0x80] sm:$0xff] %v2677
      %2702 = vst [vmem:[#allocation2 + $0x88] sm:$0xff] %v2678
      %2703 = vst [vmem:[#allocation2 + $0x30] sm:$0xff] %v2679
      %2704 = vst [vmem:[#allocation2 + $0x38] sm:$0xff] %v2680
      %2705 = vst [vmem:[#allocation2 + $0x40] sm:$0xff] %v2681
      %2706 = vst [vmem:[#allocation2 + $0x90] sm:$0xff] %v2682
      %2707 = vst [vmem:[#allocation2 + $0x98] sm:$0xff] %v2683
      %2708 = vst [vmem:[#allocation2 + $0xa0] sm:$0xff] %v2684
      %2709 = vst [vmem:[#allocation2 + $0x48] sm:$0xff] %v2685
      %2710 = vst [vmem:[#allocation2 + $0x50] sm:$0xff] %v2686
      %2711 = vst [vmem:[#allocation2 + $0x58] sm:$0xff] %v2687
      %2712 = vst [vmem:[#allocation2 + $0xa8] sm:$0xff] %v2688
      %2713 = vst [vmem:[#allocation2 + $0xb0] sm:$0xff] %v2689
      %2714 = vst [vmem:[#allocation2 + $0xb8] sm:$0xff] %v2690
      %v2715 = vld [vmem:[#allocation2] sm:$0xff]
      %v2716 = vld [vmem:[#allocation2 + $0x8] sm:$0xff]
      %v2717 = vld [vmem:[#allocation2 + $0x10] sm:$0xff]
      %v2718 = vld [vmem:[#allocation2 + $0x18] sm:$0xff]
      %v2719 = vld [vmem:[#allocation2 + $0x20] sm:$0xff]
      %v2720 = vld [vmem:[#allocation2 + $0x28] sm:$0xff]
      %v2721 = vld [vmem:[#allocation2 + $0x30] sm:$0xff]
      %v2722 = vld [vmem:[#allocation2 + $0x38] sm:$0xff]
      %v2723 = vld [vmem:[#allocation2 + $0x40] sm:$0xff]
      %v2724 = vpack.c.bf16 %v2718, %v2715
      %v2725 = vpack.c.bf16 %v2719, %v2716
      %v2726 = vpack.c.bf16 %v2720, %v2717
      %v2727 = vpack.c.bf16 %v2721, %v2721
      %v2728 = vpack.c.bf16 %v2722, %v2722
      %v2729 = vpack.c.bf16 %v2723, %v2723
      %v2730 = vld [vmem:[%s3] sm:$0xff]
      %v2731 = vld [vmem:[%s3 + $0x8] sm:$0xff]
      %v2732 = vld [vmem:[%s3 + $0x10] sm:$0xff]
      %v2733 = vld [vmem:[%s3 + $0x18] sm:$0xff]
      %v2734 = vld [vmem:[%s3 + $0x20] sm:$0xff]
      %v2735 = vld [vmem:[%s3 + $0x28] sm:$0xff]
      %v2736 = vld [vmem:[%s3 + $0x30] sm:$0xff]
      %v2737 = vld [vmem:[%s3 + $0x38] sm:$0xff]
      %v2738 = vld [vmem:[%s3 + $0x40] sm:$0xff]
      %v2739 = vld [vmem:[%s3 + $0x48] sm:$0xff]
      %v2740 = vld [vmem:[%s3 + $0x50] sm:$0xff]
      %v2741 = vld [vmem:[%s3 + $0x58] sm:$0xff]
      %v2742 = vld [vmem:[%s3 + $0x60] sm:$0xff]
      %v2743 = vld [vmem:[%s3 + $0x68] sm:$0xff]
      %v2744 = vld [vmem:[%s3 + $0x70] sm:$0xff]
      %v2745 = vld [vmem:[%s3 + $0x78] sm:$0xff]
      %v2746 = vld [vmem:[%s3 + $0x80] sm:$0xff]
      %v2747 = vld [vmem:[%s3 + $0x88] sm:$0xff]
      %v2748 = vld [vmem:[%s3 + $0x90] sm:$0xff]
      %v2749 = vld [vmem:[%s3 + $0x98] sm:$0xff]
      %v2750 = vld [vmem:[%s3 + $0xa0] sm:$0xff]
      %v2751 = vld [vmem:[%s3 + $0xa8] sm:$0xff]
      %v2752 = vld [vmem:[%s3 + $0xb0] sm:$0xff]
      %v2753 = vld [vmem:[%s3 + $0xb8] sm:$0xff]
      %v2754 = vld [vmem:[%s3 + $0xc0] sm:$0xff]
      %v2755 = vld [vmem:[%s3 + $0xc8] sm:$0xff]
      %v2756 = vld [vmem:[%s3 + $0xd0] sm:$0xff]
      %v2757 = vld [vmem:[%s3 + $0xd8] sm:$0xff]
      %v2758 = vld [vmem:[%s3 + $0xe0] sm:$0xff]
      %v2759 = vld [vmem:[%s3 + $0xe8] sm:$0xff]
      %v2760 = vld [vmem:[%s3 + $0xf0] sm:$0xff]
      %v2761 = vld [vmem:[%s3 + $0xf8] sm:$0xff]
      %v2762 = vld [vmem:[%s3 + $0x100] sm:$0xff]
      %v2763 = vld [vmem:[%s3 + $0x108] sm:$0xff]
      %v2764 = vld [vmem:[%s3 + $0x110] sm:$0xff]
      %v2765 = vld [vmem:[%s3 + $0x118] sm:$0xff]
      %v2766 = vld [vmem:[%s3 + $0x120] sm:$0xff]
      %v2767 = vld [vmem:[%s3 + $0x128] sm:$0xff]
      %v2768 = vld [vmem:[%s3 + $0x130] sm:$0xff]
      %v2769 = vld [vmem:[%s3 + $0x138] sm:$0xff]
      %v2770 = vld [vmem:[%s3 + $0x140] sm:$0xff]
      %v2771 = vld [vmem:[%s3 + $0x148] sm:$0xff]
      %v2772 = vld [vmem:[%s3 + $0x150] sm:$0xff]
      %v2773 = vld [vmem:[%s3 + $0x158] sm:$0xff]
      %v2774 = vld [vmem:[%s3 + $0x160] sm:$0xff]
      %v2775 = vld [vmem:[%s3 + $0x168] sm:$0xff]
      %v2776 = vld [vmem:[%s3 + $0x170] sm:$0xff]
      %v2777 = vld [vmem:[%s3 + $0x178] sm:$0xff]
      %v2778 = vld [vmem:[#allocation2 + $0x60] sm:$0xff]
      %v2779 = vld [vmem:[#allocation2 + $0x68] sm:$0xff]
      %v2780 = vld [vmem:[#allocation2 + $0x70] sm:$0xff]
      %v2781 = vld [vmem:[#allocation2 + $0x78] sm:$0xff]
      %v2782 = vld [vmem:[#allocation2 + $0x80] sm:$0xff]
      %v2783 = vld [vmem:[#allocation2 + $0x88] sm:$0xff]
      %v2784 = vld [vmem:[#allocation2 + $0x90] sm:$0xff]
      %v2785 = vld [vmem:[#allocation2 + $0x98] sm:$0xff]
      %v2786 = vld [vmem:[#allocation2 + $0xa0] sm:$0xff]
      %v2787 = vpack.c.bf16 %v2781, %v2778
      %v2788 = vpack.c.bf16 %v2782, %v2779
      %v2789 = vpack.c.bf16 %v2783, %v2780
      %v2790 = vpack.c.bf16 %v2784, %v2784
      %v2791 = vpack.c.bf16 %v2785, %v2785
      %v2792 = vpack.c.bf16 %v2786, %v2786
      %s2793 = scalar_lea.vmem %s3, 384
      %v2794 = vld [vmem:[%s2793] sm:$0xff]
      %v2795 = vld [vmem:[%s2793 + $0x8] sm:$0xff]
      %v2796 = vld [vmem:[%s2793 + $0x10] sm:$0xff]
      %v2797 = vld [vmem:[%s2793 + $0x18] sm:$0xff]
      %v2798 = vld [vmem:[%s2793 + $0x20] sm:$0xff]
      %v2799 = vld [vmem:[%s2793 + $0x28] sm:$0xff]
      %v2800 = vld [vmem:[%s2793 + $0x30] sm:$0xff]
      %v2801 = vld [vmem:[%s2793 + $0x38] sm:$0xff]
      %v2802 = vld [vmem:[%s2793 + $0x40] sm:$0xff]
      %v2803 = vld [vmem:[%s2793 + $0x48] sm:$0xff]
      %v2804 = vld [vmem:[%s2793 + $0x50] sm:$0xff]
      %v2805 = vld [vmem:[%s2793 + $0x58] sm:$0xff]
      %v2806 = vld [vmem:[%s2793 + $0x60] sm:$0xff]
      %v2807 = vld [vmem:[%s2793 + $0x68] sm:$0xff]
      %v2808 = vld [vmem:[%s2793 + $0x70] sm:$0xff]
      %v2809 = vld [vmem:[%s2793 + $0x78] sm:$0xff]
      %v2810 = vld [vmem:[%s2793 + $0x80] sm:$0xff]
      %v2811 = vld [vmem:[%s2793 + $0x88] sm:$0xff]
      %v2812 = vld [vmem:[%s2793 + $0x90] sm:$0xff]
      %v2813 = vld [vmem:[%s2793 + $0x98] sm:$0xff]
      %v2814 = vld [vmem:[%s2793 + $0xa0] sm:$0xff]
      %v2815 = vld [vmem:[%s2793 + $0xa8] sm:$0xff]
      %v2816 = vld [vmem:[%s2793 + $0xb0] sm:$0xff]
      %v2817 = vld [vmem:[%s2793 + $0xb8] sm:$0xff]
      %v2818 = vld [vmem:[%s2793 + $0xc0] sm:$0xff]
      %v2819 = vld [vmem:[%s2793 + $0xc8] sm:$0xff]
      %v2820 = vld [vmem:[%s2793 + $0xd0] sm:$0xff]
      %v2821 = vld [vmem:[%s2793 + $0xd8] sm:$0xff]
      %v2822 = vld [vmem:[%s2793 + $0xe0] sm:$0xff]
      %v2823 = vld [vmem:[%s2793 + $0xe8] sm:$0xff]
      %v2824 = vld [vmem:[%s2793 + $0xf0] sm:$0xff]
      %v2825 = vld [vmem:[%s2793 + $0xf8] sm:$0xff]
      %v2826 = vld [vmem:[%s2793 + $0x100] sm:$0xff]
      %v2827 = vld [vmem:[%s2793 + $0x108] sm:$0xff]
      %v2828 = vld [vmem:[%s2793 + $0x110] sm:$0xff]
      %v2829 = vld [vmem:[%s2793 + $0x118] sm:$0xff]
      %v2830 = vld [vmem:[%s2793 + $0x120] sm:$0xff]
      %v2831 = vld [vmem:[%s2793 + $0x128] sm:$0xff]
      %v2832 = vld [vmem:[%s2793 + $0x130] sm:$0xff]
      %v2833 = vld [vmem:[%s2793 + $0x138] sm:$0xff]
      %v2834 = vld [vmem:[%s2793 + $0x140] sm:$0xff]
      %v2835 = vld [vmem:[%s2793 + $0x148] sm:$0xff]
      %v2836 = vld [vmem:[%s2793 + $0x150] sm:$0xff]
      %v2837 = vld [vmem:[%s2793 + $0x158] sm:$0xff]
      %v2838 = vld [vmem:[%s2793 + $0x160] sm:$0xff]
      %v2839 = vld [vmem:[%s2793 + $0x168] sm:$0xff]
      %v2840 = vld [vmem:[%s2793 + $0x170] sm:$0xff]
      %v2841 = vld [vmem:[%s2793 + $0x178] sm:$0xff]
      %v2890 = vunpack.c.l.b16 %v2794
      %v2891 = vunpack.c.h.b16 %v2794
      %v2892 = vunpack.c.l.b16 %v2795
      %v2893 = vunpack.c.h.b16 %v2795
      %v2894 = vunpack.c.l.b16 %v2796
      %v2895 = vunpack.c.h.b16 %v2796
      %v2896 = vunpack.c.l.b16 %v2797
      %v2897 = vunpack.c.h.b16 %v2797
      %v2898 = vunpack.c.l.b16 %v2798
      %v2899 = vunpack.c.h.b16 %v2798
      %v2900 = vunpack.c.l.b16 %v2799
      %v2901 = vunpack.c.h.b16 %v2799
      %v2902 = vunpack.c.l.b16 %v2800
      %v2903 = vunpack.c.h.b16 %v2800
      %v2904 = vunpack.c.l.b16 %v2801
      %v2905 = vunpack.c.h.b16 %v2801
      %v2906 = vunpack.c.l.b16 %v2802
      %v2907 = vunpack.c.h.b16 %v2802
      %v2908 = vunpack.c.l.b16 %v2803
      %v2909 = vunpack.c.h.b16 %v2803
      %v2910 = vunpack.c.l.b16 %v2804
      %v2911 = vunpack.c.h.b16 %v2804
      %v2912 = vunpack.c.l.b16 %v2805
      %v2913 = vunpack.c.h.b16 %v2805
      %v2914 = vunpack.c.l.b16 %v2806
      %v2915 = vunpack.c.h.b16 %v2806
      %v2916 = vunpack.c.l.b16 %v2807
      %v2917 = vunpack.c.h.b16 %v2807
      %v2918 = vunpack.c.l.b16 %v2808
      %v2919 = vunpack.c.h.b16 %v2808
      %v2920 = vunpack.c.l.b16 %v2809
      %v2921 = vunpack.c.h.b16 %v2809
      %v2922 = vunpack.c.l.b16 %v2810
      %v2923 = vunpack.c.h.b16 %v2810
      %v2924 = vunpack.c.l.b16 %v2811
      %v2925 = vunpack.c.h.b16 %v2811
      %v2926 = vunpack.c.l.b16 %v2812
      %v2927 = vunpack.c.h.b16 %v2812
      %v2928 = vunpack.c.l.b16 %v2813
      %v2929 = vunpack.c.h.b16 %v2813
      %v2930 = vunpack.c.l.b16 %v2814
      %v2931 = vunpack.c.h.b16 %v2814
      %v2932 = vunpack.c.l.b16 %v2815
      %v2933 = vunpack.c.h.b16 %v2815
      %v2934 = vunpack.c.l.b16 %v2816
      %v2935 = vunpack.c.h.b16 %v2816
      %v2936 = vunpack.c.l.b16 %v2817
      %v2937 = vunpack.c.h.b16 %v2817
      %v2938 = vunpack.c.l.b16 %v2818
      %v2939 = vunpack.c.h.b16 %v2818
      %v2940 = vunpack.c.l.b16 %v2819
      %v2941 = vunpack.c.h.b16 %v2819
      %v2942 = vunpack.c.l.b16 %v2820
      %v2943 = vunpack.c.h.b16 %v2820
      %v2944 = vunpack.c.l.b16 %v2821
      %v2945 = vunpack.c.h.b16 %v2821
      %v2946 = vunpack.c.l.b16 %v2822
      %v2947 = vunpack.c.h.b16 %v2822
      %v2948 = vunpack.c.l.b16 %v2823
      %v2949 = vunpack.c.h.b16 %v2823
      %v2950 = vunpack.c.l.b16 %v2824
      %v2951 = vunpack.c.h.b16 %v2824
      %v2952 = vunpack.c.l.b16 %v2825
      %v2953 = vunpack.c.h.b16 %v2825
      %v2954 = vunpack.c.l.b16 %v2826
      %v2955 = vunpack.c.h.b16 %v2826
      %v2956 = vunpack.c.l.b16 %v2827
      %v2957 = vunpack.c.h.b16 %v2827
      %v2958 = vunpack.c.l.b16 %v2828
      %v2959 = vunpack.c.h.b16 %v2828
      %v2960 = vunpack.c.l.b16 %v2829
      %v2961 = vunpack.c.h.b16 %v2829
      %v2962 = vunpack.c.l.b16 %v2830
      %v2963 = vunpack.c.h.b16 %v2830
      %v2964 = vunpack.c.l.b16 %v2831
      %v2965 = vunpack.c.h.b16 %v2831
      %v2966 = vunpack.c.l.b16 %v2832
      %v2967 = vunpack.c.h.b16 %v2832
      %v2968 = vunpack.c.l.b16 %v2833
      %v2969 = vunpack.c.h.b16 %v2833
      %v2970 = vunpack.c.l.b16 %v2834
      %v2971 = vunpack.c.h.b16 %v2834
      %v2972 = vunpack.c.l.b16 %v2835
      %v2973 = vunpack.c.h.b16 %v2835
      %v2974 = vunpack.c.l.b16 %v2836
      %v2975 = vunpack.c.h.b16 %v2836
      %v2976 = vunpack.c.l.b16 %v2837
      %v2977 = vunpack.c.h.b16 %v2837
      %v2978 = vunpack.c.l.b16 %v2838
      %v2979 = vunpack.c.h.b16 %v2838
      %v2980 = vunpack.c.l.b16 %v2839
      %v2981 = vunpack.c.h.b16 %v2839
      %v2982 = vunpack.c.l.b16 %v2840
      %v2983 = vunpack.c.h.b16 %v2840
      %v2984 = vunpack.c.l.b16 %v2841
      %v2985 = vunpack.c.h.b16 %v2841
      %v2986 = vpack.c.b16 %v2892, %v2890
      %v2987 = vpack.c.b16 %v2893, %v2891
      %v2988 = vpack.c.b16 %v2896, %v2894
      %v2989 = vpack.c.b16 %v2897, %v2895
      %v2990 = vpack.c.b16 %v2900, %v2898
      %v2991 = vpack.c.b16 %v2901, %v2899
      %v2992 = vpack.c.b16 %v2904, %v2902
      %v2993 = vpack.c.b16 %v2905, %v2903
      %v2994 = vpack.c.b16 %v2908, %v2906
      %v2995 = vpack.c.b16 %v2909, %v2907
      %v2996 = vpack.c.b16 %v2912, %v2910
      %v2997 = vpack.c.b16 %v2913, %v2911
      %v2998 = vpack.c.b16 %v2916, %v2914
      %v2999 = vpack.c.b16 %v2917, %v2915
      %v3000 = vpack.c.b16 %v2920, %v2918
      %v3001 = vpack.c.b16 %v2921, %v2919
      %v3002 = vpack.c.b16 %v2924, %v2922
      %v3003 = vpack.c.b16 %v2925, %v2923
      %v3004 = vpack.c.b16 %v2928, %v2926
      %v3005 = vpack.c.b16 %v2929, %v2927
      %v3006 = vpack.c.b16 %v2932, %v2930
      %v3007 = vpack.c.b16 %v2933, %v2931
      %v3008 = vpack.c.b16 %v2936, %v2934
      %v3009 = vpack.c.b16 %v2937, %v2935
      %v3010 = vpack.c.b16 %v2940, %v2938
      %v3011 = vpack.c.b16 %v2941, %v2939
      %v3012 = vpack.c.b16 %v2944, %v2942
      %v3013 = vpack.c.b16 %v2945, %v2943
      %v3014 = vpack.c.b16 %v2948, %v2946
      %v3015 = vpack.c.b16 %v2949, %v2947
      %v3016 = vpack.c.b16 %v2952, %v2950
      %v3017 = vpack.c.b16 %v2953, %v2951
      %v3018 = vpack.c.b16 %v2956, %v2954
      %v3019 = vpack.c.b16 %v2957, %v2955
      %v3020 = vpack.c.b16 %v2960, %v2958
      %v3021 = vpack.c.b16 %v2961, %v2959
      %v3022 = vpack.c.b16 %v2964, %v2962
      %v3023 = vpack.c.b16 %v2965, %v2963
      %v3024 = vpack.c.b16 %v2968, %v2966
      %v3025 = vpack.c.b16 %v2969, %v2967
      %v3026 = vpack.c.b16 %v2972, %v2970
      %v3027 = vpack.c.b16 %v2973, %v2971
      %v3028 = vpack.c.b16 %v2976, %v2974
      %v3029 = vpack.c.b16 %v2977, %v2975
      %v3030 = vpack.c.b16 %v2980, %v2978
      %v3031 = vpack.c.b16 %v2981, %v2979
      %v3032 = vpack.c.b16 %v2984, %v2982
      %v3033 = vpack.c.b16 %v2985, %v2983
      %3082 = vmatpush.bf16.msra.mxu0 %v3000
      %3083 = vmatpush.bf16.msra.mxu0 %v2998
      %3084 = vmatpush.bf16.msra.mxu0 %v2996
      %3085 = vmatpush.bf16.msra.mxu0 %v2994
      %3086 = vmatpush.bf16.msra.mxu0 %v2992
      %3087 = vmatpush.bf16.msra.mxu0 %v2990
      %3088 = vmatpush.bf16.msra.mxu0 %v2988
      %3089 = vmatpush.bf16.msra.mxu0 %v2986
      %3090 = vmatmul.bf16.gmra.mxu0 %v2787
      %v3091 = vpop.f32.mrf.mxu0
      %v3092 = vadd.f32 0.0, %v3091
      %v3093 = vpop.f32.mrf.mxu0
      %v3094 = vadd.f32 0.0, %v3093
      %3095 = vmatmul.bf16.gmra.mxu0 %v2790
      %v3096 = vpop.f32.mrf.mxu0
      %v3097 = vadd.f32 0.0, %v3096
      %v3098 = vpop.f32.mrf.mxu0
      %3099 = vdwg.mxu0
      %3100 = vmatpush.bf16.msra.mxu0 %v3016
      %3101 = vmatpush.bf16.msra.mxu0 %v3014
      %3102 = vmatpush.bf16.msra.mxu0 %v3012
      %3103 = vmatpush.bf16.msra.mxu0 %v3010
      %3104 = vmatpush.bf16.msra.mxu0 %v3008
      %3105 = vmatpush.bf16.msra.mxu0 %v3006
      %3106 = vmatpush.bf16.msra.mxu0 %v3004
      %3107 = vmatpush.bf16.msra.mxu0 %v3002
      %3108 = vmatmul.bf16.gmra.mxu0 %v2788
      %v3109 = vpop.f32.mrf.mxu0
      %v3110 = vadd.f32 %v3092, %v3109
      %v3111 = vpop.f32.mrf.mxu0
      %v3112 = vadd.f32 %v3094, %v3111
      %3113 = vmatmul.bf16.gmra.mxu0 %v2791
      %v3114 = vpop.f32.mrf.mxu0
      %v3115 = vadd.f32 %v3097, %v3114
      %v3116 = vpop.f32.mrf.mxu0
      %3117 = vdwg.mxu0
      %3118 = vmatpush.bf16.msra.mxu0 %v3032
      %3119 = vmatpush.bf16.msra.mxu0 %v3030
      %3120 = vmatpush.bf16.msra.mxu0 %v3028
      %3121 = vmatpush.bf16.msra.mxu0 %v3026
      %3122 = vmatpush.bf16.msra.mxu0 %v3024
      %3123 = vmatpush.bf16.msra.mxu0 %v3022
      %3124 = vmatpush.bf16.msra.mxu0 %v3020
      %3125 = vmatpush.bf16.msra.mxu0 %v3018
      %3126 = vmatmul.bf16.gmra.mxu0 %v2789
      %v3127 = vpop.f32.mrf.mxu0
      %v3128 = vadd.f32 %v3110, %v3127
      %v3129 = vpop.f32.mrf.mxu0
      %v3130 = vadd.f32 %v3112, %v3129
      %3131 = vmatmul.bf16.gmra.mxu0 %v2792
      %v3132 = vpop.f32.mrf.mxu0
      %v3133 = vadd.f32 %v3115, %v3132
      %v3134 = vpop.f32.mrf.mxu0
      %3135 = vdwg.mxu0
      %3136 = vmatpush.bf16.msra.mxu0 %v3001
      %3137 = vmatpush.bf16.msra.mxu0 %v2999
      %3138 = vmatpush.bf16.msra.mxu0 %v2997
      %3139 = vmatpush.bf16.msra.mxu0 %v2995
      %3140 = vmatpush.bf16.msra.mxu0 %v2993
      %3141 = vmatpush.bf16.msra.mxu0 %v2991
      %3142 = vmatpush.bf16.msra.mxu0 %v2989
      %3143 = vmatpush.bf16.msra.mxu0 %v2987
      %3144 = vmatmul.bf16.gmra.mxu0 %v2787
      %v3145 = vpop.f32.mrf.mxu0
      %v3146 = vadd.f32 0.0, %v3145
      %v3147 = vpop.f32.mrf.mxu0
      %v3148 = vadd.f32 0.0, %v3147
      %3149 = vmatmul.bf16.gmra.mxu0 %v2790
      %v3150 = vpop.f32.mrf.mxu0
      %v3151 = vadd.f32 0.0, %v3150
      %v3152 = vpop.f32.mrf.mxu0
      %3153 = vdwg.mxu0
      %3154 = vmatpush.bf16.msra.mxu0 %v3017
      %3155 = vmatpush.bf16.msra.mxu0 %v3015
      %3156 = vmatpush.bf16.msra.mxu0 %v3013
      %3157 = vmatpush.bf16.msra.mxu0 %v3011
      %3158 = vmatpush.bf16.msra.mxu0 %v3009
      %3159 = vmatpush.bf16.msra.mxu0 %v3007
      %3160 = vmatpush.bf16.msra.mxu0 %v3005
      %3161 = vmatpush.bf16.msra.mxu0 %v3003
      %3162 = vmatmul.bf16.gmra.mxu0 %v2788
      %v3163 = vpop.f32.mrf.mxu0
      %v3164 = vadd.f32 %v3146, %v3163
      %v3165 = vpop.f32.mrf.mxu0
      %v3166 = vadd.f32 %v3148, %v3165
      %3167 = vmatmul.bf16.gmra.mxu0 %v2791
      %v3168 = vpop.f32.mrf.mxu0
      %v3169 = vadd.f32 %v3151, %v3168
      %v3170 = vpop.f32.mrf.mxu0
      %3171 = vdwg.mxu0
      %3172 = vmatpush.bf16.msra.mxu0 %v3033
      %3173 = vmatpush.bf16.msra.mxu0 %v3031
      %3174 = vmatpush.bf16.msra.mxu0 %v3029
      %3175 = vmatpush.bf16.msra.mxu0 %v3027
      %3176 = vmatpush.bf16.msra.mxu0 %v3025
      %3177 = vmatpush.bf16.msra.mxu0 %v3023
      %3178 = vmatpush.bf16.msra.mxu0 %v3021
      %3179 = vmatpush.bf16.msra.mxu0 %v3019
      %3180 = vmatmul.bf16.gmra.mxu0 %v2789
      %v3181 = vpop.f32.mrf.mxu0
      %v3182 = vadd.f32 %v3164, %v3181
      %v3183 = vpop.f32.mrf.mxu0
      %v3184 = vadd.f32 %v3166, %v3183
      %3185 = vmatmul.bf16.gmra.mxu0 %v2792
      %v3186 = vpop.f32.mrf.mxu0
      %v3187 = vadd.f32 %v3169, %v3186
      %v3188 = vpop.f32.mrf.mxu0
      %3189 = vdwg.mxu0
      %v3238 = vunpack.c.l.b16 %v2730
      %v3239 = vunpack.c.h.b16 %v2730
      %v3240 = vunpack.c.l.b16 %v2731
      %v3241 = vunpack.c.h.b16 %v2731
      %v3242 = vunpack.c.l.b16 %v2732
      %v3243 = vunpack.c.h.b16 %v2732
      %v3244 = vunpack.c.l.b16 %v2733
      %v3245 = vunpack.c.h.b16 %v2733
      %v3246 = vunpack.c.l.b16 %v2734
      %v3247 = vunpack.c.h.b16 %v2734
      %v3248 = vunpack.c.l.b16 %v2735
      %v3249 = vunpack.c.h.b16 %v2735
      %v3250 = vunpack.c.l.b16 %v2736
      %v3251 = vunpack.c.h.b16 %v2736
      %v3252 = vunpack.c.l.b16 %v2737
      %v3253 = vunpack.c.h.b16 %v2737
      %v3254 = vunpack.c.l.b16 %v2738
      %v3255 = vunpack.c.h.b16 %v2738
      %v3256 = vunpack.c.l.b16 %v2739
      %v3257 = vunpack.c.h.b16 %v2739
      %v3258 = vunpack.c.l.b16 %v2740
      %v3259 = vunpack.c.h.b16 %v2740
      %v3260 = vunpack.c.l.b16 %v2741
      %v3261 = vunpack.c.h.b16 %v2741
      %v3262 = vunpack.c.l.b16 %v2742
      %v3263 = vunpack.c.h.b16 %v2742
      %v3264 = vunpack.c.l.b16 %v2743
      %v3265 = vunpack.c.h.b16 %v2743
      %v3266 = vunpack.c.l.b16 %v2744
      %v3267 = vunpack.c.h.b16 %v2744
      %v3268 = vunpack.c.l.b16 %v2745
      %v3269 = vunpack.c.h.b16 %v2745
      %v3270 = vunpack.c.l.b16 %v2746
      %v3271 = vunpack.c.h.b16 %v2746
      %v3272 = vunpack.c.l.b16 %v2747
      %v3273 = vunpack.c.h.b16 %v2747
      %v3274 = vunpack.c.l.b16 %v2748
      %v3275 = vunpack.c.h.b16 %v2748
      %v3276 = vunpack.c.l.b16 %v2749
      %v3277 = vunpack.c.h.b16 %v2749
      %v3278 = vunpack.c.l.b16 %v2750
      %v3279 = vunpack.c.h.b16 %v2750
      %v3280 = vunpack.c.l.b16 %v2751
      %v3281 = vunpack.c.h.b16 %v2751
      %v3282 = vunpack.c.l.b16 %v2752
      %v3283 = vunpack.c.h.b16 %v2752
      %v3284 = vunpack.c.l.b16 %v2753
      %v3285 = vunpack.c.h.b16 %v2753
      %v3286 = vunpack.c.l.b16 %v2754
      %v3287 = vunpack.c.h.b16 %v2754
      %v3288 = vunpack.c.l.b16 %v2755
      %v3289 = vunpack.c.h.b16 %v2755
      %v3290 = vunpack.c.l.b16 %v2756
      %v3291 = vunpack.c.h.b16 %v2756
      %v3292 = vunpack.c.l.b16 %v2757
      %v3293 = vunpack.c.h.b16 %v2757
      %v3294 = vunpack.c.l.b16 %v2758
      %v3295 = vunpack.c.h.b16 %v2758
      %v3296 = vunpack.c.l.b16 %v2759
      %v3297 = vunpack.c.h.b16 %v2759
      %v3298 = vunpack.c.l.b16 %v2760
      %v3299 = vunpack.c.h.b16 %v2760
      %v3300 = vunpack.c.l.b16 %v2761
      %v3301 = vunpack.c.h.b16 %v2761
      %v3302 = vunpack.c.l.b16 %v2762
      %v3303 = vunpack.c.h.b16 %v2762
      %v3304 = vunpack.c.l.b16 %v2763
      %v3305 = vunpack.c.h.b16 %v2763
      %v3306 = vunpack.c.l.b16 %v2764
      %v3307 = vunpack.c.h.b16 %v2764
      %v3308 = vunpack.c.l.b16 %v2765
      %v3309 = vunpack.c.h.b16 %v2765
      %v3310 = vunpack.c.l.b16 %v2766
      %v3311 = vunpack.c.h.b16 %v2766
      %v3312 = vunpack.c.l.b16 %v2767
      %v3313 = vunpack.c.h.b16 %v2767
      %v3314 = vunpack.c.l.b16 %v2768
      %v3315 = vunpack.c.h.b16 %v2768
      %v3316 = vunpack.c.l.b16 %v2769
      %v3317 = vunpack.c.h.b16 %v2769
      %v3318 = vunpack.c.l.b16 %v2770
      %v3319 = vunpack.c.h.b16 %v2770
      %v3320 = vunpack.c.l.b16 %v2771
      %v3321 = vunpack.c.h.b16 %v2771
      %v3322 = vunpack.c.l.b16 %v2772
      %v3323 = vunpack.c.h.b16 %v2772
      %v3324 = vunpack.c.l.b16 %v2773
      %v3325 = vunpack.c.h.b16 %v2773
      %v3326 = vunpack.c.l.b16 %v2774
      %v3327 = vunpack.c.h.b16 %v2774
      %v3328 = vunpack.c.l.b16 %v2775
      %v3329 = vunpack.c.h.b16 %v2775
      %v3330 = vunpack.c.l.b16 %v2776
      %v3331 = vunpack.c.h.b16 %v2776
      %v3332 = vunpack.c.l.b16 %v2777
      %v3333 = vunpack.c.h.b16 %v2777
      %v3334 = vpack.c.b16 %v3240, %v3238
      %v3335 = vpack.c.b16 %v3241, %v3239
      %v3336 = vpack.c.b16 %v3244, %v3242
      %v3337 = vpack.c.b16 %v3245, %v3243
      %v3338 = vpack.c.b16 %v3248, %v3246
      %v3339 = vpack.c.b16 %v3249, %v3247
      %v3340 = vpack.c.b16 %v3252, %v3250
      %v3341 = vpack.c.b16 %v3253, %v3251
      %v3342 = vpack.c.b16 %v3256, %v3254
      %v3343 = vpack.c.b16 %v3257, %v3255
      %v3344 = vpack.c.b16 %v3260, %v3258
      %v3345 = vpack.c.b16 %v3261, %v3259
      %v3346 = vpack.c.b16 %v3264, %v3262
      %v3347 = vpack.c.b16 %v3265, %v3263
      %v3348 = vpack.c.b16 %v3268, %v3266
      %v3349 = vpack.c.b16 %v3269, %v3267
      %v3350 = vpack.c.b16 %v3272, %v3270
      %v3351 = vpack.c.b16 %v3273, %v3271
      %v3352 = vpack.c.b16 %v3276, %v3274
      %v3353 = vpack.c.b16 %v3277, %v3275
      %v3354 = vpack.c.b16 %v3280, %v3278
      %v3355 = vpack.c.b16 %v3281, %v3279
      %v3356 = vpack.c.b16 %v3284, %v3282
      %v3357 = vpack.c.b16 %v3285, %v3283
      %v3358 = vpack.c.b16 %v3288, %v3286
      %v3359 = vpack.c.b16 %v3289, %v3287
      %v3360 = vpack.c.b16 %v3292, %v3290
      %v3361 = vpack.c.b16 %v3293, %v3291
      %v3362 = vpack.c.b16 %v3296, %v3294
      %v3363 = vpack.c.b16 %v3297, %v3295
      %v3364 = vpack.c.b16 %v3300, %v3298
      %v3365 = vpack.c.b16 %v3301, %v3299
      %v3366 = vpack.c.b16 %v3304, %v3302
      %v3367 = vpack.c.b16 %v3305, %v3303
      %v3368 = vpack.c.b16 %v3308, %v3306
      %v3369 = vpack.c.b16 %v3309, %v3307
      %v3370 = vpack.c.b16 %v3312, %v3310
      %v3371 = vpack.c.b16 %v3313, %v3311
      %v3372 = vpack.c.b16 %v3316, %v3314
      %v3373 = vpack.c.b16 %v3317, %v3315
      %v3374 = vpack.c.b16 %v3320, %v3318
      %v3375 = vpack.c.b16 %v3321, %v3319
      %v3376 = vpack.c.b16 %v3324, %v3322
      %v3377 = vpack.c.b16 %v3325, %v3323
      %v3378 = vpack.c.b16 %v3328, %v3326
      %v3379 = vpack.c.b16 %v3329, %v3327
      %v3380 = vpack.c.b16 %v3332, %v3330
      %v3381 = vpack.c.b16 %v3333, %v3331
      %3430 = vmatpush.bf16.msra.mxu0 %v3348
      %3431 = vmatpush.bf16.msra.mxu0 %v3346
      %3432 = vmatpush.bf16.msra.mxu0 %v3344
      %3433 = vmatpush.bf16.msra.mxu0 %v3342
      %3434 = vmatpush.bf16.msra.mxu0 %v3340
      %3435 = vmatpush.bf16.msra.mxu0 %v3338
      %3436 = vmatpush.bf16.msra.mxu0 %v3336
      %3437 = vmatpush.bf16.msra.mxu0 %v3334
      %3438 = vmatmul.bf16.gmra.mxu0 %v2724
      %v3439 = vpop.f32.mrf.mxu0
      %v3440 = vadd.f32 %v3128, %v3439
      %v3441 = vpop.f32.mrf.mxu0
      %v3442 = vadd.f32 %v3130, %v3441
      %3443 = vmatmul.bf16.gmra.mxu0 %v2727
      %v3444 = vpop.f32.mrf.mxu0
      %v3445 = vadd.f32 %v3133, %v3444
      %v3446 = vpop.f32.mrf.mxu0
      %3447 = vdwg.mxu0
      %3448 = vmatpush.bf16.msra.mxu0 %v3364
      %3449 = vmatpush.bf16.msra.mxu0 %v3362
      %3450 = vmatpush.bf16.msra.mxu0 %v3360
      %3451 = vmatpush.bf16.msra.mxu0 %v3358
      %3452 = vmatpush.bf16.msra.mxu0 %v3356
      %3453 = vmatpush.bf16.msra.mxu0 %v3354
      %3454 = vmatpush.bf16.msra.mxu0 %v3352
      %3455 = vmatpush.bf16.msra.mxu0 %v3350
      %3456 = vmatmul.bf16.gmra.mxu0 %v2725
      %v3457 = vpop.f32.mrf.mxu0
      %v3458 = vadd.f32 %v3440, %v3457
      %v3459 = vpop.f32.mrf.mxu0
      %v3460 = vadd.f32 %v3442, %v3459
      %3461 = vmatmul.bf16.gmra.mxu0 %v2728
      %v3462 = vpop.f32.mrf.mxu0
      %v3463 = vadd.f32 %v3445, %v3462
      %v3464 = vpop.f32.mrf.mxu0
      %3465 = vdwg.mxu0
      %3466 = vmatpush.bf16.msra.mxu0 %v3380
      %3467 = vmatpush.bf16.msra.mxu0 %v3378
      %3468 = vmatpush.bf16.msra.mxu0 %v3376
      %3469 = vmatpush.bf16.msra.mxu0 %v3374
      %3470 = vmatpush.bf16.msra.mxu0 %v3372
      %3471 = vmatpush.bf16.msra.mxu0 %v3370
      %3472 = vmatpush.bf16.msra.mxu0 %v3368
      %3473 = vmatpush.bf16.msra.mxu0 %v3366
      %3474 = vmatmul.bf16.gmra.mxu0 %v2726
      %v3475 = vpop.f32.mrf.mxu0
      %v3476 = vadd.f32 %v3458, %v3475
      %v3477 = vpop.f32.mrf.mxu0
      %v3478 = vadd.f32 %v3460, %v3477
      %3479 = vmatmul.bf16.gmra.mxu0 %v2729
      %v3480 = vpop.f32.mrf.mxu0
      %v3481 = vadd.f32 %v3463, %v3480
      %v3482 = vpop.f32.mrf.mxu0
      %3483 = vdwg.mxu0
      %3484 = vmatpush.bf16.msra.mxu0 %v3349
      %3485 = vmatpush.bf16.msra.mxu0 %v3347
      %3486 = vmatpush.bf16.msra.mxu0 %v3345
      %3487 = vmatpush.bf16.msra.mxu0 %v3343
      %3488 = vmatpush.bf16.msra.mxu0 %v3341
      %3489 = vmatpush.bf16.msra.mxu0 %v3339
      %3490 = vmatpush.bf16.msra.mxu0 %v3337
      %3491 = vmatpush.bf16.msra.mxu0 %v3335
      %3492 = vmatmul.bf16.gmra.mxu0 %v2724
      %v3493 = vpop.f32.mrf.mxu0
      %v3494 = vadd.f32 %v3182, %v3493
      %v3495 = vpop.f32.mrf.mxu0
      %v3496 = vadd.f32 %v3184, %v3495
      %3497 = vmatmul.bf16.gmra.mxu0 %v2727
      %v3498 = vpop.f32.mrf.mxu0
      %v3499 = vadd.f32 %v3187, %v3498
      %v3500 = vpop.f32.mrf.mxu0
      %3501 = vdwg.mxu0
      %3502 = vmatpush.bf16.msra.mxu0 %v3365
      %3503 = vmatpush.bf16.msra.mxu0 %v3363
      %3504 = vmatpush.bf16.msra.mxu0 %v3361
      %3505 = vmatpush.bf16.msra.mxu0 %v3359
      %3506 = vmatpush.bf16.msra.mxu0 %v3357
      %3507 = vmatpush.bf16.msra.mxu0 %v3355
      %3508 = vmatpush.bf16.msra.mxu0 %v3353
      %3509 = vmatpush.bf16.msra.mxu0 %v3351
      %3510 = vmatmul.bf16.gmra.mxu0 %v2725
      %v3511 = vpop.f32.mrf.mxu0
      %v3512 = vadd.f32 %v3494, %v3511
      %v3513 = vpop.f32.mrf.mxu0
      %v3514 = vadd.f32 %v3496, %v3513
      %3515 = vmatmul.bf16.gmra.mxu0 %v2728
      %v3516 = vpop.f32.mrf.mxu0
      %v3517 = vadd.f32 %v3499, %v3516
      %v3518 = vpop.f32.mrf.mxu0
      %3519 = vdwg.mxu0
      %3520 = vmatpush.bf16.msra.mxu0 %v3381
      %3521 = vmatpush.bf16.msra.mxu0 %v3379
      %3522 = vmatpush.bf16.msra.mxu0 %v3377
      %3523 = vmatpush.bf16.msra.mxu0 %v3375
      %3524 = vmatpush.bf16.msra.mxu0 %v3373
      %3525 = vmatpush.bf16.msra.mxu0 %v3371
      %3526 = vmatpush.bf16.msra.mxu0 %v3369
      %3527 = vmatpush.bf16.msra.mxu0 %v3367
      %3528 = vmatmul.bf16.gmra.mxu0 %v2726
      %v3529 = vpop.f32.mrf.mxu0
      %v3530 = vadd.f32 %v3512, %v3529
      %v3531 = vpop.f32.mrf.mxu0
      %v3532 = vadd.f32 %v3514, %v3531
      %3533 = vmatmul.bf16.gmra.mxu0 %v2729
      %v3534 = vpop.f32.mrf.mxu0
      %v3535 = vadd.f32 %v3517, %v3534
      %v3536 = vpop.f32.mrf.mxu0
      %3537 = vdwg.mxu0
      %v3538 = vld [vmem:[#allocation2 + $0x18] sm:$0xff]
      %v3539 = vld [vmem:[#allocation2 + $0x20] sm:$0xff]
      %v3540 = vld [vmem:[#allocation2 + $0x28] sm:$0xff]
      %v3541 = vld [vmem:[#allocation2 + $0x30] sm:$0xff]
      %v3542 = vld [vmem:[#allocation2 + $0x38] sm:$0xff]
      %v3543 = vld [vmem:[#allocation2 + $0x40] sm:$0xff]
      %v3544 = vld [vmem:[#allocation2 + $0x48] sm:$0xff]
      %v3545 = vld [vmem:[#allocation2 + $0x50] sm:$0xff]
      %v3546 = vld [vmem:[#allocation2 + $0x58] sm:$0xff]
      %v3547 = vpack.c.bf16 %v3541, %v3538
      %v3548 = vpack.c.bf16 %v3542, %v3539
      %v3549 = vpack.c.bf16 %v3543, %v3540
      %v3550 = vpack.c.bf16 %v3544, %v3544
      %v3551 = vpack.c.bf16 %v3545, %v3545
      %v3552 = vpack.c.bf16 %v3546, %v3546
      %s3553 = scalar_lea.vmem %s3, 768
      %v3554 = vld [vmem:[%s3553] sm:$0xff]
      %v3555 = vld [vmem:[%s3553 + $0x8] sm:$0xff]
      %v3556 = vld [vmem:[%s3553 + $0x10] sm:$0xff]
      %v3557 = vld [vmem:[%s3553 + $0x18] sm:$0xff]
      %v3558 = vld [vmem:[%s3553 + $0x20] sm:$0xff]
      %v3559 = vld [vmem:[%s3553 + $0x28] sm:$0xff]
      %v3560 = vld [vmem:[%s3553 + $0x30] sm:$0xff]
      %v3561 = vld [vmem:[%s3553 + $0x38] sm:$0xff]
      %v3562 = vld [vmem:[%s3553 + $0x40] sm:$0xff]
      %v3563 = vld [vmem:[%s3553 + $0x48] sm:$0xff]
      %v3564 = vld [vmem:[%s3553 + $0x50] sm:$0xff]
      %v3565 = vld [vmem:[%s3553 + $0x58] sm:$0xff]
      %v3566 = vld [vmem:[%s3553 + $0x60] sm:$0xff]
      %v3567 = vld [vmem:[%s3553 + $0x68] sm:$0xff]
      %v3568 = vld [vmem:[%s3553 + $0x70] sm:$0xff]
      %v3569 = vld [vmem:[%s3553 + $0x78] sm:$0xff]
      %v3570 = vld [vmem:[%s3553 + $0x80] sm:$0xff]
      %v3571 = vld [vmem:[%s3553 + $0x88] sm:$0xff]
      %v3572 = vld [vmem:[%s3553 + $0x90] sm:$0xff]
      %v3573 = vld [vmem:[%s3553 + $0x98] sm:$0xff]
      %v3574 = vld [vmem:[%s3553 + $0xa0] sm:$0xff]
      %v3575 = vld [vmem:[%s3553 + $0xa8] sm:$0xff]
      %v3576 = vld [vmem:[%s3553 + $0xb0] sm:$0xff]
      %v3577 = vld [vmem:[%s3553 + $0xb8] sm:$0xff]
      %v3578 = vld [vmem:[%s3553 + $0xc0] sm:$0xff]
      %v3579 = vld [vmem:[%s3553 + $0xc8] sm:$0xff]
      %v3580 = vld [vmem:[%s3553 + $0xd0] sm:$0xff]
      %v3581 = vld [vmem:[%s3553 + $0xd8] sm:$0xff]
      %v3582 = vld [vmem:[%s3553 + $0xe0] sm:$0xff]
      %v3583 = vld [vmem:[%s3553 + $0xe8] sm:$0xff]
      %v3584 = vld [vmem:[%s3553 + $0xf0] sm:$0xff]
      %v3585 = vld [vmem:[%s3553 + $0xf8] sm:$0xff]
      %v3586 = vld [vmem:[%s3553 + $0x100] sm:$0xff]
      %v3587 = vld [vmem:[%s3553 + $0x108] sm:$0xff]
      %v3588 = vld [vmem:[%s3553 + $0x110] sm:$0xff]
      %v3589 = vld [vmem:[%s3553 + $0x118] sm:$0xff]
      %v3590 = vld [vmem:[%s3553 + $0x120] sm:$0xff]
      %v3591 = vld [vmem:[%s3553 + $0x128] sm:$0xff]
      %v3592 = vld [vmem:[%s3553 + $0x130] sm:$0xff]
      %v3593 = vld [vmem:[%s3553 + $0x138] sm:$0xff]
      %v3594 = vld [vmem:[%s3553 + $0x140] sm:$0xff]
      %v3595 = vld [vmem:[%s3553 + $0x148] sm:$0xff]
      %v3596 = vld [vmem:[%s3553 + $0x150] sm:$0xff]
      %v3597 = vld [vmem:[%s3553 + $0x158] sm:$0xff]
      %v3598 = vld [vmem:[%s3553 + $0x160] sm:$0xff]
      %v3599 = vld [vmem:[%s3553 + $0x168] sm:$0xff]
      %v3600 = vld [vmem:[%s3553 + $0x170] sm:$0xff]
      %v3601 = vld [vmem:[%s3553 + $0x178] sm:$0xff]
      %v3650 = vunpack.c.l.b16 %v3554
      %v3651 = vunpack.c.h.b16 %v3554
      %v3652 = vunpack.c.l.b16 %v3555
      %v3653 = vunpack.c.h.b16 %v3555
      %v3654 = vunpack.c.l.b16 %v3556
      %v3655 = vunpack.c.h.b16 %v3556
      %v3656 = vunpack.c.l.b16 %v3557
      %v3657 = vunpack.c.h.b16 %v3557
      %v3658 = vunpack.c.l.b16 %v3558
      %v3659 = vunpack.c.h.b16 %v3558
      %v3660 = vunpack.c.l.b16 %v3559
      %v3661 = vunpack.c.h.b16 %v3559
      %v3662 = vunpack.c.l.b16 %v3560
      %v3663 = vunpack.c.h.b16 %v3560
      %v3664 = vunpack.c.l.b16 %v3561
      %v3665 = vunpack.c.h.b16 %v3561
      %v3666 = vunpack.c.l.b16 %v3562
      %v3667 = vunpack.c.h.b16 %v3562
      %v3668 = vunpack.c.l.b16 %v3563
      %v3669 = vunpack.c.h.b16 %v3563
      %v3670 = vunpack.c.l.b16 %v3564
      %v3671 = vunpack.c.h.b16 %v3564
      %v3672 = vunpack.c.l.b16 %v3565
      %v3673 = vunpack.c.h.b16 %v3565
      %v3674 = vunpack.c.l.b16 %v3566
      %v3675 = vunpack.c.h.b16 %v3566
      %v3676 = vunpack.c.l.b16 %v3567
      %v3677 = vunpack.c.h.b16 %v3567
      %v3678 = vunpack.c.l.b16 %v3568
      %v3679 = vunpack.c.h.b16 %v3568
      %v3680 = vunpack.c.l.b16 %v3569
      %v3681 = vunpack.c.h.b16 %v3569
      %v3682 = vunpack.c.l.b16 %v3570
      %v3683 = vunpack.c.h.b16 %v3570
      %v3684 = vunpack.c.l.b16 %v3571
      %v3685 = vunpack.c.h.b16 %v3571
      %v3686 = vunpack.c.l.b16 %v3572
      %v3687 = vunpack.c.h.b16 %v3572
      %v3688 = vunpack.c.l.b16 %v3573
      %v3689 = vunpack.c.h.b16 %v3573
      %v3690 = vunpack.c.l.b16 %v3574
      %v3691 = vunpack.c.h.b16 %v3574
      %v3692 = vunpack.c.l.b16 %v3575
      %v3693 = vunpack.c.h.b16 %v3575
      %v3694 = vunpack.c.l.b16 %v3576
      %v3695 = vunpack.c.h.b16 %v3576
      %v3696 = vunpack.c.l.b16 %v3577
      %v3697 = vunpack.c.h.b16 %v3577
      %v3698 = vunpack.c.l.b16 %v3578
      %v3699 = vunpack.c.h.b16 %v3578
      %v3700 = vunpack.c.l.b16 %v3579
      %v3701 = vunpack.c.h.b16 %v3579
      %v3702 = vunpack.c.l.b16 %v3580
      %v3703 = vunpack.c.h.b16 %v3580
      %v3704 = vunpack.c.l.b16 %v3581
      %v3705 = vunpack.c.h.b16 %v3581
      %v3706 = vunpack.c.l.b16 %v3582
      %v3707 = vunpack.c.h.b16 %v3582
      %v3708 = vunpack.c.l.b16 %v3583
      %v3709 = vunpack.c.h.b16 %v3583
      %v3710 = vunpack.c.l.b16 %v3584
      %v3711 = vunpack.c.h.b16 %v3584
      %v3712 = vunpack.c.l.b16 %v3585
      %v3713 = vunpack.c.h.b16 %v3585
      %v3714 = vunpack.c.l.b16 %v3586
      %v3715 = vunpack.c.h.b16 %v3586
      %v3716 = vunpack.c.l.b16 %v3587
      %v3717 = vunpack.c.h.b16 %v3587
      %v3718 = vunpack.c.l.b16 %v3588
      %v3719 = vunpack.c.h.b16 %v3588
      %v3720 = vunpack.c.l.b16 %v3589
      %v3721 = vunpack.c.h.b16 %v3589
      %v3722 = vunpack.c.l.b16 %v3590
      %v3723 = vunpack.c.h.b16 %v3590
      %v3724 = vunpack.c.l.b16 %v3591
      %v3725 = vunpack.c.h.b16 %v3591
      %v3726 = vunpack.c.l.b16 %v3592
      %v3727 = vunpack.c.h.b16 %v3592
      %v3728 = vunpack.c.l.b16 %v3593
      %v3729 = vunpack.c.h.b16 %v3593
      %v3730 = vunpack.c.l.b16 %v3594
      %v3731 = vunpack.c.h.b16 %v3594
      %v3732 = vunpack.c.l.b16 %v3595
      %v3733 = vunpack.c.h.b16 %v3595
      %v3734 = vunpack.c.l.b16 %v3596
      %v3735 = vunpack.c.h.b16 %v3596
      %v3736 = vunpack.c.l.b16 %v3597
      %v3737 = vunpack.c.h.b16 %v3597
      %v3738 = vunpack.c.l.b16 %v3598
      %v3739 = vunpack.c.h.b16 %v3598
      %v3740 = vunpack.c.l.b16 %v3599
      %v3741 = vunpack.c.h.b16 %v3599
      %v3742 = vunpack.c.l.b16 %v3600
      %v3743 = vunpack.c.h.b16 %v3600
      %v3744 = vunpack.c.l.b16 %v3601
      %v3745 = vunpack.c.h.b16 %v3601
      %v3746 = vpack.c.b16 %v3652, %v3650
      %v3747 = vpack.c.b16 %v3653, %v3651
      %v3748 = vpack.c.b16 %v3656, %v3654
      %v3749 = vpack.c.b16 %v3657, %v3655
      %v3750 = vpack.c.b16 %v3660, %v3658
      %v3751 = vpack.c.b16 %v3661, %v3659
      %v3752 = vpack.c.b16 %v3664, %v3662
      %v3753 = vpack.c.b16 %v3665, %v3663
      %v3754 = vpack.c.b16 %v3668, %v3666
      %v3755 = vpack.c.b16 %v3669, %v3667
      %v3756 = vpack.c.b16 %v3672, %v3670
      %v3757 = vpack.c.b16 %v3673, %v3671
      %v3758 = vpack.c.b16 %v3676, %v3674
      %v3759 = vpack.c.b16 %v3677, %v3675
      %v3760 = vpack.c.b16 %v3680, %v3678
      %v3761 = vpack.c.b16 %v3681, %v3679
      %v3762 = vpack.c.b16 %v3684, %v3682
      %v3763 = vpack.c.b16 %v3685, %v3683
      %v3764 = vpack.c.b16 %v3688, %v3686
      %v3765 = vpack.c.b16 %v3689, %v3687
      %v3766 = vpack.c.b16 %v3692, %v3690
      %v3767 = vpack.c.b16 %v3693, %v3691
      %v3768 = vpack.c.b16 %v3696, %v3694
      %v3769 = vpack.c.b16 %v3697, %v3695
      %v3770 = vpack.c.b16 %v3700, %v3698
      %v3771 = vpack.c.b16 %v3701, %v3699
      %v3772 = vpack.c.b16 %v3704, %v3702
      %v3773 = vpack.c.b16 %v3705, %v3703
      %v3774 = vpack.c.b16 %v3708, %v3706
      %v3775 = vpack.c.b16 %v3709, %v3707
      %v3776 = vpack.c.b16 %v3712, %v3710
      %v3777 = vpack.c.b16 %v3713, %v3711
      %v3778 = vpack.c.b16 %v3716, %v3714
      %v3779 = vpack.c.b16 %v3717, %v3715
      %v3780 = vpack.c.b16 %v3720, %v3718
      %v3781 = vpack.c.b16 %v3721, %v3719
      %v3782 = vpack.c.b16 %v3724, %v3722
      %v3783 = vpack.c.b16 %v3725, %v3723
      %v3784 = vpack.c.b16 %v3728, %v3726
      %v3785 = vpack.c.b16 %v3729, %v3727
      %v3786 = vpack.c.b16 %v3732, %v3730
      %v3787 = vpack.c.b16 %v3733, %v3731
      %v3788 = vpack.c.b16 %v3736, %v3734
      %v3789 = vpack.c.b16 %v3737, %v3735
      %v3790 = vpack.c.b16 %v3740, %v3738
      %v3791 = vpack.c.b16 %v3741, %v3739
      %v3792 = vpack.c.b16 %v3744, %v3742
      %v3793 = vpack.c.b16 %v3745, %v3743
      %3842 = vmatpush.bf16.msra.mxu0 %v3760
      %3843 = vmatpush.bf16.msra.mxu0 %v3758
      %3844 = vmatpush.bf16.msra.mxu0 %v3756
      %3845 = vmatpush.bf16.msra.mxu0 %v3754
      %3846 = vmatpush.bf16.msra.mxu0 %v3752
      %3847 = vmatpush.bf16.msra.mxu0 %v3750
      %3848 = vmatpush.bf16.msra.mxu0 %v3748
      %3849 = vmatpush.bf16.msra.mxu0 %v3746
      %3850 = vmatmul.bf16.gmra.mxu0 %v3547
      %v3851 = vpop.f32.mrf.mxu0
      %v3852 = vadd.f32 0.0, %v3851
      %v3853 = vpop.f32.mrf.mxu0
      %v3854 = vadd.f32 0.0, %v3853
      %3855 = vmatmul.bf16.gmra.mxu0 %v3550
      %v3856 = vpop.f32.mrf.mxu0
      %v3857 = vadd.f32 0.0, %v3856
      %v3858 = vpop.f32.mrf.mxu0
      %3859 = vdwg.mxu0
      %3860 = vmatpush.bf16.msra.mxu0 %v3776
      %3861 = vmatpush.bf16.msra.mxu0 %v3774
      %3862 = vmatpush.bf16.msra.mxu0 %v3772
      %3863 = vmatpush.bf16.msra.mxu0 %v3770
      %3864 = vmatpush.bf16.msra.mxu0 %v3768
      %3865 = vmatpush.bf16.msra.mxu0 %v3766
      %3866 = vmatpush.bf16.msra.mxu0 %v3764
      %3867 = vmatpush.bf16.msra.mxu0 %v3762
      %3868 = vmatmul.bf16.gmra.mxu0 %v3548
      %v3869 = vpop.f32.mrf.mxu0
      %v3870 = vadd.f32 %v3852, %v3869
      %v3871 = vpop.f32.mrf.mxu0
      %v3872 = vadd.f32 %v3854, %v3871
      %3873 = vmatmul.bf16.gmra.mxu0 %v3551
      %v3874 = vpop.f32.mrf.mxu0
      %v3875 = vadd.f32 %v3857, %v3874
      %v3876 = vpop.f32.mrf.mxu0
      %3877 = vdwg.mxu0
      %3878 = vmatpush.bf16.msra.mxu0 %v3792
      %3879 = vmatpush.bf16.msra.mxu0 %v3790
      %3880 = vmatpush.bf16.msra.mxu0 %v3788
      %3881 = vmatpush.bf16.msra.mxu0 %v3786
      %3882 = vmatpush.bf16.msra.mxu0 %v3784
      %3883 = vmatpush.bf16.msra.mxu0 %v3782
      %3884 = vmatpush.bf16.msra.mxu0 %v3780
      %3885 = vmatpush.bf16.msra.mxu0 %v3778
      %3886 = vmatmul.bf16.gmra.mxu0 %v3549
      %v3887 = vpop.f32.mrf.mxu0
      %v3888 = vadd.f32 %v3870, %v3887
      %v3889 = vpop.f32.mrf.mxu0
      %v3890 = vadd.f32 %v3872, %v3889
      %3891 = vmatmul.bf16.gmra.mxu0 %v3552
      %v3892 = vpop.f32.mrf.mxu0
      %v3893 = vadd.f32 %v3875, %v3892
      %v3894 = vpop.f32.mrf.mxu0
      %3895 = vdwg.mxu0
      %3896 = vmatpush.bf16.msra.mxu0 %v3761
      %3897 = vmatpush.bf16.msra.mxu0 %v3759
      %3898 = vmatpush.bf16.msra.mxu0 %v3757
      %3899 = vmatpush.bf16.msra.mxu0 %v3755
      %3900 = vmatpush.bf16.msra.mxu0 %v3753
      %3901 = vmatpush.bf16.msra.mxu0 %v3751
      %3902 = vmatpush.bf16.msra.mxu0 %v3749
      %3903 = vmatpush.bf16.msra.mxu0 %v3747
      %3904 = vmatmul.bf16.gmra.mxu0 %v3547
      %v3905 = vpop.f32.mrf.mxu0
      %v3906 = vadd.f32 0.0, %v3905
      %v3907 = vpop.f32.mrf.mxu0
      %v3908 = vadd.f32 0.0, %v3907
      %3909 = vmatmul.bf16.gmra.mxu0 %v3550
      %v3910 = vpop.f32.mrf.mxu0
      %v3911 = vadd.f32 0.0, %v3910
      %v3912 = vpop.f32.mrf.mxu0
      %3913 = vdwg.mxu0
      %3914 = vmatpush.bf16.msra.mxu0 %v3777
      %3915 = vmatpush.bf16.msra.mxu0 %v3775
      %3916 = vmatpush.bf16.msra.mxu0 %v3773
      %3917 = vmatpush.bf16.msra.mxu0 %v3771
      %3918 = vmatpush.bf16.msra.mxu0 %v3769
      %3919 = vmatpush.bf16.msra.mxu0 %v3767
      %3920 = vmatpush.bf16.msra.mxu0 %v3765
      %3921 = vmatpush.bf16.msra.mxu0 %v3763
      %3922 = vmatmul.bf16.gmra.mxu0 %v3548
      %v3923 = vpop.f32.mrf.mxu0
      %v3924 = vadd.f32 %v3906, %v3923
      %v3925 = vpop.f32.mrf.mxu0
      %v3926 = vadd.f32 %v3908, %v3925
      %3927 = vmatmul.bf16.gmra.mxu0 %v3551
      %v3928 = vpop.f32.mrf.mxu0
      %v3929 = vadd.f32 %v3911, %v3928
      %v3930 = vpop.f32.mrf.mxu0
      %3931 = vdwg.mxu0
      %3932 = vmatpush.bf16.msra.mxu0 %v3793
      %3933 = vmatpush.bf16.msra.mxu0 %v3791
      %3934 = vmatpush.bf16.msra.mxu0 %v3789
      %3935 = vmatpush.bf16.msra.mxu0 %v3787
      %3936 = vmatpush.bf16.msra.mxu0 %v3785
      %3937 = vmatpush.bf16.msra.mxu0 %v3783
      %3938 = vmatpush.bf16.msra.mxu0 %v3781
      %3939 = vmatpush.bf16.msra.mxu0 %v3779
      %3940 = vmatmul.bf16.gmra.mxu0 %v3549
      %v3941 = vpop.f32.mrf.mxu0
      %v3942 = vadd.f32 %v3924, %v3941
      %v3943 = vpop.f32.mrf.mxu0
      %v3944 = vadd.f32 %v3926, %v3943
      %3945 = vmatmul.bf16.gmra.mxu0 %v3552
      %v3946 = vpop.f32.mrf.mxu0
      %v3947 = vadd.f32 %v3929, %v3946
      %v3948 = vpop.f32.mrf.mxu0
      %3949 = vdwg.mxu0
      %v3950 = vadd.f32 %v3476, %v3888
      %v3951 = vadd.f32 %v3530, %v3942
      %v3952 = vadd.f32 %v3478, %v3890
      %v3953 = vadd.f32 %v3532, %v3944
      %v3954 = vadd.f32 %v3481, %v3893
      %v3955 = vadd.f32 %v3535, %v3947
      %v3956 = vld [vmem:[#allocation2 + $0x78] sm:$0xff]
      %v3957 = vld [vmem:[#allocation2 + $0x80] sm:$0xff]
      %v3958 = vld [vmem:[#allocation2 + $0x88] sm:$0xff]
      %v3959 = vld [vmem:[#allocation2 + $0x90] sm:$0xff]
      %v3960 = vld [vmem:[#allocation2 + $0x98] sm:$0xff]
      %v3961 = vld [vmem:[#allocation2 + $0xa0] sm:$0xff]
      %v3962 = vld [vmem:[#allocation2 + $0xa8] sm:$0xff]
      %v3963 = vld [vmem:[#allocation2 + $0xb0] sm:$0xff]
      %v3964 = vld [vmem:[#allocation2 + $0xb8] sm:$0xff]
      %v3965 = vpack.c.bf16 %v3959, %v3956
      %v3966 = vpack.c.bf16 %v3960, %v3957
      %v3967 = vpack.c.bf16 %v3961, %v3958
      %v3968 = vpack.c.bf16 %v3962, %v3962
      %v3969 = vpack.c.bf16 %v3963, %v3963
      %v3970 = vpack.c.bf16 %v3964, %v3964
      %s3971 = scalar_lea.vmem %s3, 1152
      %v3972 = vld [vmem:[%s3971] sm:$0xff]
      %v3973 = vld [vmem:[%s3971 + $0x8] sm:$0xff]
      %v3974 = vld [vmem:[%s3971 + $0x10] sm:$0xff]
      %v3975 = vld [vmem:[%s3971 + $0x18] sm:$0xff]
      %v3976 = vld [vmem:[%s3971 + $0x20] sm:$0xff]
      %v3977 = vld [vmem:[%s3971 + $0x28] sm:$0xff]
      %v3978 = vld [vmem:[%s3971 + $0x30] sm:$0xff]
      %v3979 = vld [vmem:[%s3971 + $0x38] sm:$0xff]
      %v3980 = vld [vmem:[%s3971 + $0x40] sm:$0xff]
      %v3981 = vld [vmem:[%s3971 + $0x48] sm:$0xff]
      %v3982 = vld [vmem:[%s3971 + $0x50] sm:$0xff]
      %v3983 = vld [vmem:[%s3971 + $0x58] sm:$0xff]
      %v3984 = vld [vmem:[%s3971 + $0x60] sm:$0xff]
      %v3985 = vld [vmem:[%s3971 + $0x68] sm:$0xff]
      %v3986 = vld [vmem:[%s3971 + $0x70] sm:$0xff]
      %v3987 = vld [vmem:[%s3971 + $0x78] sm:$0xff]
      %v3988 = vld [vmem:[%s3971 + $0x80] sm:$0xff]
      %v3989 = vld [vmem:[%s3971 + $0x88] sm:$0xff]
      %v3990 = vld [vmem:[%s3971 + $0x90] sm:$0xff]
      %v3991 = vld [vmem:[%s3971 + $0x98] sm:$0xff]
      %v3992 = vld [vmem:[%s3971 + $0xa0] sm:$0xff]
      %v3993 = vld [vmem:[%s3971 + $0xa8] sm:$0xff]
      %v3994 = vld [vmem:[%s3971 + $0xb0] sm:$0xff]
      %v3995 = vld [vmem:[%s3971 + $0xb8] sm:$0xff]
      %v3996 = vld [vmem:[%s3971 + $0xc0] sm:$0xff]
      %v3997 = vld [vmem:[%s3971 + $0xc8] sm:$0xff]
      %v3998 = vld [vmem:[%s3971 + $0xd0] sm:$0xff]
      %v3999 = vld [vmem:[%s3971 + $0xd8] sm:$0xff]
      %v4000 = vld [vmem:[%s3971 + $0xe0] sm:$0xff]
      %v4001 = vld [vmem:[%s3971 + $0xe8] sm:$0xff]
      %v4002 = vld [vmem:[%s3971 + $0xf0] sm:$0xff]
      %v4003 = vld [vmem:[%s3971 + $0xf8] sm:$0xff]
      %v4004 = vld [vmem:[%s3971 + $0x100] sm:$0xff]
      %v4005 = vld [vmem:[%s3971 + $0x108] sm:$0xff]
      %v4006 = vld [vmem:[%s3971 + $0x110] sm:$0xff]
      %v4007 = vld [vmem:[%s3971 + $0x118] sm:$0xff]
      %v4008 = vld [vmem:[%s3971 + $0x120] sm:$0xff]
      %v4009 = vld [vmem:[%s3971 + $0x128] sm:$0xff]
      %v4010 = vld [vmem:[%s3971 + $0x130] sm:$0xff]
      %v4011 = vld [vmem:[%s3971 + $0x138] sm:$0xff]
      %v4012 = vld [vmem:[%s3971 + $0x140] sm:$0xff]
      %v4013 = vld [vmem:[%s3971 + $0x148] sm:$0xff]
      %v4014 = vld [vmem:[%s3971 + $0x150] sm:$0xff]
      %v4015 = vld [vmem:[%s3971 + $0x158] sm:$0xff]
      %v4016 = vld [vmem:[%s3971 + $0x160] sm:$0xff]
      %v4017 = vld [vmem:[%s3971 + $0x168] sm:$0xff]
      %v4018 = vld [vmem:[%s3971 + $0x170] sm:$0xff]
      %v4019 = vld [vmem:[%s3971 + $0x178] sm:$0xff]
      %v4068 = vunpack.c.l.b16 %v3972
      %v4069 = vunpack.c.h.b16 %v3972
      %v4070 = vunpack.c.l.b16 %v3973
      %v4071 = vunpack.c.h.b16 %v3973
      %v4072 = vunpack.c.l.b16 %v3974
      %v4073 = vunpack.c.h.b16 %v3974
      %v4074 = vunpack.c.l.b16 %v3975
      %v4075 = vunpack.c.h.b16 %v3975
      %v4076 = vunpack.c.l.b16 %v3976
      %v4077 = vunpack.c.h.b16 %v3976
      %v4078 = vunpack.c.l.b16 %v3977
      %v4079 = vunpack.c.h.b16 %v3977
      %v4080 = vunpack.c.l.b16 %v3978
      %v4081 = vunpack.c.h.b16 %v3978
      %v4082 = vunpack.c.l.b16 %v3979
      %v4083 = vunpack.c.h.b16 %v3979
      %v4084 = vunpack.c.l.b16 %v3980
      %v4085 = vunpack.c.h.b16 %v3980
      %v4086 = vunpack.c.l.b16 %v3981
      %v4087 = vunpack.c.h.b16 %v3981
      %v4088 = vunpack.c.l.b16 %v3982
      %v4089 = vunpack.c.h.b16 %v3982
      %v4090 = vunpack.c.l.b16 %v3983
      %v4091 = vunpack.c.h.b16 %v3983
      %v4092 = vunpack.c.l.b16 %v3984
      %v4093 = vunpack.c.h.b16 %v3984
      %v4094 = vunpack.c.l.b16 %v3985
      %v4095 = vunpack.c.h.b16 %v3985
      %v4096 = vunpack.c.l.b16 %v3986
      %v4097 = vunpack.c.h.b16 %v3986
      %v4098 = vunpack.c.l.b16 %v3987
      %v4099 = vunpack.c.h.b16 %v3987
      %v4100 = vunpack.c.l.b16 %v3988
      %v4101 = vunpack.c.h.b16 %v3988
      %v4102 = vunpack.c.l.b16 %v3989
      %v4103 = vunpack.c.h.b16 %v3989
      %v4104 = vunpack.c.l.b16 %v3990
      %v4105 = vunpack.c.h.b16 %v3990
      %v4106 = vunpack.c.l.b16 %v3991
      %v4107 = vunpack.c.h.b16 %v3991
      %v4108 = vunpack.c.l.b16 %v3992
      %v4109 = vunpack.c.h.b16 %v3992
      %v4110 = vunpack.c.l.b16 %v3993
      %v4111 = vunpack.c.h.b16 %v3993
      %v4112 = vunpack.c.l.b16 %v3994
      %v4113 = vunpack.c.h.b16 %v3994
      %v4114 = vunpack.c.l.b16 %v3995
      %v4115 = vunpack.c.h.b16 %v3995
      %v4116 = vunpack.c.l.b16 %v3996
      %v4117 = vunpack.c.h.b16 %v3996
      %v4118 = vunpack.c.l.b16 %v3997
      %v4119 = vunpack.c.h.b16 %v3997
      %v4120 = vunpack.c.l.b16 %v3998
      %v4121 = vunpack.c.h.b16 %v3998
      %v4122 = vunpack.c.l.b16 %v3999
      %v4123 = vunpack.c.h.b16 %v3999
      %v4124 = vunpack.c.l.b16 %v4000
      %v4125 = vunpack.c.h.b16 %v4000
      %v4126 = vunpack.c.l.b16 %v4001
      %v4127 = vunpack.c.h.b16 %v4001
      %v4128 = vunpack.c.l.b16 %v4002
      %v4129 = vunpack.c.h.b16 %v4002
      %v4130 = vunpack.c.l.b16 %v4003
      %v4131 = vunpack.c.h.b16 %v4003
      %v4132 = vunpack.c.l.b16 %v4004
      %v4133 = vunpack.c.h.b16 %v4004
      %v4134 = vunpack.c.l.b16 %v4005
      %v4135 = vunpack.c.h.b16 %v4005
      %v4136 = vunpack.c.l.b16 %v4006
      %v4137 = vunpack.c.h.b16 %v4006
      %v4138 = vunpack.c.l.b16 %v4007
      %v4139 = vunpack.c.h.b16 %v4007
      %v4140 = vunpack.c.l.b16 %v4008
      %v4141 = vunpack.c.h.b16 %v4008
      %v4142 = vunpack.c.l.b16 %v4009
      %v4143 = vunpack.c.h.b16 %v4009
      %v4144 = vunpack.c.l.b16 %v4010
      %v4145 = vunpack.c.h.b16 %v4010
      %v4146 = vunpack.c.l.b16 %v4011
      %v4147 = vunpack.c.h.b16 %v4011
      %v4148 = vunpack.c.l.b16 %v4012
      %v4149 = vunpack.c.h.b16 %v4012
      %v4150 = vunpack.c.l.b16 %v4013
      %v4151 = vunpack.c.h.b16 %v4013
      %v4152 = vunpack.c.l.b16 %v4014
      %v4153 = vunpack.c.h.b16 %v4014
      %v4154 = vunpack.c.l.b16 %v4015
      %v4155 = vunpack.c.h.b16 %v4015
      %v4156 = vunpack.c.l.b16 %v4016
      %v4157 = vunpack.c.h.b16 %v4016
      %v4158 = vunpack.c.l.b16 %v4017
      %v4159 = vunpack.c.h.b16 %v4017
      %v4160 = vunpack.c.l.b16 %v4018
      %v4161 = vunpack.c.h.b16 %v4018
      %v4162 = vunpack.c.l.b16 %v4019
      %v4163 = vunpack.c.h.b16 %v4019
      %v4164 = vpack.c.b16 %v4070, %v4068
      %v4165 = vpack.c.b16 %v4071, %v4069
      %v4166 = vpack.c.b16 %v4074, %v4072
      %v4167 = vpack.c.b16 %v4075, %v4073
      %v4168 = vpack.c.b16 %v4078, %v4076
      %v4169 = vpack.c.b16 %v4079, %v4077
      %v4170 = vpack.c.b16 %v4082, %v4080
      %v4171 = vpack.c.b16 %v4083, %v4081
      %v4172 = vpack.c.b16 %v4086, %v4084
      %v4173 = vpack.c.b16 %v4087, %v4085
      %v4174 = vpack.c.b16 %v4090, %v4088
      %v4175 = vpack.c.b16 %v4091, %v4089
      %v4176 = vpack.c.b16 %v4094, %v4092
      %v4177 = vpack.c.b16 %v4095, %v4093
      %v4178 = vpack.c.b16 %v4098, %v4096
      %v4179 = vpack.c.b16 %v4099, %v4097
      %v4180 = vpack.c.b16 %v4102, %v4100
      %v4181 = vpack.c.b16 %v4103, %v4101
      %v4182 = vpack.c.b16 %v4106, %v4104
      %v4183 = vpack.c.b16 %v4107, %v4105
      %v4184 = vpack.c.b16 %v4110, %v4108
      %v4185 = vpack.c.b16 %v4111, %v4109
      %v4186 = vpack.c.b16 %v4114, %v4112
      %v4187 = vpack.c.b16 %v4115, %v4113
      %v4188 = vpack.c.b16 %v4118, %v4116
      %v4189 = vpack.c.b16 %v4119, %v4117
      %v4190 = vpack.c.b16 %v4122, %v4120
      %v4191 = vpack.c.b16 %v4123, %v4121
      %v4192 = vpack.c.b16 %v4126, %v4124
      %v4193 = vpack.c.b16 %v4127, %v4125
      %v4194 = vpack.c.b16 %v4130, %v4128
      %v4195 = vpack.c.b16 %v4131, %v4129
      %v4196 = vpack.c.b16 %v4134, %v4132
      %v4197 = vpack.c.b16 %v4135, %v4133
      %v4198 = vpack.c.b16 %v4138, %v4136
      %v4199 = vpack.c.b16 %v4139, %v4137
      %v4200 = vpack.c.b16 %v4142, %v4140
      %v4201 = vpack.c.b16 %v4143, %v4141
      %v4202 = vpack.c.b16 %v4146, %v4144
      %v4203 = vpack.c.b16 %v4147, %v4145
      %v4204 = vpack.c.b16 %v4150, %v4148
      %v4205 = vpack.c.b16 %v4151, %v4149
      %v4206 = vpack.c.b16 %v4154, %v4152
      %v4207 = vpack.c.b16 %v4155, %v4153
      %v4208 = vpack.c.b16 %v4158, %v4156
      %v4209 = vpack.c.b16 %v4159, %v4157
      %v4210 = vpack.c.b16 %v4162, %v4160
      %v4211 = vpack.c.b16 %v4163, %v4161
      %4260 = vmatpush.bf16.msra.mxu0 %v4178
      %4261 = vmatpush.bf16.msra.mxu0 %v4176
      %4262 = vmatpush.bf16.msra.mxu0 %v4174
      %4263 = vmatpush.bf16.msra.mxu0 %v4172
      %4264 = vmatpush.bf16.msra.mxu0 %v4170
      %4265 = vmatpush.bf16.msra.mxu0 %v4168
      %4266 = vmatpush.bf16.msra.mxu0 %v4166
      %4267 = vmatpush.bf16.msra.mxu0 %v4164
      %4268 = vmatmul.bf16.gmra.mxu0 %v3965
      %v4269 = vpop.f32.mrf.mxu0
      %v4270 = vadd.f32 0.0, %v4269
      %v4271 = vpop.f32.mrf.mxu0
      %v4272 = vadd.f32 0.0, %v4271
      %4273 = vmatmul.bf16.gmra.mxu0 %v3968
      %v4274 = vpop.f32.mrf.mxu0
      %v4275 = vadd.f32 0.0, %v4274
      %v4276 = vpop.f32.mrf.mxu0
      %4277 = vdwg.mxu0
      %4278 = vmatpush.bf16.msra.mxu0 %v4194
      %4279 = vmatpush.bf16.msra.mxu0 %v4192
      %4280 = vmatpush.bf16.msra.mxu0 %v4190
      %4281 = vmatpush.bf16.msra.mxu0 %v4188
      %4282 = vmatpush.bf16.msra.mxu0 %v4186
      %4283 = vmatpush.bf16.msra.mxu0 %v4184
      %4284 = vmatpush.bf16.msra.mxu0 %v4182
      %4285 = vmatpush.bf16.msra.mxu0 %v4180
      %4286 = vmatmul.bf16.gmra.mxu0 %v3966
      %v4287 = vpop.f32.mrf.mxu0
      %v4288 = vadd.f32 %v4270, %v4287
      %v4289 = vpop.f32.mrf.mxu0
      %v4290 = vadd.f32 %v4272, %v4289
      %4291 = vmatmul.bf16.gmra.mxu0 %v3969
      %v4292 = vpop.f32.mrf.mxu0
      %v4293 = vadd.f32 %v4275, %v4292
      %v4294 = vpop.f32.mrf.mxu0
      %4295 = vdwg.mxu0
      %4296 = vmatpush.bf16.msra.mxu0 %v4210
      %4297 = vmatpush.bf16.msra.mxu0 %v4208
      %4298 = vmatpush.bf16.msra.mxu0 %v4206
      %4299 = vmatpush.bf16.msra.mxu0 %v4204
      %4300 = vmatpush.bf16.msra.mxu0 %v4202
      %4301 = vmatpush.bf16.msra.mxu0 %v4200
      %4302 = vmatpush.bf16.msra.mxu0 %v4198
      %4303 = vmatpush.bf16.msra.mxu0 %v4196
      %4304 = vmatmul.bf16.gmra.mxu0 %v3967
      %v4305 = vpop.f32.mrf.mxu0
      %v4306 = vadd.f32 %v4288, %v4305
      %v4307 = vpop.f32.mrf.mxu0
      %v4308 = vadd.f32 %v4290, %v4307
      %4309 = vmatmul.bf16.gmra.mxu0 %v3970
      %v4310 = vpop.f32.mrf.mxu0
      %v4311 = vadd.f32 %v4293, %v4310
      %v4312 = vpop.f32.mrf.mxu0
      %4313 = vdwg.mxu0
      %4314 = vmatpush.bf16.msra.mxu0 %v4179
      %4315 = vmatpush.bf16.msra.mxu0 %v4177
      %4316 = vmatpush.bf16.msra.mxu0 %v4175
      %4317 = vmatpush.bf16.msra.mxu0 %v4173
      %4318 = vmatpush.bf16.msra.mxu0 %v4171
      %4319 = vmatpush.bf16.msra.mxu0 %v4169
      %4320 = vmatpush.bf16.msra.mxu0 %v4167
      %4321 = vmatpush.bf16.msra.mxu0 %v4165
      %4322 = vmatmul.bf16.gmra.mxu0 %v3965
      %v4323 = vpop.f32.mrf.mxu0
      %v4324 = vadd.f32 0.0, %v4323
      %v4325 = vpop.f32.mrf.mxu0
      %v4326 = vadd.f32 0.0, %v4325
      %4327 = vmatmul.bf16.gmra.mxu0 %v3968
      %v4328 = vpop.f32.mrf.mxu0
      %v4329 = vadd.f32 0.0, %v4328
      %v4330 = vpop.f32.mrf.mxu0
      %4331 = vdwg.mxu0
      %4332 = vmatpush.bf16.msra.mxu0 %v4195
      %4333 = vmatpush.bf16.msra.mxu0 %v4193
      %4334 = vmatpush.bf16.msra.mxu0 %v4191
      %4335 = vmatpush.bf16.msra.mxu0 %v4189
      %4336 = vmatpush.bf16.msra.mxu0 %v4187
      %4337 = vmatpush.bf16.msra.mxu0 %v4185
      %4338 = vmatpush.bf16.msra.mxu0 %v4183
      %4339 = vmatpush.bf16.msra.mxu0 %v4181
      %4340 = vmatmul.bf16.gmra.mxu0 %v3966
      %v4341 = vpop.f32.mrf.mxu0
      %v4342 = vadd.f32 %v4324, %v4341
      %v4343 = vpop.f32.mrf.mxu0
      %v4344 = vadd.f32 %v4326, %v4343
      %4345 = vmatmul.bf16.gmra.mxu0 %v3969
      %v4346 = vpop.f32.mrf.mxu0
      %v4347 = vadd.f32 %v4329, %v4346
      %v4348 = vpop.f32.mrf.mxu0
      %4349 = vdwg.mxu0
      %4350 = vmatpush.bf16.msra.mxu0 %v4211
      %4351 = vmatpush.bf16.msra.mxu0 %v4209
      %4352 = vmatpush.bf16.msra.mxu0 %v4207
      %4353 = vmatpush.bf16.msra.mxu0 %v4205
      %4354 = vmatpush.bf16.msra.mxu0 %v4203
      %4355 = vmatpush.bf16.msra.mxu0 %v4201
      %4356 = vmatpush.bf16.msra.mxu0 %v4199
      %4357 = vmatpush.bf16.msra.mxu0 %v4197
      %4358 = vmatmul.bf16.gmra.mxu0 %v3967
      %v4359 = vpop.f32.mrf.mxu0
      %v4360 = vadd.f32 %v4342, %v4359
      %v4361 = vpop.f32.mrf.mxu0
      %v4362 = vadd.f32 %v4344, %v4361
      %4363 = vmatmul.bf16.gmra.mxu0 %v3970
      %v4364 = vpop.f32.mrf.mxu0
      %v4365 = vadd.f32 %v4347, %v4364
      %v4366 = vpop.f32.mrf.mxu0
      %4367 = vdwg.mxu0
      %v4368 = vadd.f32 %v3950, %v4306
      %v4369 = vadd.f32 %v3951, %v4360
      %v4370 = vadd.f32 %v3952, %v4308
      %v4371 = vadd.f32 %v3953, %v4362
      %v4372 = vadd.f32 %v3954, %v4311
      %v4373 = vadd.f32 %v3955, %v4365
      %v4374 = vld [vmem:[%s4] sm:$0x3]
      %v4376 = vperm.slane %v4374, 0
      %v4377 = vperm.slane %v4374, 1
      %v4380 = vadd.f32 %v4368, %v4376
      %v4381 = vadd.f32 %v4369, %v4377
      %v4382 = vadd.f32 %v4370, %v4376
      %v4383 = vadd.f32 %v4371, %v4377
      %v4384 = vadd.f32 %v4372, %v4376
      %v4385 = vadd.f32 %v4373, %v4377
      %v4386 = vmul.f32 %v4380, 0.01
      %v4387 = vmul.f32 %v4381, 0.01
      %v4388 = vmul.f32 %v4382, 0.01
      %v4389 = vmul.f32 %v4383, 0.01
      %v4390 = vmul.f32 %v4384, 0.01
      %v4391 = vmul.f32 %v4385, 0.01
      %v4392 = vmax.f32 %v4380, %v4386
      %v4393 = vmax.f32 %v4381, %v4387
      %v4394 = vmax.f32 %v4382, %v4388
      %v4395 = vmax.f32 %v4383, %v4389
      %v4396 = vmax.f32 %v4384, %v4390
      %v4397 = vmax.f32 %v4385, %v4391
      %v4398 = vpack.c.bf16 %v4392, %v4392
      %v4399 = vpack.c.bf16 %v4393, %v4393
      %v4400 = vld [vmem:[%s5] sm:$0xf]
      %v4401 = vld [vmem:[%s5 + $0x4] sm:$0xf]
      %v4402 = vld [vmem:[%s5 + $0x8] sm:$0xf]
      %v4403 = vld [vmem:[%s5 + $0xc] sm:$0xf]
      %v4404 = vld [vmem:[%s5 + $0x10] sm:$0xf]
      %v4405 = vld [vmem:[%s5 + $0x14] sm:$0xf]
      %v4406 = vld [vmem:[%s5 + $0x18] sm:$0xf]
      %v4407 = vld [vmem:[%s5 + $0x1c] sm:$0xf]
      %v4408 = vld [vmem:[%s5 + $0x20] sm:$0xf]
      %v4409 = vld [vmem:[%s5 + $0x24] sm:$0xf]
      %v4410 = vld [vmem:[%s5 + $0x28] sm:$0xf]
      %v4411 = vld [vmem:[%s5 + $0x2c] sm:$0xf]
      %v4412 = vld [vmem:[%s5 + $0x30] sm:$0xf]
      %v4413 = vld [vmem:[%s5 + $0x34] sm:$0xf]
      %v4414 = vld [vmem:[%s5 + $0x38] sm:$0xf]
      %v4415 = vld [vmem:[%s5 + $0x3c] sm:$0xf]
      %v4416 = vld [vmem:[%s5 + $0x40] sm:$0xf]
      %v4417 = vld [vmem:[%s5 + $0x44] sm:$0xf]
      %v4418 = vld [vmem:[%s5 + $0x48] sm:$0xf]
      %v4419 = vld [vmem:[%s5 + $0x4c] sm:$0xf]
      %v4420 = vld [vmem:[%s5 + $0x50] sm:$0xf]
      %v4421 = vld [vmem:[%s5 + $0x54] sm:$0xf]
      %v4422 = vld [vmem:[%s5 + $0x58] sm:$0xf]
      %v4423 = vld [vmem:[%s5 + $0x5c] sm:$0xf]
      %v4424 = vld [vmem:[%s5 + $0x60] sm:$0xf]
      %v4425 = vld [vmem:[%s5 + $0x64] sm:$0xf]
      %v4426 = vld [vmem:[%s5 + $0x68] sm:$0xf]
      %v4427 = vld [vmem:[%s5 + $0x6c] sm:$0xf]
      %v4428 = vld [vmem:[%s5 + $0x70] sm:$0xf]
      %v4429 = vld [vmem:[%s5 + $0x74] sm:$0xf]
      %v4430 = vld [vmem:[%s5 + $0x78] sm:$0xf]
      %v4431 = vld [vmem:[%s5 + $0x7c] sm:$0xf]
      %v4432 = vpack.c.bf16 %v4394, %v4394
      %v4433 = vpack.c.bf16 %v4395, %v4395
      %s4434 = scalar_lea.vmem %s5, 128
      %v4435 = vld [vmem:[%s4434] sm:$0xf]
      %v4436 = vld [vmem:[%s4434 + $0x4] sm:$0xf]
      %v4437 = vld [vmem:[%s4434 + $0x8] sm:$0xf]
      %v4438 = vld [vmem:[%s4434 + $0xc] sm:$0xf]
      %v4439 = vld [vmem:[%s4434 + $0x10] sm:$0xf]
      %v4440 = vld [vmem:[%s4434 + $0x14] sm:$0xf]
      %v4441 = vld [vmem:[%s4434 + $0x18] sm:$0xf]
      %v4442 = vld [vmem:[%s4434 + $0x1c] sm:$0xf]
      %v4443 = vld [vmem:[%s4434 + $0x20] sm:$0xf]
      %v4444 = vld [vmem:[%s4434 + $0x24] sm:$0xf]
      %v4445 = vld [vmem:[%s4434 + $0x28] sm:$0xf]
      %v4446 = vld [vmem:[%s4434 + $0x2c] sm:$0xf]
      %v4447 = vld [vmem:[%s4434 + $0x30] sm:$0xf]
      %v4448 = vld [vmem:[%s4434 + $0x34] sm:$0xf]
      %v4449 = vld [vmem:[%s4434 + $0x38] sm:$0xf]
      %v4450 = vld [vmem:[%s4434 + $0x3c] sm:$0xf]
      %v4451 = vld [vmem:[%s4434 + $0x40] sm:$0xf]
      %v4452 = vld [vmem:[%s4434 + $0x44] sm:$0xf]
      %v4453 = vld [vmem:[%s4434 + $0x48] sm:$0xf]
      %v4454 = vld [vmem:[%s4434 + $0x4c] sm:$0xf]
      %v4455 = vld [vmem:[%s4434 + $0x50] sm:$0xf]
      %v4456 = vld [vmem:[%s4434 + $0x54] sm:$0xf]
      %v4457 = vld [vmem:[%s4434 + $0x58] sm:$0xf]
      %v4458 = vld [vmem:[%s4434 + $0x5c] sm:$0xf]
      %v4459 = vld [vmem:[%s4434 + $0x60] sm:$0xf]
      %v4460 = vld [vmem:[%s4434 + $0x64] sm:$0xf]
      %v4461 = vld [vmem:[%s4434 + $0x68] sm:$0xf]
      %v4462 = vld [vmem:[%s4434 + $0x6c] sm:$0xf]
      %v4463 = vld [vmem:[%s4434 + $0x70] sm:$0xf]
      %v4464 = vld [vmem:[%s4434 + $0x74] sm:$0xf]
      %v4465 = vld [vmem:[%s4434 + $0x78] sm:$0xf]
      %v4466 = vld [vmem:[%s4434 + $0x7c] sm:$0xf]
      %v4499 = vunpack.c.l.b16 %v4435
      %v4500 = vunpack.c.l.b16 %v4436
      %v4501 = vunpack.c.l.b16 %v4437
      %v4502 = vunpack.c.l.b16 %v4438
      %v4503 = vunpack.c.l.b16 %v4439
      %v4504 = vunpack.c.l.b16 %v4440
      %v4505 = vunpack.c.l.b16 %v4441
      %v4506 = vunpack.c.l.b16 %v4442
      %v4507 = vunpack.c.l.b16 %v4443
      %v4508 = vunpack.c.l.b16 %v4444
      %v4509 = vunpack.c.l.b16 %v4445
      %v4510 = vunpack.c.l.b16 %v4446
      %v4511 = vunpack.c.l.b16 %v4447
      %v4512 = vunpack.c.l.b16 %v4448
      %v4513 = vunpack.c.l.b16 %v4449
      %v4514 = vunpack.c.l.b16 %v4450
      %v4515 = vunpack.c.l.b16 %v4451
      %v4516 = vunpack.c.l.b16 %v4452
      %v4517 = vunpack.c.l.b16 %v4453
      %v4518 = vunpack.c.l.b16 %v4454
      %v4519 = vunpack.c.l.b16 %v4455
      %v4520 = vunpack.c.l.b16 %v4456
      %v4521 = vunpack.c.l.b16 %v4457
      %v4522 = vunpack.c.l.b16 %v4458
      %v4523 = vunpack.c.l.b16 %v4459
      %v4524 = vunpack.c.l.b16 %v4460
      %v4525 = vunpack.c.l.b16 %v4461
      %v4526 = vunpack.c.l.b16 %v4462
      %v4527 = vunpack.c.l.b16 %v4463
      %v4528 = vunpack.c.l.b16 %v4464
      %v4529 = vunpack.c.l.b16 %v4465
      %v4530 = vunpack.c.l.b16 %v4466
      %v4531 = vpack.c.b16 %v4500, %v4499
      %v4532 = vpack.c.b16 %v4502, %v4501
      %v4533 = vpack.c.b16 %v4504, %v4503
      %v4534 = vpack.c.b16 %v4506, %v4505
      %v4535 = vpack.c.b16 %v4508, %v4507
      %v4536 = vpack.c.b16 %v4510, %v4509
      %v4537 = vpack.c.b16 %v4512, %v4511
      %v4538 = vpack.c.b16 %v4514, %v4513
      %v4539 = vpack.c.b16 %v4516, %v4515
      %v4540 = vpack.c.b16 %v4518, %v4517
      %v4541 = vpack.c.b16 %v4520, %v4519
      %v4542 = vpack.c.b16 %v4522, %v4521
      %v4543 = vpack.c.b16 %v4524, %v4523
      %v4544 = vpack.c.b16 %v4526, %v4525
      %v4545 = vpack.c.b16 %v4528, %v4527
      %v4546 = vpack.c.b16 %v4530, %v4529
      %4563 = vmatpush.bf16.msra.mxu0 %v4538
      %4564 = vmatpush.bf16.msra.mxu0 %v4537
      %4565 = vmatpush.bf16.msra.mxu0 %v4536
      %4566 = vmatpush.bf16.msra.mxu0 %v4535
      %4567 = vmatpush.bf16.msra.mxu0 %v4534
      %4568 = vmatpush.bf16.msra.mxu0 %v4533
      %4569 = vmatpush.bf16.msra.mxu0 %v4532
      %4570 = vmatpush.bf16.msra.mxu0 %v4531
      %4571 = vmatmul.bf16.gmra.mxu0 %v4432
      %v4572 = vpop.f32.mrf.mxu0
      %v4573 = vadd.f32 0.0, %v4572
      %v4574 = vpop.f32.mrf.mxu0
      %4575 = vdwg.mxu0
      %4576 = vmatpush.bf16.msra.mxu0 %v4546
      %4577 = vmatpush.bf16.msra.mxu0 %v4545
      %4578 = vmatpush.bf16.msra.mxu0 %v4544
      %4579 = vmatpush.bf16.msra.mxu0 %v4543
      %4580 = vmatpush.bf16.msra.mxu0 %v4542
      %4581 = vmatpush.bf16.msra.mxu0 %v4541
      %4582 = vmatpush.bf16.msra.mxu0 %v4540
      %4583 = vmatpush.bf16.msra.mxu0 %v4539
      %4584 = vmatmul.bf16.gmra.mxu0 %v4433
      %v4585 = vpop.f32.mrf.mxu0
      %v4586 = vadd.f32 %v4573, %v4585
      %v4587 = vpop.f32.mrf.mxu0
      %4588 = vdwg.mxu0
      %v4621 = vunpack.c.l.b16 %v4400
      %v4622 = vunpack.c.l.b16 %v4401
      %v4623 = vunpack.c.l.b16 %v4402
      %v4624 = vunpack.c.l.b16 %v4403
      %v4625 = vunpack.c.l.b16 %v4404
      %v4626 = vunpack.c.l.b16 %v4405
      %v4627 = vunpack.c.l.b16 %v4406
      %v4628 = vunpack.c.l.b16 %v4407
      %v4629 = vunpack.c.l.b16 %v4408
      %v4630 = vunpack.c.l.b16 %v4409
      %v4631 = vunpack.c.l.b16 %v4410
      %v4632 = vunpack.c.l.b16 %v4411
      %v4633 = vunpack.c.l.b16 %v4412
      %v4634 = vunpack.c.l.b16 %v4413
      %v4635 = vunpack.c.l.b16 %v4414
      %v4636 = vunpack.c.l.b16 %v4415
      %v4637 = vunpack.c.l.b16 %v4416
      %v4638 = vunpack.c.l.b16 %v4417
      %v4639 = vunpack.c.l.b16 %v4418
      %v4640 = vunpack.c.l.b16 %v4419
      %v4641 = vunpack.c.l.b16 %v4420
      %v4642 = vunpack.c.l.b16 %v4421
      %v4643 = vunpack.c.l.b16 %v4422
      %v4644 = vunpack.c.l.b16 %v4423
      %v4645 = vunpack.c.l.b16 %v4424
      %v4646 = vunpack.c.l.b16 %v4425
      %v4647 = vunpack.c.l.b16 %v4426
      %v4648 = vunpack.c.l.b16 %v4427
      %v4649 = vunpack.c.l.b16 %v4428
      %v4650 = vunpack.c.l.b16 %v4429
      %v4651 = vunpack.c.l.b16 %v4430
      %v4652 = vunpack.c.l.b16 %v4431
      %v4653 = vpack.c.b16 %v4622, %v4621
      %v4654 = vpack.c.b16 %v4624, %v4623
      %v4655 = vpack.c.b16 %v4626, %v4625
      %v4656 = vpack.c.b16 %v4628, %v4627
      %v4657 = vpack.c.b16 %v4630, %v4629
      %v4658 = vpack.c.b16 %v4632, %v4631
      %v4659 = vpack.c.b16 %v4634, %v4633
      %v4660 = vpack.c.b16 %v4636, %v4635
      %v4661 = vpack.c.b16 %v4638, %v4637
      %v4662 = vpack.c.b16 %v4640, %v4639
      %v4663 = vpack.c.b16 %v4642, %v4641
      %v4664 = vpack.c.b16 %v4644, %v4643
      %v4665 = vpack.c.b16 %v4646, %v4645
      %v4666 = vpack.c.b16 %v4648, %v4647
      %v4667 = vpack.c.b16 %v4650, %v4649
      %v4668 = vpack.c.b16 %v4652, %v4651
      %4685 = vmatpush.bf16.msra.mxu0 %v4660
      %4686 = vmatpush.bf16.msra.mxu0 %v4659
      %4687 = vmatpush.bf16.msra.mxu0 %v4658
      %4688 = vmatpush.bf16.msra.mxu0 %v4657
      %4689 = vmatpush.bf16.msra.mxu0 %v4656
      %4690 = vmatpush.bf16.msra.mxu0 %v4655
      %4691 = vmatpush.bf16.msra.mxu0 %v4654
      %4692 = vmatpush.bf16.msra.mxu0 %v4653
      %4693 = vmatmul.bf16.gmra.mxu0 %v4398
      %v4694 = vpop.f32.mrf.mxu0
      %v4695 = vadd.f32 %v4586, %v4694
      %v4696 = vpop.f32.mrf.mxu0
      %4697 = vdwg.mxu0
      %4698 = vmatpush.bf16.msra.mxu0 %v4668
      %4699 = vmatpush.bf16.msra.mxu0 %v4667
      %4700 = vmatpush.bf16.msra.mxu0 %v4666
      %4701 = vmatpush.bf16.msra.mxu0 %v4665
      %4702 = vmatpush.bf16.msra.mxu0 %v4664
      %4703 = vmatpush.bf16.msra.mxu0 %v4663
      %4704 = vmatpush.bf16.msra.mxu0 %v4662
      %4705 = vmatpush.bf16.msra.mxu0 %v4661
      %4706 = vmatmul.bf16.gmra.mxu0 %v4399
      %v4707 = vpop.f32.mrf.mxu0
      %v4708 = vadd.f32 %v4695, %v4707
      %v4709 = vpop.f32.mrf.mxu0
      %4710 = vdwg.mxu0
      %v4711 = vpack.c.bf16 %v4396, %v4396
      %v4712 = vpack.c.bf16 %v4397, %v4397
      %s4713 = scalar_lea.vmem %s5, 256
      %v4714 = vld [vmem:[%s4713] sm:$0xf]
      %v4715 = vld [vmem:[%s4713 + $0x4] sm:$0xf]
      %v4716 = vld [vmem:[%s4713 + $0x8] sm:$0xf]
      %v4717 = vld [vmem:[%s4713 + $0xc] sm:$0xf]
      %v4718 = vld [vmem:[%s4713 + $0x10] sm:$0xf]
      %v4719 = vld [vmem:[%s4713 + $0x14] sm:$0xf]
      %v4720 = vld [vmem:[%s4713 + $0x18] sm:$0xf]
      %v4721 = vld [vmem:[%s4713 + $0x1c] sm:$0xf]
      %v4722 = vld [vmem:[%s4713 + $0x20] sm:$0xf]
      %v4723 = vld [vmem:[%s4713 + $0x24] sm:$0xf]
      %v4724 = vld [vmem:[%s4713 + $0x28] sm:$0xf]
      %v4725 = vld [vmem:[%s4713 + $0x2c] sm:$0xf]
      %v4726 = vld [vmem:[%s4713 + $0x30] sm:$0xf]
      %v4727 = vld [vmem:[%s4713 + $0x34] sm:$0xf]
      %v4728 = vld [vmem:[%s4713 + $0x38] sm:$0xf]
      %v4729 = vld [vmem:[%s4713 + $0x3c] sm:$0xf]
      %v4730 = vld [vmem:[%s4713 + $0x40] sm:$0xf]
      %v4731 = vld [vmem:[%s4713 + $0x44] sm:$0xf]
      %v4732 = vld [vmem:[%s4713 + $0x48] sm:$0xf]
      %v4733 = vld [vmem:[%s4713 + $0x4c] sm:$0xf]
      %v4734 = vld [vmem:[%s4713 + $0x50] sm:$0xf]
      %v4735 = vld [vmem:[%s4713 + $0x54] sm:$0xf]
      %v4736 = vld [vmem:[%s4713 + $0x58] sm:$0xf]
      %v4737 = vld [vmem:[%s4713 + $0x5c] sm:$0xf]
      %v4738 = vld [vmem:[%s4713 + $0x60] sm:$0xf]
      %v4739 = vld [vmem:[%s4713 + $0x64] sm:$0xf]
      %v4740 = vld [vmem:[%s4713 + $0x68] sm:$0xf]
      %v4741 = vld [vmem:[%s4713 + $0x6c] sm:$0xf]
      %v4742 = vld [vmem:[%s4713 + $0x70] sm:$0xf]
      %v4743 = vld [vmem:[%s4713 + $0x74] sm:$0xf]
      %v4744 = vld [vmem:[%s4713 + $0x78] sm:$0xf]
      %v4745 = vld [vmem:[%s4713 + $0x7c] sm:$0xf]
      %v4778 = vunpack.c.l.b16 %v4714
      %v4779 = vunpack.c.l.b16 %v4715
      %v4780 = vunpack.c.l.b16 %v4716
      %v4781 = vunpack.c.l.b16 %v4717
      %v4782 = vunpack.c.l.b16 %v4718
      %v4783 = vunpack.c.l.b16 %v4719
      %v4784 = vunpack.c.l.b16 %v4720
      %v4785 = vunpack.c.l.b16 %v4721
      %v4786 = vunpack.c.l.b16 %v4722
      %v4787 = vunpack.c.l.b16 %v4723
      %v4788 = vunpack.c.l.b16 %v4724
      %v4789 = vunpack.c.l.b16 %v4725
      %v4790 = vunpack.c.l.b16 %v4726
      %v4791 = vunpack.c.l.b16 %v4727
      %v4792 = vunpack.c.l.b16 %v4728
      %v4793 = vunpack.c.l.b16 %v4729
      %v4794 = vunpack.c.l.b16 %v4730
      %v4795 = vunpack.c.l.b16 %v4731
      %v4796 = vunpack.c.l.b16 %v4732
      %v4797 = vunpack.c.l.b16 %v4733
      %v4798 = vunpack.c.l.b16 %v4734
      %v4799 = vunpack.c.l.b16 %v4735
      %v4800 = vunpack.c.l.b16 %v4736
      %v4801 = vunpack.c.l.b16 %v4737
      %v4802 = vunpack.c.l.b16 %v4738
      %v4803 = vunpack.c.l.b16 %v4739
      %v4804 = vunpack.c.l.b16 %v4740
      %v4805 = vunpack.c.l.b16 %v4741
      %v4806 = vunpack.c.l.b16 %v4742
      %v4807 = vunpack.c.l.b16 %v4743
      %v4808 = vunpack.c.l.b16 %v4744
      %v4809 = vunpack.c.l.b16 %v4745
      %v4810 = vpack.c.b16 %v4779, %v4778
      %v4811 = vpack.c.b16 %v4781, %v4780
      %v4812 = vpack.c.b16 %v4783, %v4782
      %v4813 = vpack.c.b16 %v4785, %v4784
      %v4814 = vpack.c.b16 %v4787, %v4786
      %v4815 = vpack.c.b16 %v4789, %v4788
      %v4816 = vpack.c.b16 %v4791, %v4790
      %v4817 = vpack.c.b16 %v4793, %v4792
      %v4818 = vpack.c.b16 %v4795, %v4794
      %v4819 = vpack.c.b16 %v4797, %v4796
      %v4820 = vpack.c.b16 %v4799, %v4798
      %v4821 = vpack.c.b16 %v4801, %v4800
      %v4822 = vpack.c.b16 %v4803, %v4802
      %v4823 = vpack.c.b16 %v4805, %v4804
      %v4824 = vpack.c.b16 %v4807, %v4806
      %v4825 = vpack.c.b16 %v4809, %v4808
      %4842 = vmatpush.bf16.msra.mxu0 %v4817
      %4843 = vmatpush.bf16.msra.mxu0 %v4816
      %4844 = vmatpush.bf16.msra.mxu0 %v4815
      %4845 = vmatpush.bf16.msra.mxu0 %v4814
      %4846 = vmatpush.bf16.msra.mxu0 %v4813
      %4847 = vmatpush.bf16.msra.mxu0 %v4812
      %4848 = vmatpush.bf16.msra.mxu0 %v4811
      %4849 = vmatpush.bf16.msra.mxu0 %v4810
      %4850 = vmatmul.bf16.gmra.mxu0 %v4711
      %v4851 = vpop.f32.mrf.mxu0
      %v4852 = vadd.f32 0.0, %v4851
      %v4853 = vpop.f32.mrf.mxu0
      %4854 = vdwg.mxu0
      %4855 = vmatpush.bf16.msra.mxu0 %v4825
      %4856 = vmatpush.bf16.msra.mxu0 %v4824
      %4857 = vmatpush.bf16.msra.mxu0 %v4823
      %4858 = vmatpush.bf16.msra.mxu0 %v4822
      %4859 = vmatpush.bf16.msra.mxu0 %v4821
      %4860 = vmatpush.bf16.msra.mxu0 %v4820
      %4861 = vmatpush.bf16.msra.mxu0 %v4819
      %4862 = vmatpush.bf16.msra.mxu0 %v4818
      %4863 = vmatmul.bf16.gmra.mxu0 %v4712
      %v4864 = vpop.f32.mrf.mxu0
      %v4865 = vadd.f32 %v4852, %v4864
      %v4866 = vpop.f32.mrf.mxu0
      %4867 = vdwg.mxu0
      %v4868 = vadd.f32 %v4708, %v4865
      %v4869 = vld [vmem:[%s6] sm:$0x1]
      %v4871 = vperm.slane %v4869, 0
      %v4873 = vadd.f32 %v4868, %v4871
      %v4874 = vmul.f32 %v4873, 0.01
      %v4875 = vmax.f32 %v4873, %v4874
      %v4876 = vpack.c.bf16 %v4875, %v4875
      %v4877 = vld [vmem:[%s7] sm:$0xff]
      %v4878 = vld [vmem:[%s7 + $0x8] sm:$0xff]
      %v4879 = vld [vmem:[%s7 + $0x10] sm:$0xff]
      %v4880 = vld [vmem:[%s7 + $0x18] sm:$0xff]
      %v4881 = vld [vmem:[%s7 + $0x20] sm:$0xff]
      %v4882 = vld [vmem:[%s7 + $0x28] sm:$0xff]
      %v4883 = vld [vmem:[%s7 + $0x30] sm:$0xff]
      %v4884 = vld [vmem:[%s7 + $0x38] sm:$0xff]
      %v4885 = vld [vmem:[%s7 + $0x40] sm:$0xff]
      %v4886 = vld [vmem:[%s7 + $0x48] sm:$0xff]
      %v4887 = vld [vmem:[%s7 + $0x50] sm:$0xff]
      %v4888 = vld [vmem:[%s7 + $0x58] sm:$0xff]
      %v4889 = vld [vmem:[%s7 + $0x60] sm:$0xff]
      %v4890 = vld [vmem:[%s7 + $0x68] sm:$0xff]
      %v4891 = vld [vmem:[%s7 + $0x70] sm:$0xff]
      %v4892 = vld [vmem:[%s7 + $0x78] sm:$0xff]
      %v4893 = vld [vmem:[%s7 + $0x80] sm:$0xff]
      %v4894 = vld [vmem:[%s7 + $0x88] sm:$0xff]
      %v4895 = vld [vmem:[%s7 + $0x90] sm:$0xff]
      %v4896 = vld [vmem:[%s7 + $0x98] sm:$0xff]
      %v4897 = vld [vmem:[%s7 + $0xa0] sm:$0xff]
      %v4898 = vld [vmem:[%s7 + $0xa8] sm:$0xff]
      %v4899 = vld [vmem:[%s7 + $0xb0] sm:$0xff]
      %v4900 = vld [vmem:[%s7 + $0xb8] sm:$0xff]
      %v4901 = vld [vmem:[%s7 + $0xc0] sm:$0xff]
      %v4902 = vld [vmem:[%s7 + $0xc8] sm:$0xff]
      %v4903 = vld [vmem:[%s7 + $0xd0] sm:$0xff]
      %v4904 = vld [vmem:[%s7 + $0xd8] sm:$0xff]
      %v4905 = vld [vmem:[%s7 + $0xe0] sm:$0xff]
      %v4906 = vld [vmem:[%s7 + $0xe8] sm:$0xff]
      %v4907 = vld [vmem:[%s7 + $0xf0] sm:$0xff]
      %v4908 = vld [vmem:[%s7 + $0xf8] sm:$0xff]
      %v4909 = vld [vmem:[%s8] sm:$0xf]
      %v4911 = vperm.slane %v4909, 0
      %v4912 = vperm.slane %v4909, 1
      %v4913 = vperm.slane %v4909, 2
      %v4914 = vperm.slane %v4909, 3
      %v4951 = vunpack.c.l.b16 %v4877
      %v4952 = vunpack.c.h.b16 %v4877
      %v4953 = vunpack.c.l.b16 %v4878
      %v4954 = vunpack.c.h.b16 %v4878
      %v4955 = vunpack.c.l.b16 %v4879
      %v4956 = vunpack.c.h.b16 %v4879
      %v4957 = vunpack.c.l.b16 %v4880
      %v4958 = vunpack.c.h.b16 %v4880
      %v4959 = vunpack.c.l.b16 %v4881
      %v4960 = vunpack.c.h.b16 %v4881
      %v4961 = vunpack.c.l.b16 %v4882
      %v4962 = vunpack.c.h.b16 %v4882
      %v4963 = vunpack.c.l.b16 %v4883
      %v4964 = vunpack.c.h.b16 %v4883
      %v4965 = vunpack.c.l.b16 %v4884
      %v4966 = vunpack.c.h.b16 %v4884
      %v4967 = vunpack.c.l.b16 %v4885
      %v4968 = vunpack.c.h.b16 %v4885
      %v4969 = vunpack.c.l.b16 %v4886
      %v4970 = vunpack.c.h.b16 %v4886
      %v4971 = vunpack.c.l.b16 %v4887
      %v4972 = vunpack.c.h.b16 %v4887
      %v4973 = vunpack.c.l.b16 %v4888
      %v4974 = vunpack.c.h.b16 %v4888
      %v4975 = vunpack.c.l.b16 %v4889
      %v4976 = vunpack.c.h.b16 %v4889
      %v4977 = vunpack.c.l.b16 %v4890
      %v4978 = vunpack.c.h.b16 %v4890
      %v4979 = vunpack.c.l.b16 %v4891
      %v4980 = vunpack.c.h.b16 %v4891
      %v4981 = vunpack.c.l.b16 %v4892
      %v4982 = vunpack.c.h.b16 %v4892
      %v4983 = vunpack.c.l.b16 %v4893
      %v4984 = vunpack.c.h.b16 %v4893
      %v4985 = vunpack.c.l.b16 %v4894
      %v4986 = vunpack.c.h.b16 %v4894
      %v4987 = vunpack.c.l.b16 %v4895
      %v4988 = vunpack.c.h.b16 %v4895
      %v4989 = vunpack.c.l.b16 %v4896
      %v4990 = vunpack.c.h.b16 %v4896
      %v4991 = vunpack.c.l.b16 %v4897
      %v4992 = vunpack.c.h.b16 %v4897
      %v4993 = vunpack.c.l.b16 %v4898
      %v4994 = vunpack.c.h.b16 %v4898
      %v4995 = vunpack.c.l.b16 %v4899
      %v4996 = vunpack.c.h.b16 %v4899
      %v4997 = vunpack.c.l.b16 %v4900
      %v4998 = vunpack.c.h.b16 %v4900
      %v4999 = vunpack.c.l.b16 %v4901
      %v5000 = vunpack.c.h.b16 %v4901
      %v5001 = vunpack.c.l.b16 %v4902
      %v5002 = vunpack.c.h.b16 %v4902
      %v5003 = vunpack.c.l.b16 %v4903
      %v5004 = vunpack.c.h.b16 %v4903
      %v5005 = vunpack.c.l.b16 %v4904
      %v5006 = vunpack.c.h.b16 %v4904
      %v5007 = vunpack.c.l.b16 %v4905
      %v5008 = vunpack.c.h.b16 %v4905
      %v5009 = vunpack.c.l.b16 %v4906
      %v5010 = vunpack.c.h.b16 %v4906
      %v5011 = vunpack.c.l.b16 %v4907
      %v5012 = vunpack.c.h.b16 %v4907
      %v5013 = vunpack.c.l.b16 %v4908
      %v5014 = vunpack.c.h.b16 %v4908
      %v5015 = vpack.c.b16 %v4955, %v4951
      %v5016 = vpack.c.b16 %v4956, %v4952
      %v5017 = vpack.c.b16 %v4957, %v4953
      %v5018 = vpack.c.b16 %v4958, %v4954
      %v5019 = vpack.c.b16 %v4963, %v4959
      %v5020 = vpack.c.b16 %v4964, %v4960
      %v5021 = vpack.c.b16 %v4965, %v4961
      %v5022 = vpack.c.b16 %v4966, %v4962
      %v5023 = vpack.c.b16 %v4971, %v4967
      %v5024 = vpack.c.b16 %v4972, %v4968
      %v5025 = vpack.c.b16 %v4973, %v4969
      %v5026 = vpack.c.b16 %v4974, %v4970
      %v5027 = vpack.c.b16 %v4979, %v4975
      %v5028 = vpack.c.b16 %v4980, %v4976
      %v5029 = vpack.c.b16 %v4981, %v4977
      %v5030 = vpack.c.b16 %v4982, %v4978
      %v5031 = vpack.c.b16 %v4987, %v4983
      %v5032 = vpack.c.b16 %v4988, %v4984
      %v5033 = vpack.c.b16 %v4989, %v4985
      %v5034 = vpack.c.b16 %v4990, %v4986
      %v5035 = vpack.c.b16 %v4995, %v4991
      %v5036 = vpack.c.b16 %v4996, %v4992
      %v5037 = vpack.c.b16 %v4997, %v4993
      %v5038 = vpack.c.b16 %v4998, %v4994
      %v5039 = vpack.c.b16 %v5003, %v4999
      %v5040 = vpack.c.b16 %v5004, %v5000
      %v5041 = vpack.c.b16 %v5005, %v5001
      %v5042 = vpack.c.b16 %v5006, %v5002
      %v5043 = vpack.c.b16 %v5011, %v5007
      %v5044 = vpack.c.b16 %v5012, %v5008
      %v5045 = vpack.c.b16 %v5013, %v5009
      %v5046 = vpack.c.b16 %v5014, %v5010
      %5079 = vmatpush.bf16.msra.mxu0 %v5043
      %5080 = vmatpush.bf16.msra.mxu0 %v5039
      %5081 = vmatpush.bf16.msra.mxu0 %v5035
      %5082 = vmatpush.bf16.msra.mxu0 %v5031
      %5083 = vmatpush.bf16.msra.mxu0 %v5027
      %5084 = vmatpush.bf16.msra.mxu0 %v5023
      %5085 = vmatpush.bf16.msra.mxu0 %v5019
      %5086 = vmatpush.bf16.msra.mxu0 %v5015
      %5087 = vmatmul.bf16.gmra.mxu0 %v4876
      %v5088 = vpop.f32.mrf.mxu0
      %v5089 = vadd.f32 %v4911, %v5088
      %v5090 = vpop.f32.mrf.mxu0
      %5091 = vdwg.mxu0
      %5092 = vmatpush.bf16.msra.mxu0 %v5044
      %5093 = vmatpush.bf16.msra.mxu0 %v5040
      %5094 = vmatpush.bf16.msra.mxu0 %v5036
      %5095 = vmatpush.bf16.msra.mxu0 %v5032
      %5096 = vmatpush.bf16.msra.mxu0 %v5028
      %5097 = vmatpush.bf16.msra.mxu0 %v5024
      %5098 = vmatpush.bf16.msra.mxu0 %v5020
      %5099 = vmatpush.bf16.msra.mxu0 %v5016
      %5100 = vmatmul.bf16.gmra.mxu0 %v4876
      %v5101 = vpop.f32.mrf.mxu0
      %v5102 = vadd.f32 %v4912, %v5101
      %v5103 = vpop.f32.mrf.mxu0
      %5104 = vdwg.mxu0
      %5105 = vmatpush.bf16.msra.mxu0 %v5045
      %5106 = vmatpush.bf16.msra.mxu0 %v5041
      %5107 = vmatpush.bf16.msra.mxu0 %v5037
      %5108 = vmatpush.bf16.msra.mxu0 %v5033
      %5109 = vmatpush.bf16.msra.mxu0 %v5029
      %5110 = vmatpush.bf16.msra.mxu0 %v5025
      %5111 = vmatpush.bf16.msra.mxu0 %v5021
      %5112 = vmatpush.bf16.msra.mxu0 %v5017
      %5113 = vmatmul.bf16.gmra.mxu0 %v4876
      %v5114 = vpop.f32.mrf.mxu0
      %v5115 = vadd.f32 %v4913, %v5114
      %v5116 = vpop.f32.mrf.mxu0
      %5117 = vdwg.mxu0
      %5118 = vmatpush.bf16.msra.mxu0 %v5046
      %5119 = vmatpush.bf16.msra.mxu0 %v5042
      %5120 = vmatpush.bf16.msra.mxu0 %v5038
      %5121 = vmatpush.bf16.msra.mxu0 %v5034
      %5122 = vmatpush.bf16.msra.mxu0 %v5030
      %5123 = vmatpush.bf16.msra.mxu0 %v5026
      %5124 = vmatpush.bf16.msra.mxu0 %v5022
      %5125 = vmatpush.bf16.msra.mxu0 %v5018
      %5126 = vmatmul.bf16.gmra.mxu0 %v4876
      %v5127 = vpop.f32.mrf.mxu0
      %v5128 = vadd.f32 %v4914, %v5127
      %v5129 = vpop.f32.mrf.mxu0
      %5130 = vdwg.mxu0
      %v5131 = vmul.f32 %v5089, 0.01
      %v5132 = vmul.f32 %v5102, 0.01
      %v5133 = vmul.f32 %v5115, 0.01
      %v5134 = vmul.f32 %v5128, 0.01
      %v5135 = vmax.f32 %v5089, %v5131
      %v5136 = vmax.f32 %v5102, %v5132
      %v5137 = vmax.f32 %v5115, %v5133
      %v5138 = vmax.f32 %v5128, %v5134
      %v5139 = vld [vmem:[%s9] sm:$0xf]
      %v5141 = vperm.slane %v5139, 0
      %v5142 = vperm.slane %v5139, 1
      %v5143 = vperm.slane %v5139, 2
      %v5144 = vperm.slane %v5139, 3
      %v5149 = vmul.f32 %v5135, %v5141
      %v5150 = vmul.f32 %v5136, %v5142
      %v5151 = vmul.f32 %v5137, %v5143
      %v5152 = vmul.f32 %v5138, %v5144
      %v5153 = vadd.f32 %v5149, %v5150
      %v5154 = vadd.f32 %v5153, %v5151
      %v5155 = vadd.f32 %v5154, %v5152
      %5156 = vadd.xlane.f32.xlu0 %v5155
      %v5157 = vpop.xlane.xlu0 %5156
      %v5158 = vld [vmem:[#allocation3] sm:$0x1]
      %v5160 = vperm.slane %v5158, 0
      %v5162 = vadd.f32 %v5157, %v5160
      %vm5163 = vcmask 7168
      %5164 = vst.msk [vmem:[%s391] sm:$0xff] %vm5163, %v5162
      %p5165 = scmp.lt.s32.totalorder %s24, 1
      %s5166 = scalar_select %p5165, %s24, 1
      %s5167 = smul.addr %s5166, 8
      %s5168 = scalar_lea.vmem %s11, %s5167
      // Predicated region
      $region65: #{discriminator5_forward.1} parent=63 // pred_check
        %p5169 = pneg %p278
      $region66: #{discriminator5_forward.1} parent=63 // pred_check_branch
        %5171 = sbr.rel (%p5169) target = $region68
      $region67: #{discriminator5_forward.1} parent=63 // pred_region
        _
      $region68: #{discriminator5_forward.1} parent=63 // pred_fallthru
        _
    $region64: #{discriminator5_forward.1} parent=5 // pred_fallthru
      _
    %p5172 = scmp.le.s32.totalorder 2, %s19
    // Predicated region
    $region69: #{discriminator5_forward.1} parent=5 // pred_check
      %p5173 = pneg %p5172
    $region70: #{discriminator5_forward.1} parent=5 // pred_check_branch
      %5175 = sbr.rel (%p5173) target = $region72
    $region71: #{discriminator5_forward.1} parent=5 // pred_region
      %s5176 = ssub.s32 %s19, 2
      // Predicated region
      $region73: #{discriminator5_forward.1} parent=71 // pred_check
        %p5177 = pneg %p284
      $region74: #{discriminator5_forward.1} parent=71 // pred_check_branch
        %5179 = sbr.rel (%p5177) target = $region76
      $region75: #{discriminator5_forward.1} parent=71 // pred_region
        %p5180 = scmp.lt.s32.totalorder %s25, 1
        %s5181 = scalar_select %p5180, %s25, 1
        %s5182 = smul.addr %s5181, 8
        %s5183 = scalar_lea.vmem %s11, %s5182
      $region76: #{discriminator5_forward.1} parent=71 // pred_fallthru
        _
    $region72: #{discriminator5_forward.1} parent=5 // pred_fallthru
      _
  $region6: #{discriminator5_forward.1} parent=0 // loop_footer
    %s23 = sadd.s32 1, %s19
  $region7: #{discriminator5_forward.1} parent=0 // loop_footer_branch
    %18 = sbr.rel target = $region3
  $region8: #{discriminator5_forward.1} parent=0 // loop_exit
    _

</llo_original>
